<compile_context>
chip_gen: v6e
topology: v6e:2x2x1
jax: 0.10.0
libtpu: 0.0.40
codegen_flags: <defaults>
</compile_context>

<pallas_src>
import numpy as np
import jax
import jax.numpy as jnp
from jax.experimental import pallas as pl
from jax.experimental.pallas import tpu as pltpu


# ----------------------------------------------------------------------------
# Kernel 1: pointwise convs + global max-pool, tiled over (batch, point tiles).
# ----------------------------------------------------------------------------
def conv_pool_kernel(x_ref, w1_ref, b1_ref, w2_ref, b2_ref, w3_ref, b3_ref,
                     pooled_ref, acc_ref):
    x = x_ref[0].astype(jnp.float32)          # (C, TILE_N) — channels on sublanes
    c_in, tile_n = x.shape

    # conv1 (+ folded bn1) + relu on the VPU: K = C is tiny, keep the MXU free.
    # Start the accumulation from the bias so there is no separate "+ b1" pass.
    w1 = w1_ref[...].astype(jnp.float32)      # (64, C)
    h1 = w1[:, 0:1] * x[0:1, :] + b1_ref[...]
    for c in range(1, c_in):                  # static small loop (C in {3, 4})
        h1 = h1 + w1[:, c:c + 1] * x[c:c + 1, :]
    h1 = jnp.maximum(h1, 0.0).astype(jnp.bfloat16)                       # (64, TN)

    # conv2 (+ bn2) + relu — bf16 MXU matmul, f32 accumulation.
    h2 = jnp.dot(w2_ref[...], h1, preferred_element_type=jnp.float32)    # (128, TN)
    h2 = jnp.maximum(h2 + b2_ref[...], 0.0).astype(jnp.bfloat16)

    # conv3 WITHOUT bias / ReLU: both are deferred past the max-pool
    # (max_n(relu(Wx + b)) == relu(max_n(Wx) + b)), saving two full
    # (1024, TILE_N) f32 VPU passes per tile.
    h3 = jnp.dot(w3_ref[...], h2, preferred_element_type=jnp.float32)    # (1024, TN)

    # Per-tile fold to (1024, 128) with pure-VPU maxima over static, lane-aligned
    # 128-wide slices; the expensive 128->1 cross-lane (XLU) reduce runs once per
    # batch, below.
    fold = h3[:, 0:128]
    for t in range(1, tile_n // 128):
        fold = jnp.maximum(fold, h3[:, t * 128:(t + 1) * 128])           # (1024, 128)

    j = pl.program_id(1)

    @pl.when(j == 0)
    def _():
        acc_ref[...] = fold

    @pl.when(j > 0)
    def _():
        acc_ref[...] = jnp.maximum(acc_ref[...], fold)

    @pl.when(j == pl.num_programs(1) - 1)
    def _():
        m = jnp.max(acc_ref[...], axis=1, keepdims=True)                 # (1024, 1)
        # Deferred conv3 (+ folded bn3) bias and ReLU.
        pooled_ref[0] = jnp.maximum(m + b3_ref[...], 0.0)


# ----------------------------------------------------------------------------
# Kernel 2: fc1 / fc2 / fc3 batched over B (single grid step).
# ----------------------------------------------------------------------------
def fc_kernel(g_ref, w4_ref, b4_ref, w5_ref, b5_ref, w6_ref, b6_ref, out_ref):
    g = g_ref[...].astype(jnp.bfloat16)                                  # (B, 1024)
    f1 = jnp.dot(g, w4_ref[...], preferred_element_type=jnp.float32) + b4_ref[...]
    f1 = jnp.maximum(f1, 0.0).astype(jnp.bfloat16)                       # (B, 512)
    f2 = jnp.dot(f1, w5_ref[...], preferred_element_type=jnp.float32) + b5_ref[...]
    f2 = jnp.maximum(f2, 0.0).astype(jnp.bfloat16)                       # (B, 256)
    out_ref[...] = (jnp.dot(f2, w6_ref[...], preferred_element_type=jnp.float32)
                    + b6_ref[...])                                       # (B, 128)


# ----------------------------------------------------------------------------
# Wrapper
# ----------------------------------------------------------------------------
def _choose_tile_n(n_pad):
    for cand in (2048, 1024, 512, 256):
        if n_pad % cand == 0:
            return cand
    return 256  # unreachable: n_pad is always a multiple of 256


def stn3d_forward(x, params):
    """x: (B, C, N) in the native PyTorch NCL layout. Returns (B, 3, 3) f32."""
    w1, b1, w2, b2, w3, b3, w4, b4, w5, b5, w6, b6 = params
    B, C, N = x.shape
    x = x.astype(jnp.bfloat16)

    # Pad the point dim up to a multiple of 256 by edge-replicating the last
    # point: duplicated points cannot change the max, so the pool stays exact,
    # point-tile pipelining is preserved and the MXU N feed stays 256-aligned.
    n_pad = -(-N // 256) * 256
    if n_pad != N:
        x = jnp.pad(x, ((0, 0), (0, 0), (0, n_pad - N)), mode="edge")

    tile_n = _choose_tile_n(n_pad)
    n_tiles = n_pad // tile_n

    conv_flops = 2 * B * n_pad * (C * 64 + 64 * 128 + 128 * 1024)
    conv_bytes = (B * C * n_pad * 2
                  + sum(int(p.size) * p.dtype.itemsize
                        for p in (w1, b1, w2, b2, w3, b3))
                  + B * 1024 * 4)

    pooled = pl.pallas_call(
        conv_pool_kernel,
        out_shape=jax.ShapeDtypeStruct((B, 1024, 1), jnp.float32),
        grid=(B, n_tiles),
        in_specs=[
            pl.BlockSpec((1, C, tile_n), lambda b, j: (b, 0, j)),
            pl.BlockSpec((64, C), lambda b, j: (0, 0)),
            pl.BlockSpec((64, 1), lambda b, j: (0, 0)),
            pl.BlockSpec((128, 64), lambda b, j: (0, 0)),
            pl.BlockSpec((128, 1), lambda b, j: (0, 0)),
            pl.BlockSpec((1024, 128), lambda b, j: (0, 0)),
            pl.BlockSpec((1024, 1), lambda b, j: (0, 0)),
        ],
        out_specs=pl.BlockSpec((1, 1024, 1), lambda b, j: (b, 0, 0)),
        scratch_shapes=[pltpu.VMEM((1024, 128), jnp.float32)],
        compiler_params=pltpu.CompilerParams(
            dimension_semantics=("parallel", "arbitrary"),
            vmem_limit_bytes=32 * 1024 * 1024),
        cost_estimate=pl.CostEstimate(
            flops=conv_flops, transcendentals=0, bytes_accessed=conv_bytes),
    )(x, w1, b1, w2, b2, w3, b3)

    g = pooled.reshape(B, 1024)  # drops the trailing 1-dim

    fc_flops = 2 * B * (1024 * 512 + 512 * 256 + 256 * 128)
    fc_bytes = (B * 1024 * 4 + B * 128 * 4
                + sum(int(p.size) * p.dtype.itemsize
                      for p in (w4, b4, w5, b5, w6, b6)))

    out_pad = pl.pallas_call(
        fc_kernel,
        out_shape=jax.ShapeDtypeStruct((B, 128), jnp.float32),
        grid=(1,),
        in_specs=[
            pl.BlockSpec((B, 1024), lambda i: (0, 0)),
            pl.BlockSpec((1024, 512), lambda i: (0, 0)),
            pl.BlockSpec((1, 512), lambda i: (0, 0)),
            pl.BlockSpec((512, 256), lambda i: (0, 0)),
            pl.BlockSpec((1, 256), lambda i: (0, 0)),
            pl.BlockSpec((256, 128), lambda i: (0, 0)),
            pl.BlockSpec((1, 128), lambda i: (0, 0)),
        ],
        out_specs=pl.BlockSpec((B, 128), lambda i: (0, 0)),
        compiler_params=pltpu.CompilerParams(
            dimension_semantics=("arbitrary",)),
        cost_estimate=pl.CostEstimate(
            flops=fc_flops, transcendentals=0, bytes_accessed=fc_bytes),
    )(g, w4, b4, w5, b5, w6, b6)

    return out_pad[:, :9].reshape(B, 3, 3)


# ----------------------------------------------------------------------------
# Deterministic parameter construction (shapes from STN3d.__init__), with
# eval-mode BatchNorm folded into the preceding linear map and the 3x3 identity
# folded into the fc3 bias.
# ----------------------------------------------------------------------------
def _linear_init(kw, kb, fan_in, fan_out):
    bound = 1.0 / np.sqrt(fan_in)
    W = jax.random.uniform(kw, (fan_out, fan_in), jnp.float32, -bound, bound)
    b = jax.random.uniform(kb, (fan_out,), jnp.float32, -bound, bound)
    return W, b


def _fold_bn(W, b, gamma, beta, mean, var, eps=1e-5):
    scale = gamma / jnp.sqrt(var + eps)
    return W * scale[:, None], (b - mean) * scale + beta


def make_params(channel, key):
    keys = jax.random.split(key, 12)
    dims = [(channel, 64), (64, 128), (128, 1024), (1024, 512), (512, 256), (256, 9)]

    params = []
    for i, (fin, fout) in enumerate(dims):
        W, b = _linear_init(keys[2 * i], keys[2 * i + 1], fin, fout)  # (out,in),(out,)
        if i < 5:  # layers followed by eval-mode BatchNorm (bn1..bn5)
            gamma = jnp.linspace(0.9, 1.1, fout, dtype=jnp.float32)
            beta = jnp.linspace(-0.05, 0.05, fout, dtype=jnp.float32)
            W, b = _fold_bn(W, b, gamma, beta,
                            jnp.zeros((fout,), jnp.float32),   # running_mean
                            jnp.ones((fout,), jnp.float32))    # running_var
        else:      # fc3: add the flattened 3x3 identity to the bias
            b = b + jnp.array([1, 0, 0, 0, 1, 0, 0, 0, 1], jnp.float32)

        if i < 3:
            # conv layers: keep (out, in) for W @ X; bias as (out, 1) column.
            params.append(W.astype(jnp.bfloat16))
            params.append(b.reshape(fout, 1).astype(jnp.float32))
        else:
            # fc layers: transpose to (in, out) for G @ W; bias as (1, out) row.
            Wt = jnp.asarray(W.T, jnp.float32)
            bt = b.reshape(1, fout).astype(jnp.float32)
            if i == 5:
                # pad fc3 to 128 output lanes (lane-dense store; sliced outside)
                Wt = jnp.pad(Wt, ((0, 0), (0, 128 - fout)))
                bt = jnp.pad(bt, ((0, 0), (0, 128 - fout)))
            params.append(Wt.astype(jnp.bfloat16))
            params.append(bt)
    return params


# ----------------------------------------------------------------------------
# Pure-JAX f32 reference for validation
# ----------------------------------------------------------------------------
def reference_forward(x, params):
    w1, b1, w2, b2, w3, b3, w4, b4, w5, b5, w6, b6 = [
        jnp.asarray(p, jnp.float32) for p in params]
    xf = x.astype(jnp.float32)                                   # (B, C, N)
    h = jax.nn.relu(jnp.einsum("oc,bcn->bon", w1, xf) + b1[None])
    h = jax.nn.relu(jnp.einsum("oc,bcn->bon", w2, h) + b2[None])
    h = jax.nn.relu(jnp.einsum("oc,bcn->bon", w3, h) + b3[None])
    g = jnp.max(h, axis=2)                                       # (B, 1024)
    f = jax.nn.relu(g @ w4 + b4)
    f = jax.nn.relu(f @ w5 + b5)
    out = (f @ w6 + b6)[:, :9]
    return out.reshape(-1, 3, 3)


if __name__ == "__main__":
    B, channel, N = 2, 4, 16
    key = jax.random.PRNGKey(0)
    kx, kp = jax.random.split(key)

    # Native NCL layout; pre-quantized to bf16 so kernel & reference agree on x.
    x = jax.random.normal(kx, (B, channel, N), jnp.float32).astype(jnp.bfloat16)
    params = make_params(channel, kp)

    out = jax.block_until_ready(stn3d_forward(x, params))
    ref = jax.block_until_ready(reference_forward(x, params))

    # bf16 weights/activations vs f32 reference -> loosened tolerance.
    np.testing.assert_allclose(np.asarray(out), np.asarray(ref),
                               rtol=3e-2, atol=3e-2)
    assert out.shape == (B, 3, 3)

    print("KERNEL_OK")
</pallas_src>

<mosaic_0001>
module attributes {stable_mosaic.version = 11 : i64} {
  func.func @conv_pool_kernel(%arg0: i32, %arg1: i32, %arg2: memref<1x4x256xbf16, #tpu.memory_space<vmem>>, %arg3: memref<64x4xbf16, #tpu.memory_space<vmem>>, %arg4: memref<64x1xf32, #tpu.memory_space<vmem>>, %arg5: memref<128x64xbf16, #tpu.memory_space<vmem>>, %arg6: memref<128x1xf32, #tpu.memory_space<vmem>>, %arg7: memref<1024x128xbf16, #tpu.memory_space<vmem>>, %arg8: memref<1024x1xf32, #tpu.memory_space<vmem>>, %arg9: memref<1x1024x1xf32, #tpu.memory_space<vmem>>, %arg10: memref<1024x128xf32, #tpu.memory_space<vmem>>) attributes {dimension_semantics = [#tpu.dimension_semantics<parallel>, #tpu.dimension_semantics<arbitrary>], iteration_bounds = array<i64: 2, 1>, scalar_prefetch = 0 : i64, scratch_operands = 1 : i64, tpu.core_type = #tpu.core_type<tc>, window_params = [{transform_indices = @transform_0, window_bounds = array<i64: 1, 4, 256>}, {pipeline_mode = #tpu.pipeline_mode<synchronous>, transform_indices = @transform_1, window_bounds = array<i64: 64, 4>}, {pipeline_mode = #tpu.pipeline_mode<synchronous>, transform_indices = @transform_2, window_bounds = array<i64: 64, 1>}, {pipeline_mode = #tpu.pipeline_mode<synchronous>, transform_indices = @transform_3, window_bounds = array<i64: 128, 64>}, {pipeline_mode = #tpu.pipeline_mode<synchronous>, transform_indices = @transform_4, window_bounds = array<i64: 128, 1>}, {pipeline_mode = #tpu.pipeline_mode<synchronous>, transform_indices = @transform_5, window_bounds = array<i64: 1024, 128>}, {pipeline_mode = #tpu.pipeline_mode<synchronous>, transform_indices = @transform_6, window_bounds = array<i64: 1024, 1>}, {transform_indices = @transform_7, window_bounds = array<i64: 1, 1024, 1>}]} {
    %c0 = arith.constant 0 : index
    %c0_0 = arith.constant 0 : index
    %c0_1 = arith.constant 0 : index
    %0 = vector.load %arg2[%c0, %c0_0, %c0_1] : memref<1x4x256xbf16, #tpu.memory_space<vmem>>, vector<1x4x256xbf16>
    %1 = vector.shape_cast %0 : vector<1x4x256xbf16> to vector<4x256xbf16>
    %2 = arith.extf %1 : vector<4x256xbf16> to vector<4x256xf32>
    %c0_2 = arith.constant 0 : index
    %c0_3 = arith.constant 0 : index
    %3 = vector.load %arg3[%c0_2, %c0_3] : memref<64x4xbf16, #tpu.memory_space<vmem>>, vector<64x4xbf16>
    %4 = arith.extf %3 : vector<64x4xbf16> to vector<64x4xf32>
    %5 = vector.extract_strided_slice %4 {offsets = [0, 0], sizes = [64, 1], strides = [1, 1]} : vector<64x4xf32> to vector<64x1xf32>
    %6 = vector.extract_strided_slice %2 {offsets = [0, 0], sizes = [1, 256], strides = [1, 1]} : vector<4x256xf32> to vector<1x256xf32>
    %7 = vector.broadcast %5 : vector<64x1xf32> to vector<64x256xf32>
    %8 = vector.broadcast %6 : vector<1x256xf32> to vector<64x256xf32>
    %9 = arith.mulf %7, %8 : vector<64x256xf32>
    %c0_4 = arith.constant 0 : index
    %c0_5 = arith.constant 0 : index
    %10 = vector.load %arg4[%c0_4, %c0_5] : memref<64x1xf32, #tpu.memory_space<vmem>>, vector<64x1xf32>
    %11 = vector.broadcast %10 : vector<64x1xf32> to vector<64x256xf32>
    %12 = arith.addf %9, %11 : vector<64x256xf32>
    %13 = vector.extract_strided_slice %4 {offsets = [0, 1], sizes = [64, 1], strides = [1, 1]} : vector<64x4xf32> to vector<64x1xf32>
    %14 = vector.extract_strided_slice %2 {offsets = [1, 0], sizes = [1, 256], strides = [1, 1]} : vector<4x256xf32> to vector<1x256xf32>
    %15 = vector.broadcast %13 : vector<64x1xf32> to vector<64x256xf32>
    %16 = vector.broadcast %14 : vector<1x256xf32> to vector<64x256xf32>
    %17 = arith.mulf %15, %16 : vector<64x256xf32>
    %18 = arith.addf %12, %17 : vector<64x256xf32>
    %19 = vector.extract_strided_slice %4 {offsets = [0, 2], sizes = [64, 1], strides = [1, 1]} : vector<64x4xf32> to vector<64x1xf32>
    %20 = vector.extract_strided_slice %2 {offsets = [2, 0], sizes = [1, 256], strides = [1, 1]} : vector<4x256xf32> to vector<1x256xf32>
    %21 = vector.broadcast %19 : vector<64x1xf32> to vector<64x256xf32>
    %22 = vector.broadcast %20 : vector<1x256xf32> to vector<64x256xf32>
    %23 = arith.mulf %21, %22 : vector<64x256xf32>
    %24 = arith.addf %18, %23 : vector<64x256xf32>
    %25 = vector.extract_strided_slice %4 {offsets = [0, 3], sizes = [64, 1], strides = [1, 1]} : vector<64x4xf32> to vector<64x1xf32>
    %26 = vector.extract_strided_slice %2 {offsets = [3, 0], sizes = [1, 256], strides = [1, 1]} : vector<4x256xf32> to vector<1x256xf32>
    %27 = vector.broadcast %25 : vector<64x1xf32> to vector<64x256xf32>
    %28 = vector.broadcast %26 : vector<1x256xf32> to vector<64x256xf32>
    %29 = arith.mulf %27, %28 : vector<64x256xf32>
    %30 = arith.addf %24, %29 : vector<64x256xf32>
    %cst = arith.constant 0.000000e+00 : f32
    %31 = vector.broadcast %cst : f32 to vector<64x256xf32>
    %32 = arith.maximumf %30, %31 : vector<64x256xf32>
    %33 = arith.truncf %32 : vector<64x256xf32> to vector<64x256xbf16>
    %c0_6 = arith.constant 0 : index
    %c0_7 = arith.constant 0 : index
    %34 = vector.load %arg5[%c0_6, %c0_7] : memref<128x64xbf16, #tpu.memory_space<vmem>>, vector<128x64xbf16>
    %cst_8 = arith.constant dense<0.000000e+00> : vector<128x256xf32>
    %35 = tpu.matmul %34, %33, %cst_8 {dimension_numbers = #tpu.dot_dimension_numbers<[1], [0], [0], [1], [0, 0, 1, 1], [], []>} : vector<128x64xbf16>, vector<64x256xbf16>, vector<128x256xf32> -> vector<128x256xf32>
    %c0_9 = arith.constant 0 : index
    %c0_10 = arith.constant 0 : index
    %36 = vector.load %arg6[%c0_9, %c0_10] : memref<128x1xf32, #tpu.memory_space<vmem>>, vector<128x1xf32>
    %37 = vector.broadcast %36 : vector<128x1xf32> to vector<128x256xf32>
    %38 = arith.addf %35, %37 : vector<128x256xf32>
    %cst_11 = arith.constant 0.000000e+00 : f32
    %39 = vector.broadcast %cst_11 : f32 to vector<128x256xf32>
    %40 = arith.maximumf %38, %39 : vector<128x256xf32>
    %41 = arith.truncf %40 : vector<128x256xf32> to vector<128x256xbf16>
    %c0_12 = arith.constant 0 : index
    %c0_13 = arith.constant 0 : index
    %42 = vector.load %arg7[%c0_12, %c0_13] : memref<1024x128xbf16, #tpu.memory_space<vmem>>, vector<1024x128xbf16>
    %cst_14 = arith.constant dense<0.000000e+00> : vector<1024x256xf32>
    %43 = tpu.matmul %42, %41, %cst_14 {dimension_numbers = #tpu.dot_dimension_numbers<[1], [0], [0], [1], [0, 0, 1, 1], [], []>} : vector<1024x128xbf16>, vector<128x256xbf16>, vector<1024x256xf32> -> vector<1024x256xf32>
    %44 = vector.extract_strided_slice %43 {offsets = [0, 0], sizes = [1024, 128], strides = [1, 1]} : vector<1024x256xf32> to vector<1024x128xf32>
    %45 = vector.extract_strided_slice %43 {offsets = [0, 128], sizes = [1024, 128], strides = [1, 1]} : vector<1024x256xf32> to vector<1024x128xf32>
    %46 = arith.maximumf %44, %45 : vector<1024x128xf32>
    %c0_i32 = arith.constant 0 : i32
    %47 = arith.cmpi eq, %arg1, %c0_i32 : i32
    %48 = arith.extui %47 : i1 to i32
    %c0_i32_15 = arith.constant 0 : i32
    %49 = arith.cmpi ne, %48, %c0_i32_15 : i32
    scf.if %49 {
      %c0_20 = arith.constant 0 : index
      %c0_21 = arith.constant 0 : index
      %56 = vector.load %arg10[%c0_20, %c0_21] : memref<1024x128xf32, #tpu.memory_space<vmem>>, vector<1024x128xf32>
      tpu.vector_store %arg10[%c0_20, %c0_21], %46 {strides = array<i32>} : memref<1024x128xf32, #tpu.memory_space<vmem>>, vector<1024x128xf32>,
    } else {
    }
    %c0_i32_16 = arith.constant 0 : i32
    %50 = arith.cmpi sgt, %arg1, %c0_i32_16 : i32
    %51 = arith.extui %50 : i1 to i32
    %c0_i32_17 = arith.constant 0 : i32
    %52 = arith.cmpi ne, %51, %c0_i32_17 : i32
    scf.if %52 {
      %c0_20 = arith.constant 0 : index
      %c0_21 = arith.constant 0 : index
      %56 = vector.load %arg10[%c0_20, %c0_21] : memref<1024x128xf32, #tpu.memory_space<vmem>>, vector<1024x128xf32>
      %57 = arith.maximumf %56, %46 : vector<1024x128xf32>
      %c0_22 = arith.constant 0 : index
      %c0_23 = arith.constant 0 : index
      %58 = vector.load %arg10[%c0_22, %c0_23] : memref<1024x128xf32, #tpu.memory_space<vmem>>, vector<1024x128xf32>
      tpu.vector_store %arg10[%c0_22, %c0_23], %57 {strides = array<i32>} : memref<1024x128xf32, #tpu.memory_space<vmem>>, vector<1024x128xf32>,
    } else {
    }
    %c0_i32_18 = arith.constant 0 : i32
    %53 = arith.cmpi eq, %arg1, %c0_i32_18 : i32
    %54 = arith.extui %53 : i1 to i32
    %c0_i32_19 = arith.constant 0 : i32
    %55 = arith.cmpi ne, %54, %c0_i32_19 : i32
    scf.if %55 {
      %c0_20 = arith.constant 0 : index
      %c0_21 = arith.constant 0 : index
      %56 = vector.load %arg10[%c0_20, %c0_21] : memref<1024x128xf32, #tpu.memory_space<vmem>>, vector<1024x128xf32>
      %cst_22 = arith.constant dense<0xFF800000> : vector<1024xf32>
      %57 = vector.multi_reduction <maximumf>, %56, %cst_22 [1] : vector<1024x128xf32> to vector<1024xf32>
      %58 = vector.shape_cast %57 : vector<1024xf32> to vector<1024x1xf32>
      %c0_23 = arith.constant 0 : index
      %c0_24 = arith.constant 0 : index
      %59 = vector.load %arg8[%c0_23, %c0_24] : memref<1024x1xf32, #tpu.memory_space<vmem>>, vector<1024x1xf32>
      %60 = arith.addf %58, %59 : vector<1024x1xf32>
      %cst_25 = arith.constant 0.000000e+00 : f32
      %61 = vector.broadcast %cst_25 : f32 to vector<1024x1xf32>
      %62 = arith.maximumf %60, %61 : vector<1024x1xf32>
      %c0_26 = arith.constant 0 : index
      %c0_27 = arith.constant 0 : index
      %c0_28 = arith.constant 0 : index
      %63 = vector.load %arg9[%c0_26, %c0_27, %c0_28] : memref<1x1024x1xf32, #tpu.memory_space<vmem>>, vector<1x1024x1xf32>
      %64 = vector.shape_cast %63 : vector<1x1024x1xf32> to vector<1024x1xf32>
      %65 = vector.shape_cast %62 : vector<1024x1xf32> to vector<1x1024x1xf32>
      tpu.vector_store %arg9[%c0_26, %c0_27, %c0_28], %65 {strides = array<i32>} : memref<1x1024x1xf32, #tpu.memory_space<vmem>>, vector<1x1024x1xf32>,
    } else {
    }
    return
  }
  func.func @transform_0(%arg0: i32, %arg1: i32) -> (i32, i32, i32) {
    %c0_i32 = arith.constant 0 : i32
    %c0_i32_0 = arith.constant 0 : i32
    return %arg0, %c0_i32, %arg1 : i32, i32, i32
  }
  func.func @transform_1(%arg0: i32, %arg1: i32) -> (i32, i32) {
    %c0_i32 = arith.constant 0 : i32
    %c0_i32_0 = arith.constant 0 : i32
    %c0_i32_1 = arith.constant 0 : i32
    return %c0_i32, %c0_i32_0 : i32, i32
  }
  func.func @transform_2(%arg0: i32, %arg1: i32) -> (i32, i32) {
    %c0_i32 = arith.constant 0 : i32
    %c0_i32_0 = arith.constant 0 : i32
    %c0_i32_1 = arith.constant 0 : i32
    return %c0_i32, %c0_i32_0 : i32, i32
  }
  func.func @transform_3(%arg0: i32, %arg1: i32) -> (i32, i32) {
    %c0_i32 = arith.constant 0 : i32
    %c0_i32_0 = arith.constant 0 : i32
    %c0_i32_1 = arith.constant 0 : i32
    return %c0_i32, %c0_i32_0 : i32, i32
  }
  func.func @transform_4(%arg0: i32, %arg1: i32) -> (i32, i32) {
    %c0_i32 = arith.constant 0 : i32
    %c0_i32_0 = arith.constant 0 : i32
    %c0_i32_1 = arith.constant 0 : i32
    return %c0_i32, %c0_i32_0 : i32, i32
  }
  func.func @transform_5(%arg0: i32, %arg1: i32) -> (i32, i32) {
    %c0_i32 = arith.constant 0 : i32
    %c0_i32_0 = arith.constant 0 : i32
    %c0_i32_1 = arith.constant 0 : i32
    return %c0_i32, %c0_i32_0 : i32, i32
  }
  func.func @transform_6(%arg0: i32, %arg1: i32) -> (i32, i32) {
    %c0_i32 = arith.constant 0 : i32
    %c0_i32_0 = arith.constant 0 : i32
    %c0_i32_1 = arith.constant 0 : i32
    return %c0_i32, %c0_i32_0 : i32, i32
  }
  func.func @transform_7(%arg0: i32, %arg1: i32) -> (i32, i32, i32) {
    %c0_i32 = arith.constant 0 : i32
    %c0_i32_0 = arith.constant 0 : i32
    %c0_i32_1 = arith.constant 0 : i32
    return %arg0, %c0_i32, %c0_i32_0 : i32, i32, i32
  }
}

</mosaic_0001>

<llo_original>
// kernel: tpu_custom_call.1
$region0: #{tpu_custom_call.1}
  #allocation0 [shape = 'u32[]', space=smem, size = 0x4, offset = 0x4, fixed_abs, tag = 'smem constant byte address 0x4 - core index']
  #allocation1 [shape = 'u32[144,128]{1,0:T(1,128)}', space=vmem, size = 0x12000, scoped, tag = 'internal scratch']
  #allocation2 [shape = 'f32[1024,128]{1,0:T(8,128)}', space=vmem, size = 0x80000, scoped, tag = 'scratch operand']
  %s0 = inlined_call_operand.vmem [shape: bf16[2,4,256], index: 0, kind: input, shape index: {}]
  %s1 = inlined_call_operand.vmem [shape: bf16[64,4], index: 1, kind: input, shape index: {}]
  %s2 = inlined_call_operand.vmem [shape: f32[64,1], index: 2, kind: input, shape index: {}]
  %s3 = inlined_call_operand.vmem [shape: bf16[128,64], index: 3, kind: input, shape index: {}]
  %s4 = inlined_call_operand.vmem [shape: f32[128,1], index: 4, kind: input, shape index: {}]
  %s5 = inlined_call_operand.vmem [shape: bf16[1024,128], index: 5, kind: input, shape index: {}]
  %s6 = inlined_call_operand.vmem [shape: f32[1024,1], index: 6, kind: input, shape index: {}]
  %s7 = inlined_call_operand.vmem [shape: f32[2,1024,1], index: 7, kind: output, shape index: {}]
  %s8 = sld [smem:[#allocation0]]
  $region73: #{tpu_custom_call.1} parent=0
    _
  %s10 = ssub.s32 1, %s8
  %s11 = scalar_select 0, %s10, %s8
  loop: start=0, step=1, limit=4
  $region2: #{tpu_custom_call.1} parent=0 // loop_pre_header
    _
  $region3: #{tpu_custom_call.1} parent=0 // loop_header
    %s13 = sphi 0, %s17
    %p14 = scmp.ge.s32.totalorder %s13, 4
    %s20 = sphi 0, %s32
    %s21 = sphi 0, %s28
    %s22 = sphi 0, %s20
    %s23 = sphi 0, %s21
    %s24 = sphi 0, %s22
    %s25 = sphi 0, %s23
    %s37 = sphi 0, %s39
    %s40 = sphi 0, %s37
    %s41 = sphi 0, %s40
    %s57 = sphi 0, %s41
    %s61 = sphi 0, %s61
    %s63 = sphi 0, %s61
    %s64 = sphi 0, %s63
    %s78 = sphi 0, %s64
    %s82 = sphi 0, %s82
    %s84 = sphi 0, %s82
    %s85 = sphi 0, %s84
    %s99 = sphi 0, %s85
    %s103 = sphi 0, %s103
    %s105 = sphi 0, %s103
    %s106 = sphi 0, %s105
    %s120 = sphi 0, %s106
    %s124 = sphi 0, %s124
    %s126 = sphi 0, %s124
    %s127 = sphi 0, %s126
    %s141 = sphi 0, %s127
    %s145 = sphi 0, %s145
    %s147 = sphi 0, %s145
    %s148 = sphi 0, %s147
    %s162 = sphi 0, %s148
    %s166 = sphi 0, %s166
    %s168 = sphi 0, %s166
    %s169 = sphi 0, %s168
    %s183 = sphi 0, %s169
    %s189 = sphi 0, %s191
    %s192 = sphi 0, %s189
    %s193 = sphi 0, %s192
    %s209 = sphi 0, %s193
  $region4: #{tpu_custom_call.1} parent=0 // loop_header_branch
    %16 = sbr.rel (%p14) target = $region8
  $region5: #{tpu_custom_call.1} parent=0 // loop_body
    %s18 = ssub.s32 %s13, 1
    %s19 = ssub.s32 %s13, 2
    %s26 = sadd.s32 1, %s21
    %p27 = scmp.ge.s32.totalorder %s26, 1
    %s28 = scalar_select %p27, 0, %s26
    %s29 = sadd.s32 1, %s20
    %s30 = scalar_select %p27, %s29, %s20
    %p31 = scmp.ge.s32.totalorder %s30, 2
    %s32 = scalar_select %p31, 0, %s30
    %s33 = ssub.s32 %s20, %s32
    %s34 = ssub.s32 %s21, %s28
    %s35 = sor.u32 %s33, %s34
    %p36 = scmp.eq.s32.totalorder %s35, 0
    %s38 = sadd.s32 %s37, 1
    %s39 = scalar_select %p36, %s37, %s38
    %p42 = pneg %p36
    %p43 = scmp.eq.s32.totalorder %s13, 1
    %p44 = por %p42, %p43
    %p45 = scmp.ne.s32.totalorder %s37, %s40
    %p46 = scmp.eq.s32.totalorder %s13, 0
    %p47 = por %p45, %p46
    %p48 = scmp.ne.s32.totalorder %s37, %s40
    %p49 = scmp.eq.s32.totalorder %s18, 1
    %p50 = por %p48, %p49
    %p51 = scmp.ne.s32.totalorder %s40, %s41
    %p52 = scmp.eq.s32.totalorder %s18, 0
    %p53 = por %p51, %p52
    %p54 = scmp.ne.s32.totalorder %s40, %s41
    %p55 = scmp.eq.s32.totalorder %s19, 1
    %p56 = por %p54, %p55
    %p58 = scmp.ne.s32.totalorder %s41, %s57
    %p59 = scmp.eq.s32.totalorder %s19, 0
    %p60 = por %p58, %p59
    %s62 = sadd.s32 %s61, 1
    %p65 = scmp.eq.s32.totalorder %s13, 1
    %p66 = scmp.ne.s32.totalorder %s61, %s63
    %p67 = scmp.eq.s32.totalorder %s13, 0
    %p68 = por %p66, %p67
    %p69 = scmp.ne.s32.totalorder %s61, %s63
    %p70 = scmp.eq.s32.totalorder %s18, 1
    %p71 = por %p69, %p70
    %p72 = scmp.ne.s32.totalorder %s63, %s64
    %p73 = scmp.eq.s32.totalorder %s18, 0
    %p74 = por %p72, %p73
    %p75 = scmp.ne.s32.totalorder %s63, %s64
    %p76 = scmp.eq.s32.totalorder %s19, 1
    %p77 = por %p75, %p76
    %p79 = scmp.ne.s32.totalorder %s64, %s78
    %p80 = scmp.eq.s32.totalorder %s19, 0
    %p81 = por %p79, %p80
    %s83 = sadd.s32 %s82, 1
    %p86 = scmp.eq.s32.totalorder %s13, 1
    %p87 = scmp.ne.s32.totalorder %s82, %s84
    %p88 = scmp.eq.s32.totalorder %s13, 0
    %p89 = por %p87, %p88
    %p90 = scmp.ne.s32.totalorder %s82, %s84
    %p91 = scmp.eq.s32.totalorder %s18, 1
    %p92 = por %p90, %p91
    %p93 = scmp.ne.s32.totalorder %s84, %s85
    %p94 = scmp.eq.s32.totalorder %s18, 0
    %p95 = por %p93, %p94
    %p96 = scmp.ne.s32.totalorder %s84, %s85
    %p97 = scmp.eq.s32.totalorder %s19, 1
    %p98 = por %p96, %p97
    %p100 = scmp.ne.s32.totalorder %s85, %s99
    %p101 = scmp.eq.s32.totalorder %s19, 0
    %p102 = por %p100, %p101
    %s104 = sadd.s32 %s103, 1
    %p107 = scmp.eq.s32.totalorder %s13, 1
    %p108 = scmp.ne.s32.totalorder %s103, %s105
    %p109 = scmp.eq.s32.totalorder %s13, 0
    %p110 = por %p108, %p109
    %p111 = scmp.ne.s32.totalorder %s103, %s105
    %p112 = scmp.eq.s32.totalorder %s18, 1
    %p113 = por %p111, %p112
    %p114 = scmp.ne.s32.totalorder %s105, %s106
    %p115 = scmp.eq.s32.totalorder %s18, 0
    %p116 = por %p114, %p115
    %p117 = scmp.ne.s32.totalorder %s105, %s106
    %p118 = scmp.eq.s32.totalorder %s19, 1
    %p119 = por %p117, %p118
    %p121 = scmp.ne.s32.totalorder %s106, %s120
    %p122 = scmp.eq.s32.totalorder %s19, 0
    %p123 = por %p121, %p122
    %s125 = sadd.s32 %s124, 1
    %p128 = scmp.eq.s32.totalorder %s13, 1
    %p129 = scmp.ne.s32.totalorder %s124, %s126
    %p130 = scmp.eq.s32.totalorder %s13, 0
    %p131 = por %p129, %p130
    %p132 = scmp.ne.s32.totalorder %s124, %s126
    %p133 = scmp.eq.s32.totalorder %s18, 1
    %p134 = por %p132, %p133
    %p135 = scmp.ne.s32.totalorder %s126, %s127
    %p136 = scmp.eq.s32.totalorder %s18, 0
    %p137 = por %p135, %p136
    %p138 = scmp.ne.s32.totalorder %s126, %s127
    %p139 = scmp.eq.s32.totalorder %s19, 1
    %p140 = por %p138, %p139
    %p142 = scmp.ne.s32.totalorder %s127, %s141
    %p143 = scmp.eq.s32.totalorder %s19, 0
    %p144 = por %p142, %p143
    %s146 = sadd.s32 %s145, 1
    %p149 = scmp.eq.s32.totalorder %s13, 1
    %p150 = scmp.ne.s32.totalorder %s145, %s147
    %p151 = scmp.eq.s32.totalorder %s13, 0
    %p152 = por %p150, %p151
    %p153 = scmp.ne.s32.totalorder %s145, %s147
    %p154 = scmp.eq.s32.totalorder %s18, 1
    %p155 = por %p153, %p154
    %p156 = scmp.ne.s32.totalorder %s147, %s148
    %p157 = scmp.eq.s32.totalorder %s18, 0
    %p158 = por %p156, %p157
    %p159 = scmp.ne.s32.totalorder %s147, %s148
    %p160 = scmp.eq.s32.totalorder %s19, 1
    %p161 = por %p159, %p160
    %p163 = scmp.ne.s32.totalorder %s148, %s162
    %p164 = scmp.eq.s32.totalorder %s19, 0
    %p165 = por %p163, %p164
    %s167 = sadd.s32 %s166, 1
    %p170 = scmp.eq.s32.totalorder %s13, 1
    %p171 = scmp.ne.s32.totalorder %s166, %s168
    %p172 = scmp.eq.s32.totalorder %s13, 0
    %p173 = por %p171, %p172
    %p174 = scmp.ne.s32.totalorder %s166, %s168
    %p175 = scmp.eq.s32.totalorder %s18, 1
    %p176 = por %p174, %p175
    %p177 = scmp.ne.s32.totalorder %s168, %s169
    %p178 = scmp.eq.s32.totalorder %s18, 0
    %p179 = por %p177, %p178
    %p180 = scmp.ne.s32.totalorder %s168, %s169
    %p181 = scmp.eq.s32.totalorder %s19, 1
    %p182 = por %p180, %p181
    %p184 = scmp.ne.s32.totalorder %s169, %s183
    %p185 = scmp.eq.s32.totalorder %s19, 0
    %p186 = por %p184, %p185
    %s187 = ssub.s32 %s20, %s32
    %p188 = scmp.eq.s32.totalorder %s187, 0
    %s190 = sadd.s32 %s189, 1
    %s191 = scalar_select %p188, %s189, %s190
    %p194 = pneg %p188
    %p195 = scmp.eq.s32.totalorder %s13, 1
    %p196 = por %p194, %p195
    %p197 = scmp.ne.s32.totalorder %s189, %s192
    %p198 = scmp.eq.s32.totalorder %s13, 0
    %p199 = por %p197, %p198
    %p200 = scmp.ne.s32.totalorder %s189, %s192
    %p201 = scmp.eq.s32.totalorder %s18, 1
    %p202 = por %p200, %p201
    %p203 = scmp.ne.s32.totalorder %s192, %s193
    %p204 = scmp.eq.s32.totalorder %s18, 0
    %p205 = por %p203, %p204
    %p206 = scmp.ne.s32.totalorder %s192, %s193
    %p207 = scmp.eq.s32.totalorder %s19, 1
    %p208 = por %p206, %p207
    %p210 = scmp.ne.s32.totalorder %s193, %s209
    %p211 = scmp.eq.s32.totalorder %s19, 0
    %p212 = por %p210, %p211
    %p213 = scmp.le.s32.totalorder 1, %s13
    %p214 = scmp.lt.s32.totalorder %s13, 3
    %p215 = pnand %p213, %p214
    %p216 = pneg %p215
    // Predicated region
    $region9: #{tpu_custom_call.1} parent=5 // pred_check
      _
    $region10: #{tpu_custom_call.1} parent=5 // pred_check_branch
      %218 = sbr.rel (%p215) target = $region12
    $region11: #{tpu_custom_call.1} parent=5 // pred_region
      %s219 = ssub.s32 %s13, 1
      // Predicated region
      $region13: #{tpu_custom_call.1} parent=11 // pred_check
        %p220 = pneg %p74
      $region14: #{tpu_custom_call.1} parent=11 // pred_check_branch
        %222 = sbr.rel (%p220) target = $region16
      $region15: #{tpu_custom_call.1} parent=11 // pred_region
        _
      $region16: #{tpu_custom_call.1} parent=11 // pred_fallthru
        _
      // Predicated region
      $region17: #{tpu_custom_call.1} parent=11 // pred_check
        %p223 = pneg %p95
      $region18: #{tpu_custom_call.1} parent=11 // pred_check_branch
        %225 = sbr.rel (%p223) target = $region20
      $region19: #{tpu_custom_call.1} parent=11 // pred_region
        _
      $region20: #{tpu_custom_call.1} parent=11 // pred_fallthru
        _
      // Predicated region
      $region21: #{tpu_custom_call.1} parent=11 // pred_check
        %p226 = pneg %p116
      $region22: #{tpu_custom_call.1} parent=11 // pred_check_branch
        %228 = sbr.rel (%p226) target = $region24
      $region23: #{tpu_custom_call.1} parent=11 // pred_region
        _
      $region24: #{tpu_custom_call.1} parent=11 // pred_fallthru
        _
      // Predicated region
      $region25: #{tpu_custom_call.1} parent=11 // pred_check
        %p229 = pneg %p137
      $region26: #{tpu_custom_call.1} parent=11 // pred_check_branch
        %231 = sbr.rel (%p229) target = $region28
      $region27: #{tpu_custom_call.1} parent=11 // pred_region
        _
      $region28: #{tpu_custom_call.1} parent=11 // pred_fallthru
        _
      // Predicated region
      $region29: #{tpu_custom_call.1} parent=11 // pred_check
        %p232 = pneg %p158
      $region30: #{tpu_custom_call.1} parent=11 // pred_check_branch
        %234 = sbr.rel (%p232) target = $region32
      $region31: #{tpu_custom_call.1} parent=11 // pred_region
        _
      $region32: #{tpu_custom_call.1} parent=11 // pred_fallthru
        _
      // Predicated region
      $region33: #{tpu_custom_call.1} parent=11 // pred_check
        %p235 = pneg %p179
      $region34: #{tpu_custom_call.1} parent=11 // pred_check_branch
        %237 = sbr.rel (%p235) target = $region36
      $region35: #{tpu_custom_call.1} parent=11 // pred_region
        _
      $region36: #{tpu_custom_call.1} parent=11 // pred_fallthru
        _
    $region12: #{tpu_custom_call.1} parent=5 // pred_fallthru
      _
    %p238 = scmp.lt.s32.totalorder %s13, 2
    // Predicated region
    $region37: #{tpu_custom_call.1} parent=5 // pred_check
      %p239 = pneg %p238
    $region38: #{tpu_custom_call.1} parent=5 // pred_check_branch
      %241 = sbr.rel (%p239) target = $region40
    $region39: #{tpu_custom_call.1} parent=5 // pred_region
      // Predicated region
      $region41: #{tpu_custom_call.1} parent=39 // pred_check
        %p242 = pneg %p47
      $region42: #{tpu_custom_call.1} parent=39 // pred_check_branch
        %244 = sbr.rel (%p242) target = $region44
      $region43: #{tpu_custom_call.1} parent=39 // pred_region
        %s245 = smul.u32 2, %s21
        %p246 = scmp.lt.s32.totalorder %s20, 1
        %s247 = scalar_select %p246, %s20, 1
        %p248 = scmp.lt.s32.totalorder %s245, 1
        %s249 = scalar_select %p248, %s245, 1
        %s250 = smul.addr %s247, 2
        %s251 = sadd.s32 %s249, %s250
        %s252 = smul.addr %s251, 2
        %s253 = scalar_lea.vmem %s0, %s252
        %s254 = smul.u32 2, %s21
      $region44: #{tpu_custom_call.1} parent=39 // pred_fallthru
        _
    $region40: #{tpu_custom_call.1} parent=5 // pred_fallthru
      _
    %p255 = scmp.le.s32.totalorder 1, %s13
    %p256 = scmp.lt.s32.totalorder %s13, 3
    %p257 = pnand %p255, %p256
    %p258 = pneg %p257
    // Predicated region
    $region45: #{tpu_custom_call.1} parent=5 // pred_check
      _
    $region46: #{tpu_custom_call.1} parent=5 // pred_check_branch
      %260 = sbr.rel (%p257) target = $region48
    $region47: #{tpu_custom_call.1} parent=5 // pred_region
      %s261 = ssub.s32 %s13, 1
      %s262 = smul.u32 2, %s23
      %p263 = scmp.lt.s32.totalorder %s22, 1
      %s264 = scalar_select %p263, %s22, 1
      %p265 = scmp.lt.s32.totalorder %s262, 1
      %s266 = scalar_select %p265, %s262, 1
      %s267 = smul.addr %s264, 2
      %s268 = sadd.s32 %s266, %s267
      %s269 = smul.addr %s268, 2
      %s270 = scalar_lea.vmem %s0, %s269
      %p271 = pneg %p53
      %p272 = pneg %p50
      %p273 = pneg %p74
      %p274 = pneg %p71
      %p275 = pneg %p95
      %p276 = pneg %p92
      %p277 = pneg %p116
      %p278 = pneg %p113
      %p279 = pneg %p137
      %p280 = pneg %p134
      %p281 = pneg %p158
      %p282 = pneg %p155
      %p283 = pneg %p179
      %p284 = pneg %p176
      %p285 = pneg %p205
      %p286 = pneg %p202
      %p287 = scmp.lt.s32.totalorder %s22, 1
      %s288 = scalar_select %p287, %s22, 1
      %s289 = smul.addr %s288, 128
      %s290 = smul.addr %s289, 8
      %s291 = scalar_lea.vmem %s7, %s290
      %s292 = smul.u32 2, %s23
      %p293 = scmp.lt.s32.totalorder %s22, 1
      %s294 = scalar_select %p293, %s22, 1
      %p295 = scmp.lt.s32.totalorder %s292, 1
      %s296 = scalar_select %p295, %s292, 1
      %s297 = smul.addr %s294, 2
      %s298 = sadd.s32 %s296, %s297
      %s299 = smul.addr %s298, 2
      %s300 = scalar_lea.vmem %s0, %s299
      %s301 = smul.u32 2, %s23
      %p302 = scmp.lt.s32.totalorder %s22, 1
      %s303 = scalar_select %p302, %s22, 1
      %s304 = smul.addr %s303, 128
      %s305 = smul.addr %s304, 8
      %s306 = scalar_lea.vmem %s7, %s305
      %v308 = vld [vmem:[%s300] sm:$0xf]
      %v309 = vunpack.c.l.bf16 %v308
      %v310 = vld [vmem:[%s1] sm:$0xf]
      %v311 = vld [vmem:[%s1 + $0x4] sm:$0xf]
      %v312 = vld [vmem:[%s1 + $0x8] sm:$0xf]
      %v313 = vld [vmem:[%s1 + $0xc] sm:$0xf]
      %v314 = vld [vmem:[%s1 + $0x10] sm:$0xf]
      %v315 = vld [vmem:[%s1 + $0x14] sm:$0xf]
      %v316 = vld [vmem:[%s1 + $0x18] sm:$0xf]
      %v317 = vld [vmem:[%s1 + $0x1c] sm:$0xf]
      %v318 = vunpack.c.l.bf16 %v310
      %v319 = vunpack.c.l.bf16 %v311
      %v320 = vunpack.c.l.bf16 %v312
      %v321 = vunpack.c.l.bf16 %v313
      %v322 = vunpack.c.l.bf16 %v314
      %v323 = vunpack.c.l.bf16 %v315
      %v324 = vunpack.c.l.bf16 %v316
      %v325 = vunpack.c.l.bf16 %v317
      %327 = vset.pattern.permute.xlu0 0
      %328 = vperm.xlu0 %327, %v318
      %v329 = vpop.permute.xlu0 %328
      %332 = vset.pattern.permute.xlu0 0
      %333 = vperm.xlu0 %332, %v319
      %v334 = vpop.permute.xlu0 %333
      %337 = vset.pattern.permute.xlu0 0
      %338 = vperm.xlu0 %337, %v320
      %v339 = vpop.permute.xlu0 %338
      %342 = vset.pattern.permute.xlu0 0
      %343 = vperm.xlu0 %342, %v321
      %v344 = vpop.permute.xlu0 %343
      %347 = vset.pattern.permute.xlu0 0
      %348 = vperm.xlu0 %347, %v322
      %v349 = vpop.permute.xlu0 %348
      %352 = vset.pattern.permute.xlu0 0
      %353 = vperm.xlu0 %352, %v323
      %v354 = vpop.permute.xlu0 %353
      %357 = vset.pattern.permute.xlu0 0
      %358 = vperm.xlu0 %357, %v324
      %v359 = vpop.permute.xlu0 %358
      %362 = vset.pattern.permute.xlu0 0
      %363 = vperm.xlu0 %362, %v325
      %v364 = vpop.permute.xlu0 %363
      %v367 = vlaneseq
      %v368 = vshrl.u32 %v367, 7
      %v369 = vsub.s32 0, %v368
      %v370 = vrot.slane %v309, %v369
      %v371 = vlaneseq
      %v372 = vshrl.u32 %v371, 7
      %v373 = vsub.s32 4, %v372
      %v374 = vrot.slane %v309, %v373
      %v377 = vlaneseq
      %v378 = vshrl.u32 %v377, 7
      %v379 = vsub.s32 0, %v378
      %v380 = vrot.slane %v370, %v379
      %v381 = vlaneseq
      %v382 = vshrl.u32 %v381, 7
      %v383 = vsub.s32 0, %v382
      %v384 = vrot.slane %v374, %v383
      %v385 = vmul.f32 %v329, %v380
      %v386 = vmul.f32 %v329, %v384
      %v387 = vmul.f32 %v334, %v380
      %v388 = vmul.f32 %v334, %v384
      %v389 = vmul.f32 %v339, %v380
      %v390 = vmul.f32 %v339, %v384
      %v391 = vmul.f32 %v344, %v380
      %v392 = vmul.f32 %v344, %v384
      %v393 = vmul.f32 %v349, %v380
      %v394 = vmul.f32 %v349, %v384
      %v395 = vmul.f32 %v354, %v380
      %v396 = vmul.f32 %v354, %v384
      %v397 = vmul.f32 %v359, %v380
      %v398 = vmul.f32 %v359, %v384
      %v399 = vmul.f32 %v364, %v380
      %v400 = vmul.f32 %v364, %v384
      %v401 = vld [vmem:[%s2] sm:$0xff]
      %v402 = vld [vmem:[%s2 + $0x8] sm:$0xff]
      %v403 = vld [vmem:[%s2 + $0x10] sm:$0xff]
      %v404 = vld [vmem:[%s2 + $0x18] sm:$0xff]
      %v405 = vld [vmem:[%s2 + $0x20] sm:$0xff]
      %v406 = vld [vmem:[%s2 + $0x28] sm:$0xff]
      %v407 = vld [vmem:[%s2 + $0x30] sm:$0xff]
      %v408 = vld [vmem:[%s2 + $0x38] sm:$0xff]
      %410 = vset.pattern.permute.xlu0 0
      %411 = vperm.xlu0 %410, %v401
      %v412 = vpop.permute.xlu0 %411
      %415 = vset.pattern.permute.xlu0 0
      %416 = vperm.xlu0 %415, %v402
      %v417 = vpop.permute.xlu0 %416
      %420 = vset.pattern.permute.xlu0 0
      %421 = vperm.xlu0 %420, %v403
      %v422 = vpop.permute.xlu0 %421
      %425 = vset.pattern.permute.xlu0 0
      %426 = vperm.xlu0 %425, %v404
      %v427 = vpop.permute.xlu0 %426
      %430 = vset.pattern.permute.xlu0 0
      %431 = vperm.xlu0 %430, %v405
      %v432 = vpop.permute.xlu0 %431
      %435 = vset.pattern.permute.xlu0 0
      %436 = vperm.xlu0 %435, %v406
      %v437 = vpop.permute.xlu0 %436
      %440 = vset.pattern.permute.xlu0 0
      %441 = vperm.xlu0 %440, %v407
      %v442 = vpop.permute.xlu0 %441
      %445 = vset.pattern.permute.xlu0 0
      %446 = vperm.xlu0 %445, %v408
      %v447 = vpop.permute.xlu0 %446
      %v449 = vadd.f32 %v385, %v412
      %v450 = vadd.f32 %v386, %v412
      %v451 = vadd.f32 %v387, %v417
      %v452 = vadd.f32 %v388, %v417
      %v453 = vadd.f32 %v389, %v422
      %v454 = vadd.f32 %v390, %v422
      %v455 = vadd.f32 %v391, %v427
      %v456 = vadd.f32 %v392, %v427
      %v457 = vadd.f32 %v393, %v432
      %v458 = vadd.f32 %v394, %v432
      %v459 = vadd.f32 %v395, %v437
      %v460 = vadd.f32 %v396, %v437
      %v461 = vadd.f32 %v397, %v442
      %v462 = vadd.f32 %v398, %v442
      %v463 = vadd.f32 %v399, %v447
      %v464 = vadd.f32 %v400, %v447
      %465 = vset.pattern.permute.xlu0 1
      %466 = vperm.xlu0 %465, %v318
      %v467 = vpop.permute.xlu0 %466
      %469 = vset.pattern.permute.xlu0 1
      %470 = vperm.xlu0 %469, %v319
      %v471 = vpop.permute.xlu0 %470
      %473 = vset.pattern.permute.xlu0 1
      %474 = vperm.xlu0 %473, %v320
      %v475 = vpop.permute.xlu0 %474
      %477 = vset.pattern.permute.xlu0 1
      %478 = vperm.xlu0 %477, %v321
      %v479 = vpop.permute.xlu0 %478
      %481 = vset.pattern.permute.xlu0 1
      %482 = vperm.xlu0 %481, %v322
      %v483 = vpop.permute.xlu0 %482
      %485 = vset.pattern.permute.xlu0 1
      %486 = vperm.xlu0 %485, %v323
      %v487 = vpop.permute.xlu0 %486
      %489 = vset.pattern.permute.xlu0 1
      %490 = vperm.xlu0 %489, %v324
      %v491 = vpop.permute.xlu0 %490
      %493 = vset.pattern.permute.xlu0 1
      %494 = vperm.xlu0 %493, %v325
      %v495 = vpop.permute.xlu0 %494
      %v497 = vlaneseq
      %v498 = vshrl.u32 %v497, 7
      %v499 = vsub.s32 1, %v498
      %v500 = vrot.slane %v309, %v499
      %v501 = vlaneseq
      %v502 = vshrl.u32 %v501, 7
      %v503 = vsub.s32 5, %v502
      %v504 = vrot.slane %v309, %v503
      %v507 = vlaneseq
      %v508 = vshrl.u32 %v507, 7
      %v509 = vsub.s32 1, %v508
      %v510 = vrot.slane %v500, %v509
      %v511 = vlaneseq
      %v512 = vshrl.u32 %v511, 7
      %v513 = vsub.s32 1, %v512
      %v514 = vrot.slane %v504, %v513
      %v515 = vmul.f32 %v467, %v510
      %v516 = vmul.f32 %v467, %v514
      %v517 = vmul.f32 %v471, %v510
      %v518 = vmul.f32 %v471, %v514
      %v519 = vmul.f32 %v475, %v510
      %v520 = vmul.f32 %v475, %v514
      %v521 = vmul.f32 %v479, %v510
      %v522 = vmul.f32 %v479, %v514
      %v523 = vmul.f32 %v483, %v510
      %v524 = vmul.f32 %v483, %v514
      %v525 = vmul.f32 %v487, %v510
      %v526 = vmul.f32 %v487, %v514
      %v527 = vmul.f32 %v491, %v510
      %v528 = vmul.f32 %v491, %v514
      %v529 = vmul.f32 %v495, %v510
      %v530 = vmul.f32 %v495, %v514
      %v531 = vadd.f32 %v449, %v515
      %v532 = vadd.f32 %v450, %v516
      %v533 = vadd.f32 %v451, %v517
      %v534 = vadd.f32 %v452, %v518
      %v535 = vadd.f32 %v453, %v519
      %v536 = vadd.f32 %v454, %v520
      %v537 = vadd.f32 %v455, %v521
      %v538 = vadd.f32 %v456, %v522
      %v539 = vadd.f32 %v457, %v523
      %v540 = vadd.f32 %v458, %v524
      %v541 = vadd.f32 %v459, %v525
      %v542 = vadd.f32 %v460, %v526
      %v543 = vadd.f32 %v461, %v527
      %v544 = vadd.f32 %v462, %v528
      %v545 = vadd.f32 %v463, %v529
      %v546 = vadd.f32 %v464, %v530
      %547 = vset.pattern.permute.xlu0 2
      %548 = vperm.xlu0 %547, %v318
      %v549 = vpop.permute.xlu0 %548
      %551 = vset.pattern.permute.xlu0 2
      %552 = vperm.xlu0 %551, %v319
      %v553 = vpop.permute.xlu0 %552
      %555 = vset.pattern.permute.xlu0 2
      %556 = vperm.xlu0 %555, %v320
      %v557 = vpop.permute.xlu0 %556
      %559 = vset.pattern.permute.xlu0 2
      %560 = vperm.xlu0 %559, %v321
      %v561 = vpop.permute.xlu0 %560
      %563 = vset.pattern.permute.xlu0 2
      %564 = vperm.xlu0 %563, %v322
      %v565 = vpop.permute.xlu0 %564
      %567 = vset.pattern.permute.xlu0 2
      %568 = vperm.xlu0 %567, %v323
      %v569 = vpop.permute.xlu0 %568
      %571 = vset.pattern.permute.xlu0 2
      %572 = vperm.xlu0 %571, %v324
      %v573 = vpop.permute.xlu0 %572
      %575 = vset.pattern.permute.xlu0 2
      %576 = vperm.xlu0 %575, %v325
      %v577 = vpop.permute.xlu0 %576
      %v579 = vlaneseq
      %v580 = vshrl.u32 %v579, 7
      %v581 = vsub.s32 2, %v580
      %v582 = vrot.slane %v309, %v581
      %v583 = vlaneseq
      %v584 = vshrl.u32 %v583, 7
      %v585 = vsub.s32 6, %v584
      %v586 = vrot.slane %v309, %v585
      %v589 = vlaneseq
      %v590 = vshrl.u32 %v589, 7
      %v591 = vsub.s32 2, %v590
      %v592 = vrot.slane %v582, %v591
      %v593 = vlaneseq
      %v594 = vshrl.u32 %v593, 7
      %v595 = vsub.s32 2, %v594
      %v596 = vrot.slane %v586, %v595
      %v597 = vmul.f32 %v549, %v592
      %v598 = vmul.f32 %v549, %v596
      %v599 = vmul.f32 %v553, %v592
      %v600 = vmul.f32 %v553, %v596
      %v601 = vmul.f32 %v557, %v592
      %v602 = vmul.f32 %v557, %v596
      %v603 = vmul.f32 %v561, %v592
      %v604 = vmul.f32 %v561, %v596
      %v605 = vmul.f32 %v565, %v592
      %v606 = vmul.f32 %v565, %v596
      %v607 = vmul.f32 %v569, %v592
      %v608 = vmul.f32 %v569, %v596
      %v609 = vmul.f32 %v573, %v592
      %v610 = vmul.f32 %v573, %v596
      %v611 = vmul.f32 %v577, %v592
      %v612 = vmul.f32 %v577, %v596
      %v613 = vadd.f32 %v531, %v597
      %v614 = vadd.f32 %v532, %v598
      %v615 = vadd.f32 %v533, %v599
      %v616 = vadd.f32 %v534, %v600
      %v617 = vadd.f32 %v535, %v601
      %v618 = vadd.f32 %v536, %v602
      %v619 = vadd.f32 %v537, %v603
      %v620 = vadd.f32 %v538, %v604
      %v621 = vadd.f32 %v539, %v605
      %v622 = vadd.f32 %v540, %v606
      %v623 = vadd.f32 %v541, %v607
      %v624 = vadd.f32 %v542, %v608
      %v625 = vadd.f32 %v543, %v609
      %v626 = vadd.f32 %v544, %v610
      %v627 = vadd.f32 %v545, %v611
      %v628 = vadd.f32 %v546, %v612
      %629 = vset.pattern.permute.xlu0 3
      %630 = vperm.xlu0 %629, %v318
      %v631 = vpop.permute.xlu0 %630
      %633 = vset.pattern.permute.xlu0 3
      %634 = vperm.xlu0 %633, %v319
      %v635 = vpop.permute.xlu0 %634
      %637 = vset.pattern.permute.xlu0 3
      %638 = vperm.xlu0 %637, %v320
      %v639 = vpop.permute.xlu0 %638
      %641 = vset.pattern.permute.xlu0 3
      %642 = vperm.xlu0 %641, %v321
      %v643 = vpop.permute.xlu0 %642
      %645 = vset.pattern.permute.xlu0 3
      %646 = vperm.xlu0 %645, %v322
      %v647 = vpop.permute.xlu0 %646
      %649 = vset.pattern.permute.xlu0 3
      %650 = vperm.xlu0 %649, %v323
      %v651 = vpop.permute.xlu0 %650
      %653 = vset.pattern.permute.xlu0 3
      %654 = vperm.xlu0 %653, %v324
      %v655 = vpop.permute.xlu0 %654
      %657 = vset.pattern.permute.xlu0 3
      %658 = vperm.xlu0 %657, %v325
      %v659 = vpop.permute.xlu0 %658
      %v661 = vlaneseq
      %v662 = vshrl.u32 %v661, 7
      %v663 = vsub.s32 3, %v662
      %v664 = vrot.slane %v309, %v663
      %v665 = vlaneseq
      %v666 = vshrl.u32 %v665, 7
      %v667 = vsub.s32 7, %v666
      %v668 = vrot.slane %v309, %v667
      %v671 = vlaneseq
      %v672 = vshrl.u32 %v671, 7
      %v673 = vsub.s32 3, %v672
      %v674 = vrot.slane %v664, %v673
      %v675 = vlaneseq
      %v676 = vshrl.u32 %v675, 7
      %v677 = vsub.s32 3, %v676
      %v678 = vrot.slane %v668, %v677
      %v679 = vmul.f32 %v631, %v674
      %v680 = vmul.f32 %v631, %v678
      %v681 = vmul.f32 %v635, %v674
      %v682 = vmul.f32 %v635, %v678
      %v683 = vmul.f32 %v639, %v674
      %v684 = vmul.f32 %v639, %v678
      %v685 = vmul.f32 %v643, %v674
      %v686 = vmul.f32 %v643, %v678
      %v687 = vmul.f32 %v647, %v674
      %v688 = vmul.f32 %v647, %v678
      %v689 = vmul.f32 %v651, %v674
      %v690 = vmul.f32 %v651, %v678
      %v691 = vmul.f32 %v655, %v674
      %v692 = vmul.f32 %v655, %v678
      %v693 = vmul.f32 %v659, %v674
      %v694 = vmul.f32 %v659, %v678
      %v695 = vadd.f32 %v613, %v679
      %v696 = vadd.f32 %v614, %v680
      %v697 = vadd.f32 %v615, %v681
      %v698 = vadd.f32 %v616, %v682
      %v699 = vadd.f32 %v617, %v683
      %v700 = vadd.f32 %v618, %v684
      %v701 = vadd.f32 %v619, %v685
      %v702 = vadd.f32 %v620, %v686
      %v703 = vadd.f32 %v621, %v687
      %v704 = vadd.f32 %v622, %v688
      %v705 = vadd.f32 %v623, %v689
      %v706 = vadd.f32 %v624, %v690
      %v707 = vadd.f32 %v625, %v691
      %v708 = vadd.f32 %v626, %v692
      %v709 = vadd.f32 %v627, %v693
      %v710 = vadd.f32 %v628, %v694
      %v711 = vmax.f32 %v695, 0.0
      %v712 = vmax.f32 %v696, 0.0
      %v713 = vmax.f32 %v697, 0.0
      %v714 = vmax.f32 %v698, 0.0
      %v715 = vmax.f32 %v699, 0.0
      %v716 = vmax.f32 %v700, 0.0
      %v717 = vmax.f32 %v701, 0.0
      %v718 = vmax.f32 %v702, 0.0
      %v719 = vmax.f32 %v703, 0.0
      %v720 = vmax.f32 %v704, 0.0
      %v721 = vmax.f32 %v705, 0.0
      %v722 = vmax.f32 %v706, 0.0
      %v723 = vmax.f32 %v707, 0.0
      %v724 = vmax.f32 %v708, 0.0
      %v725 = vmax.f32 %v709, 0.0
      %v726 = vmax.f32 %v710, 0.0
      %v727 = vpack.c.bf16 %v713, %v711
      %v728 = vpack.c.bf16 %v714, %v712
      %v729 = vpack.c.bf16 %v717, %v715
      %v730 = vpack.c.bf16 %v718, %v716
      %v731 = vpack.c.bf16 %v721, %v719
      %v732 = vpack.c.bf16 %v722, %v720
      %v733 = vpack.c.bf16 %v725, %v723
      %v734 = vpack.c.bf16 %v726, %v724
      %v735 = vld [vmem:[%s3] sm:$0xf]
      %v736 = vld [vmem:[%s3 + $0x4] sm:$0xf]
      %v737 = vld [vmem:[%s3 + $0x8] sm:$0xf]
      %v738 = vld [vmem:[%s3 + $0xc] sm:$0xf]
      %v739 = vld [vmem:[%s3 + $0x10] sm:$0xf]
      %v740 = vld [vmem:[%s3 + $0x14] sm:$0xf]
      %v741 = vld [vmem:[%s3 + $0x18] sm:$0xf]
      %v742 = vld [vmem:[%s3 + $0x1c] sm:$0xf]
      %v743 = vld [vmem:[%s3 + $0x20] sm:$0xf]
      %v744 = vld [vmem:[%s3 + $0x24] sm:$0xf]
      %v745 = vld [vmem:[%s3 + $0x28] sm:$0xf]
      %v746 = vld [vmem:[%s3 + $0x2c] sm:$0xf]
      %v747 = vld [vmem:[%s3 + $0x30] sm:$0xf]
      %v748 = vld [vmem:[%s3 + $0x34] sm:$0xf]
      %v749 = vld [vmem:[%s3 + $0x38] sm:$0xf]
      %v750 = vld [vmem:[%s3 + $0x3c] sm:$0xf]
      %v751 = vld [vmem:[%s4] sm:$0xff]
      %v752 = vld [vmem:[%s4 + $0x8] sm:$0xff]
      %v753 = vld [vmem:[%s4 + $0x10] sm:$0xff]
      %v754 = vld [vmem:[%s4 + $0x18] sm:$0xff]
      %v755 = vld [vmem:[%s4 + $0x20] sm:$0xff]
      %v756 = vld [vmem:[%s4 + $0x28] sm:$0xff]
      %v757 = vld [vmem:[%s4 + $0x30] sm:$0xff]
      %v758 = vld [vmem:[%s4 + $0x38] sm:$0xff]
      %v759 = vld [vmem:[%s4 + $0x40] sm:$0xff]
      %v760 = vld [vmem:[%s4 + $0x48] sm:$0xff]
      %v761 = vld [vmem:[%s4 + $0x50] sm:$0xff]
      %v762 = vld [vmem:[%s4 + $0x58] sm:$0xff]
      %v763 = vld [vmem:[%s4 + $0x60] sm:$0xff]
      %v764 = vld [vmem:[%s4 + $0x68] sm:$0xff]
      %v765 = vld [vmem:[%s4 + $0x70] sm:$0xff]
      %v766 = vld [vmem:[%s4 + $0x78] sm:$0xff]
      %768 = vset.pattern.permute.xlu0 0
      %769 = vperm.xlu0 %768, %v751
      %v770 = vpop.permute.xlu0 %769
      %773 = vset.pattern.permute.xlu0 0
      %774 = vperm.xlu0 %773, %v752
      %v775 = vpop.permute.xlu0 %774
      %778 = vset.pattern.permute.xlu0 0
      %779 = vperm.xlu0 %778, %v753
      %v780 = vpop.permute.xlu0 %779
      %783 = vset.pattern.permute.xlu0 0
      %784 = vperm.xlu0 %783, %v754
      %v785 = vpop.permute.xlu0 %784
      %788 = vset.pattern.permute.xlu0 0
      %789 = vperm.xlu0 %788, %v755
      %v790 = vpop.permute.xlu0 %789
      %793 = vset.pattern.permute.xlu0 0
      %794 = vperm.xlu0 %793, %v756
      %v795 = vpop.permute.xlu0 %794
      %798 = vset.pattern.permute.xlu0 0
      %799 = vperm.xlu0 %798, %v757
      %v800 = vpop.permute.xlu0 %799
      %803 = vset.pattern.permute.xlu0 0
      %804 = vperm.xlu0 %803, %v758
      %v805 = vpop.permute.xlu0 %804
      %808 = vset.pattern.permute.xlu0 0
      %809 = vperm.xlu0 %808, %v759
      %v810 = vpop.permute.xlu0 %809
      %813 = vset.pattern.permute.xlu0 0
      %814 = vperm.xlu0 %813, %v760
      %v815 = vpop.permute.xlu0 %814
      %818 = vset.pattern.permute.xlu0 0
      %819 = vperm.xlu0 %818, %v761
      %v820 = vpop.permute.xlu0 %819
      %823 = vset.pattern.permute.xlu0 0
      %824 = vperm.xlu0 %823, %v762
      %v825 = vpop.permute.xlu0 %824
      %828 = vset.pattern.permute.xlu0 0
      %829 = vperm.xlu0 %828, %v763
      %v830 = vpop.permute.xlu0 %829
      %833 = vset.pattern.permute.xlu0 0
      %834 = vperm.xlu0 %833, %v764
      %v835 = vpop.permute.xlu0 %834
      %838 = vset.pattern.permute.xlu0 0
      %839 = vperm.xlu0 %838, %v765
      %v840 = vpop.permute.xlu0 %839
      %843 = vset.pattern.permute.xlu0 0
      %844 = vperm.xlu0 %843, %v766
      %v845 = vpop.permute.xlu0 %844
      %v863 = vunpack.c.l.b16 %v735
      %v864 = vunpack.c.l.b16 %v736
      %v865 = vunpack.c.l.b16 %v737
      %v866 = vunpack.c.l.b16 %v738
      %v867 = vunpack.c.l.b16 %v739
      %v868 = vunpack.c.l.b16 %v740
      %v869 = vunpack.c.l.b16 %v741
      %v870 = vunpack.c.l.b16 %v742
      %v871 = vunpack.c.l.b16 %v743
      %v872 = vunpack.c.l.b16 %v744
      %v873 = vunpack.c.l.b16 %v745
      %v874 = vunpack.c.l.b16 %v746
      %v875 = vunpack.c.l.b16 %v747
      %v876 = vunpack.c.l.b16 %v748
      %v877 = vunpack.c.l.b16 %v749
      %v878 = vunpack.c.l.b16 %v750
      %v879 = vpack.c.b16 %v864, %v863
      %v880 = vpack.c.b16 %v866, %v865
      %v881 = vpack.c.b16 %v868, %v867
      %v882 = vpack.c.b16 %v870, %v869
      %v883 = vpack.c.b16 %v872, %v871
      %v884 = vpack.c.b16 %v874, %v873
      %v885 = vpack.c.b16 %v876, %v875
      %v886 = vpack.c.b16 %v878, %v877
      %vm887 = vcmask 523264
      %v889 = vsel %vm887, %v879, 0
      %v892 = vsel %vm887, %v880, 0
      %v895 = vsel %vm887, %v881, 0
      %v898 = vsel %vm887, %v882, 0
      %v901 = vsel %vm887, %v883, 0
      %v904 = vsel %vm887, %v884, 0
      %v907 = vsel %vm887, %v885, 0
      %v910 = vsel %vm887, %v886, 0
      %912 = vmatprep.subr.bf16.mxu0 0
      %913 = vmatpush1.bf16.msra.mxu0 0
      %914 = vmatprep.subr.bf16.mxu0 0
      %915 = vmatpush1.bf16.msra.mxu0 0
      %916 = vmatprep.subr.bf16.mxu0 0
      %917 = vmatpush1.bf16.msra.mxu0 0
      %918 = vmatprep.subr.bf16.mxu0 0
      %919 = vmatpush1.bf16.msra.mxu0 0
      %920 = vmatprep.subr.bf16.mxu0 %v734
      %921 = vmatpush1.bf16.msra.mxu0 %v733
      %922 = vmatprep.subr.bf16.mxu0 %v732
      %923 = vmatpush1.bf16.msra.mxu0 %v731
      %924 = vmatprep.subr.bf16.mxu0 %v730
      %925 = vmatpush1.bf16.msra.mxu0 %v729
      %926 = vmatprep.subr.bf16.mxu0 %v728
      %927 = vmatpush1.bf16.msra.mxu0 %v727
      %928 = vmatprep.subr.bf16.mxu0 0
      %929 = vmatpush2.bf16.msra.mxu0 0
      %930 = vmatprep.subr.bf16.mxu0 0
      %931 = vmatpush2.bf16.msra.mxu0 0
      %932 = vmatprep.subr.bf16.mxu0 0
      %933 = vmatpush2.bf16.msra.mxu0 0
      %934 = vmatprep.subr.bf16.mxu0 0
      %935 = vmatpush2.bf16.msra.mxu0 0
      %936 = vmatprep.subr.bf16.mxu0 0
      %937 = vmatpush2.bf16.msra.mxu0 0
      %938 = vmatprep.subr.bf16.mxu0 0
      %939 = vmatpush2.bf16.msra.mxu0 0
      %940 = vmatprep.subr.bf16.mxu0 0
      %941 = vmatpush2.bf16.msra.mxu0 0
      %942 = vmatprep.subr.bf16.mxu0 0
      %943 = vmatpush2.bf16.msra.mxu0 0
      %944 = vmatprep.mubr.bf16.mxu0 0
      %945 = vmatmul.mubr.bf16.gmra.mxu0 %v889
      %v946 = vpop.f32.mrf.mxu0
      %v947 = vadd.f32 %v770, %v946
      %v948 = vpop.f32.mrf.mxu0
      %v949 = vadd.f32 %v770, %v948
      %v950 = vpop.f32.mrf.mxu0
      %v951 = vadd.f32 %v775, %v950
      %v952 = vpop.f32.mrf.mxu0
      %v953 = vadd.f32 %v775, %v952
      %954 = vmatprep.mubr.bf16.mxu0 0
      %955 = vmatmul.mubr.bf16.gmra.mxu0 %v892
      %v956 = vpop.f32.mrf.mxu0
      %v957 = vadd.f32 %v780, %v956
      %v958 = vpop.f32.mrf.mxu0
      %v959 = vadd.f32 %v780, %v958
      %v960 = vpop.f32.mrf.mxu0
      %v961 = vadd.f32 %v785, %v960
      %v962 = vpop.f32.mrf.mxu0
      %v963 = vadd.f32 %v785, %v962
      %964 = vmatprep.mubr.bf16.mxu0 0
      %965 = vmatmul.mubr.bf16.gmra.mxu0 %v895
      %v966 = vpop.f32.mrf.mxu0
      %v967 = vadd.f32 %v790, %v966
      %v968 = vpop.f32.mrf.mxu0
      %v969 = vadd.f32 %v790, %v968
      %v970 = vpop.f32.mrf.mxu0
      %v971 = vadd.f32 %v795, %v970
      %v972 = vpop.f32.mrf.mxu0
      %v973 = vadd.f32 %v795, %v972
      %974 = vmatprep.mubr.bf16.mxu0 0
      %975 = vmatmul.mubr.bf16.gmra.mxu0 %v898
      %v976 = vpop.f32.mrf.mxu0
      %v977 = vadd.f32 %v800, %v976
      %v978 = vpop.f32.mrf.mxu0
      %v979 = vadd.f32 %v800, %v978
      %v980 = vpop.f32.mrf.mxu0
      %v981 = vadd.f32 %v805, %v980
      %v982 = vpop.f32.mrf.mxu0
      %v983 = vadd.f32 %v805, %v982
      %984 = vmatprep.mubr.bf16.mxu0 0
      %985 = vmatmul.mubr.bf16.gmra.mxu0 %v901
      %v986 = vpop.f32.mrf.mxu0
      %v987 = vadd.f32 %v810, %v986
      %v988 = vpop.f32.mrf.mxu0
      %v989 = vadd.f32 %v810, %v988
      %v990 = vpop.f32.mrf.mxu0
      %v991 = vadd.f32 %v815, %v990
      %v992 = vpop.f32.mrf.mxu0
      %v993 = vadd.f32 %v815, %v992
      %994 = vmatprep.mubr.bf16.mxu0 0
      %995 = vmatmul.mubr.bf16.gmra.mxu0 %v904
      %v996 = vpop.f32.mrf.mxu0
      %v997 = vadd.f32 %v820, %v996
      %v998 = vpop.f32.mrf.mxu0
      %v999 = vadd.f32 %v820, %v998
      %v1000 = vpop.f32.mrf.mxu0
      %v1001 = vadd.f32 %v825, %v1000
      %v1002 = vpop.f32.mrf.mxu0
      %v1003 = vadd.f32 %v825, %v1002
      %1004 = vmatprep.mubr.bf16.mxu0 0
      %1005 = vmatmul.mubr.bf16.gmra.mxu0 %v907
      %v1006 = vpop.f32.mrf.mxu0
      %v1007 = vadd.f32 %v830, %v1006
      %v1008 = vpop.f32.mrf.mxu0
      %v1009 = vadd.f32 %v830, %v1008
      %v1010 = vpop.f32.mrf.mxu0
      %v1011 = vadd.f32 %v835, %v1010
      %v1012 = vpop.f32.mrf.mxu0
      %v1013 = vadd.f32 %v835, %v1012
      %1014 = vmatprep.mubr.bf16.mxu0 0
      %1015 = vmatmul.mubr.bf16.gmra.mxu0 %v910
      %v1016 = vpop.f32.mrf.mxu0
      %v1017 = vadd.f32 %v840, %v1016
      %v1018 = vpop.f32.mrf.mxu0
      %v1019 = vadd.f32 %v840, %v1018
      %v1020 = vpop.f32.mrf.mxu0
      %v1021 = vadd.f32 %v845, %v1020
      %v1022 = vpop.f32.mrf.mxu0
      %v1023 = vadd.f32 %v845, %v1022
      %1024 = vdwg.mxu0
      %v1025 = vmax.f32 %v947, 0.0
      %v1026 = vmax.f32 %v949, 0.0
      %v1027 = vmax.f32 %v951, 0.0
      %v1028 = vmax.f32 %v953, 0.0
      %v1029 = vmax.f32 %v957, 0.0
      %v1030 = vmax.f32 %v959, 0.0
      %v1031 = vmax.f32 %v961, 0.0
      %v1032 = vmax.f32 %v963, 0.0
      %v1033 = vmax.f32 %v967, 0.0
      %v1034 = vmax.f32 %v969, 0.0
      %v1035 = vmax.f32 %v971, 0.0
      %v1036 = vmax.f32 %v973, 0.0
      %v1037 = vmax.f32 %v977, 0.0
      %v1038 = vmax.f32 %v979, 0.0
      %v1039 = vmax.f32 %v981, 0.0
      %v1040 = vmax.f32 %v983, 0.0
      %v1041 = vmax.f32 %v987, 0.0
      %v1042 = vmax.f32 %v989, 0.0
      %v1043 = vmax.f32 %v991, 0.0
      %v1044 = vmax.f32 %v993, 0.0
      %v1045 = vmax.f32 %v997, 0.0
      %v1046 = vmax.f32 %v999, 0.0
      %v1047 = vmax.f32 %v1001, 0.0
      %v1048 = vmax.f32 %v1003, 0.0
      %v1049 = vmax.f32 %v1007, 0.0
      %v1050 = vmax.f32 %v1009, 0.0
      %v1051 = vmax.f32 %v1011, 0.0
      %v1052 = vmax.f32 %v1013, 0.0
      %v1053 = vmax.f32 %v1017, 0.0
      %v1054 = vmax.f32 %v1019, 0.0
      %v1055 = vmax.f32 %v1021, 0.0
      %v1056 = vmax.f32 %v1023, 0.0
      %v1057 = vpack.c.bf16 %v1027, %v1025
      %v1058 = vpack.c.bf16 %v1028, %v1026
      %v1059 = vpack.c.bf16 %v1031, %v1029
      %v1060 = vpack.c.bf16 %v1032, %v1030
      %v1061 = vpack.c.bf16 %v1035, %v1033
      %v1062 = vpack.c.bf16 %v1036, %v1034
      %v1063 = vpack.c.bf16 %v1039, %v1037
      %v1064 = vpack.c.bf16 %v1040, %v1038
      %v1065 = vpack.c.bf16 %v1043, %v1041
      %v1066 = vpack.c.bf16 %v1044, %v1042
      %v1067 = vpack.c.bf16 %v1047, %v1045
      %v1068 = vpack.c.bf16 %v1048, %v1046
      %v1069 = vpack.c.bf16 %v1051, %v1049
      %v1070 = vpack.c.bf16 %v1052, %v1050
      %v1071 = vpack.c.bf16 %v1055, %v1053
      %v1072 = vpack.c.bf16 %v1056, %v1054
      %v1073 = vld [vmem:[%s5] sm:$0xf]
      %v1074 = vld [vmem:[%s5 + $0x4] sm:$0xf]
      %v1075 = vld [vmem:[%s5 + $0x8] sm:$0xf]
      %v1076 = vld [vmem:[%s5 + $0xc] sm:$0xf]
      %v1077 = vld [vmem:[%s5 + $0x10] sm:$0xf]
      %v1078 = vld [vmem:[%s5 + $0x14] sm:$0xf]
      %v1079 = vld [vmem:[%s5 + $0x18] sm:$0xf]
      %v1080 = vld [vmem:[%s5 + $0x1c] sm:$0xf]
      %v1081 = vld [vmem:[%s5 + $0x20] sm:$0xf]
      %v1082 = vld [vmem:[%s5 + $0x24] sm:$0xf]
      %v1083 = vld [vmem:[%s5 + $0x28] sm:$0xf]
      %v1084 = vld [vmem:[%s5 + $0x2c] sm:$0xf]
      %v1085 = vld [vmem:[%s5 + $0x30] sm:$0xf]
      %v1086 = vld [vmem:[%s5 + $0x34] sm:$0xf]
      %v1087 = vld [vmem:[%s5 + $0x38] sm:$0xf]
      %v1088 = vld [vmem:[%s5 + $0x3c] sm:$0xf]
      %v1089 = vld [vmem:[%s5 + $0x40] sm:$0xf]
      %v1090 = vld [vmem:[%s5 + $0x44] sm:$0xf]
      %v1091 = vld [vmem:[%s5 + $0x48] sm:$0xf]
      %v1092 = vld [vmem:[%s5 + $0x4c] sm:$0xf]
      %v1093 = vld [vmem:[%s5 + $0x50] sm:$0xf]
      %v1094 = vld [vmem:[%s5 + $0x54] sm:$0xf]
      %v1095 = vld [vmem:[%s5 + $0x58] sm:$0xf]
      %v1096 = vld [vmem:[%s5 + $0x5c] sm:$0xf]
      %v1097 = vld [vmem:[%s5 + $0x60] sm:$0xf]
      %v1098 = vld [vmem:[%s5 + $0x64] sm:$0xf]
      %v1099 = vld [vmem:[%s5 + $0x68] sm:$0xf]
      %v1100 = vld [vmem:[%s5 + $0x6c] sm:$0xf]
      %v1101 = vld [vmem:[%s5 + $0x70] sm:$0xf]
      %v1102 = vld [vmem:[%s5 + $0x74] sm:$0xf]
      %v1103 = vld [vmem:[%s5 + $0x78] sm:$0xf]
      %v1104 = vld [vmem:[%s5 + $0x7c] sm:$0xf]
      %v1105 = vld [vmem:[%s5 + $0x80] sm:$0xf]
      %v1106 = vld [vmem:[%s5 + $0x84] sm:$0xf]
      %v1107 = vld [vmem:[%s5 + $0x88] sm:$0xf]
      %v1108 = vld [vmem:[%s5 + $0x8c] sm:$0xf]
      %v1109 = vld [vmem:[%s5 + $0x90] sm:$0xf]
      %v1110 = vld [vmem:[%s5 + $0x94] sm:$0xf]
      %v1111 = vld [vmem:[%s5 + $0x98] sm:$0xf]
      %v1112 = vld [vmem:[%s5 + $0x9c] sm:$0xf]
      %v1113 = vld [vmem:[%s5 + $0xa0] sm:$0xf]
      %v1114 = vld [vmem:[%s5 + $0xa4] sm:$0xf]
      %v1115 = vld [vmem:[%s5 + $0xa8] sm:$0xf]
      %v1116 = vld [vmem:[%s5 + $0xac] sm:$0xf]
      %v1117 = vld [vmem:[%s5 + $0xb0] sm:$0xf]
      %v1118 = vld [vmem:[%s5 + $0xb4] sm:$0xf]
      %v1119 = vld [vmem:[%s5 + $0xb8] sm:$0xf]
      %v1120 = vld [vmem:[%s5 + $0xbc] sm:$0xf]
      %v1121 = vld [vmem:[%s5 + $0xc0] sm:$0xf]
      %v1122 = vld [vmem:[%s5 + $0xc4] sm:$0xf]
      %v1123 = vld [vmem:[%s5 + $0xc8] sm:$0xf]
      %v1124 = vld [vmem:[%s5 + $0xcc] sm:$0xf]
      %v1125 = vld [vmem:[%s5 + $0xd0] sm:$0xf]
      %v1126 = vld [vmem:[%s5 + $0xd4] sm:$0xf]
      %v1127 = vld [vmem:[%s5 + $0xd8] sm:$0xf]
      %v1128 = vld [vmem:[%s5 + $0xdc] sm:$0xf]
      %v1129 = vld [vmem:[%s5 + $0xe0] sm:$0xf]
      %v1130 = vld [vmem:[%s5 + $0xe4] sm:$0xf]
      %v1131 = vld [vmem:[%s5 + $0xe8] sm:$0xf]
      %v1132 = vld [vmem:[%s5 + $0xec] sm:$0xf]
      %v1133 = vld [vmem:[%s5 + $0xf0] sm:$0xf]
      %v1134 = vld [vmem:[%s5 + $0xf4] sm:$0xf]
      %v1135 = vld [vmem:[%s5 + $0xf8] sm:$0xf]
      %v1136 = vld [vmem:[%s5 + $0xfc] sm:$0xf]
      %v1137 = vld [vmem:[%s5 + $0x100] sm:$0xf]
      %v1138 = vld [vmem:[%s5 + $0x104] sm:$0xf]
      %v1139 = vld [vmem:[%s5 + $0x108] sm:$0xf]
      %v1140 = vld [vmem:[%s5 + $0x10c] sm:$0xf]
      %v1141 = vld [vmem:[%s5 + $0x110] sm:$0xf]
      %v1142 = vld [vmem:[%s5 + $0x114] sm:$0xf]
      %v1143 = vld [vmem:[%s5 + $0x118] sm:$0xf]
      %v1144 = vld [vmem:[%s5 + $0x11c] sm:$0xf]
      %v1145 = vld [vmem:[%s5 + $0x120] sm:$0xf]
      %v1146 = vld [vmem:[%s5 + $0x124] sm:$0xf]
      %v1147 = vld [vmem:[%s5 + $0x128] sm:$0xf]
      %v1148 = vld [vmem:[%s5 + $0x12c] sm:$0xf]
      %v1149 = vld [vmem:[%s5 + $0x130] sm:$0xf]
      %v1150 = vld [vmem:[%s5 + $0x134] sm:$0xf]
      %v1151 = vld [vmem:[%s5 + $0x138] sm:$0xf]
      %v1152 = vld [vmem:[%s5 + $0x13c] sm:$0xf]
      %v1153 = vld [vmem:[%s5 + $0x140] sm:$0xf]
      %v1154 = vld [vmem:[%s5 + $0x144] sm:$0xf]
      %v1155 = vld [vmem:[%s5 + $0x148] sm:$0xf]
      %v1156 = vld [vmem:[%s5 + $0x14c] sm:$0xf]
      %v1157 = vld [vmem:[%s5 + $0x150] sm:$0xf]
      %v1158 = vld [vmem:[%s5 + $0x154] sm:$0xf]
      %v1159 = vld [vmem:[%s5 + $0x158] sm:$0xf]
      %v1160 = vld [vmem:[%s5 + $0x15c] sm:$0xf]
      %v1161 = vld [vmem:[%s5 + $0x160] sm:$0xf]
      %v1162 = vld [vmem:[%s5 + $0x164] sm:$0xf]
      %v1163 = vld [vmem:[%s5 + $0x168] sm:$0xf]
      %v1164 = vld [vmem:[%s5 + $0x16c] sm:$0xf]
      %v1165 = vld [vmem:[%s5 + $0x170] sm:$0xf]
      %v1166 = vld [vmem:[%s5 + $0x174] sm:$0xf]
      %v1167 = vld [vmem:[%s5 + $0x178] sm:$0xf]
      %v1168 = vld [vmem:[%s5 + $0x17c] sm:$0xf]
      %v1169 = vld [vmem:[%s5 + $0x180] sm:$0xf]
      %v1170 = vld [vmem:[%s5 + $0x184] sm:$0xf]
      %v1171 = vld [vmem:[%s5 + $0x188] sm:$0xf]
      %v1172 = vld [vmem:[%s5 + $0x18c] sm:$0xf]
      %v1173 = vld [vmem:[%s5 + $0x190] sm:$0xf]
      %v1174 = vld [vmem:[%s5 + $0x194] sm:$0xf]
      %v1175 = vld [vmem:[%s5 + $0x198] sm:$0xf]
      %v1176 = vld [vmem:[%s5 + $0x19c] sm:$0xf]
      %v1177 = vld [vmem:[%s5 + $0x1a0] sm:$0xf]
      %v1178 = vld [vmem:[%s5 + $0x1a4] sm:$0xf]
      %v1179 = vld [vmem:[%s5 + $0x1a8] sm:$0xf]
      %v1180 = vld [vmem:[%s5 + $0x1ac] sm:$0xf]
      %v1181 = vld [vmem:[%s5 + $0x1b0] sm:$0xf]
      %v1182 = vld [vmem:[%s5 + $0x1b4] sm:$0xf]
      %v1183 = vld [vmem:[%s5 + $0x1b8] sm:$0xf]
      %v1184 = vld [vmem:[%s5 + $0x1bc] sm:$0xf]
      %v1185 = vld [vmem:[%s5 + $0x1c0] sm:$0xf]
      %v1186 = vld [vmem:[%s5 + $0x1c4] sm:$0xf]
      %v1187 = vld [vmem:[%s5 + $0x1c8] sm:$0xf]
      %v1188 = vld [vmem:[%s5 + $0x1cc] sm:$0xf]
      %v1189 = vld [vmem:[%s5 + $0x1d0] sm:$0xf]
      %v1190 = vld [vmem:[%s5 + $0x1d4] sm:$0xf]
      %v1191 = vld [vmem:[%s5 + $0x1d8] sm:$0xf]
      %v1192 = vld [vmem:[%s5 + $0x1dc] sm:$0xf]
      %v1193 = vld [vmem:[%s5 + $0x1e0] sm:$0xf]
      %v1194 = vld [vmem:[%s5 + $0x1e4] sm:$0xf]
      %v1195 = vld [vmem:[%s5 + $0x1e8] sm:$0xf]
      %v1196 = vld [vmem:[%s5 + $0x1ec] sm:$0xf]
      %v1197 = vld [vmem:[%s5 + $0x1f0] sm:$0xf]
      %v1198 = vld [vmem:[%s5 + $0x1f4] sm:$0xf]
      %v1199 = vld [vmem:[%s5 + $0x1f8] sm:$0xf]
      %v1200 = vld [vmem:[%s5 + $0x1fc] sm:$0xf]
      %v1329 = vunpack.c.l.b16 %v1073
      %v1330 = vunpack.c.l.b16 %v1074
      %v1331 = vunpack.c.l.b16 %v1075
      %v1332 = vunpack.c.l.b16 %v1076
      %v1333 = vunpack.c.l.b16 %v1077
      %v1334 = vunpack.c.l.b16 %v1078
      %v1335 = vunpack.c.l.b16 %v1079
      %v1336 = vunpack.c.l.b16 %v1080
      %v1337 = vunpack.c.l.b16 %v1081
      %v1338 = vunpack.c.l.b16 %v1082
      %v1339 = vunpack.c.l.b16 %v1083
      %v1340 = vunpack.c.l.b16 %v1084
      %v1341 = vunpack.c.l.b16 %v1085
      %v1342 = vunpack.c.l.b16 %v1086
      %v1343 = vunpack.c.l.b16 %v1087
      %v1344 = vunpack.c.l.b16 %v1088
      %v1345 = vunpack.c.l.b16 %v1089
      %v1346 = vunpack.c.l.b16 %v1090
      %v1347 = vunpack.c.l.b16 %v1091
      %v1348 = vunpack.c.l.b16 %v1092
      %v1349 = vunpack.c.l.b16 %v1093
      %v1350 = vunpack.c.l.b16 %v1094
      %v1351 = vunpack.c.l.b16 %v1095
      %v1352 = vunpack.c.l.b16 %v1096
      %v1353 = vunpack.c.l.b16 %v1097
      %v1354 = vunpack.c.l.b16 %v1098
      %v1355 = vunpack.c.l.b16 %v1099
      %v1356 = vunpack.c.l.b16 %v1100
      %v1357 = vunpack.c.l.b16 %v1101
      %v1358 = vunpack.c.l.b16 %v1102
      %v1359 = vunpack.c.l.b16 %v1103
      %v1360 = vunpack.c.l.b16 %v1104
      %v1361 = vunpack.c.l.b16 %v1105
      %v1362 = vunpack.c.l.b16 %v1106
      %v1363 = vunpack.c.l.b16 %v1107
      %v1364 = vunpack.c.l.b16 %v1108
      %v1365 = vunpack.c.l.b16 %v1109
      %v1366 = vunpack.c.l.b16 %v1110
      %v1367 = vunpack.c.l.b16 %v1111
      %v1368 = vunpack.c.l.b16 %v1112
      %v1369 = vunpack.c.l.b16 %v1113
      %v1370 = vunpack.c.l.b16 %v1114
      %v1371 = vunpack.c.l.b16 %v1115
      %v1372 = vunpack.c.l.b16 %v1116
      %v1373 = vunpack.c.l.b16 %v1117
      %v1374 = vunpack.c.l.b16 %v1118
      %v1375 = vunpack.c.l.b16 %v1119
      %v1376 = vunpack.c.l.b16 %v1120
      %v1377 = vunpack.c.l.b16 %v1121
      %v1378 = vunpack.c.l.b16 %v1122
      %v1379 = vunpack.c.l.b16 %v1123
      %v1380 = vunpack.c.l.b16 %v1124
      %v1381 = vunpack.c.l.b16 %v1125
      %v1382 = vunpack.c.l.b16 %v1126
      %v1383 = vunpack.c.l.b16 %v1127
      %v1384 = vunpack.c.l.b16 %v1128
      %v1385 = vunpack.c.l.b16 %v1129
      %v1386 = vunpack.c.l.b16 %v1130
      %v1387 = vunpack.c.l.b16 %v1131
      %v1388 = vunpack.c.l.b16 %v1132
      %v1389 = vunpack.c.l.b16 %v1133
      %v1390 = vunpack.c.l.b16 %v1134
      %v1391 = vunpack.c.l.b16 %v1135
      %v1392 = vunpack.c.l.b16 %v1136
      %v1393 = vunpack.c.l.b16 %v1137
      %v1394 = vunpack.c.l.b16 %v1138
      %v1395 = vunpack.c.l.b16 %v1139
      %v1396 = vunpack.c.l.b16 %v1140
      %v1397 = vunpack.c.l.b16 %v1141
      %v1398 = vunpack.c.l.b16 %v1142
      %v1399 = vunpack.c.l.b16 %v1143
      %v1400 = vunpack.c.l.b16 %v1144
      %v1401 = vunpack.c.l.b16 %v1145
      %v1402 = vunpack.c.l.b16 %v1146
      %v1403 = vunpack.c.l.b16 %v1147
      %v1404 = vunpack.c.l.b16 %v1148
      %v1405 = vunpack.c.l.b16 %v1149
      %v1406 = vunpack.c.l.b16 %v1150
      %v1407 = vunpack.c.l.b16 %v1151
      %v1408 = vunpack.c.l.b16 %v1152
      %v1409 = vunpack.c.l.b16 %v1153
      %v1410 = vunpack.c.l.b16 %v1154
      %v1411 = vunpack.c.l.b16 %v1155
      %v1412 = vunpack.c.l.b16 %v1156
      %v1413 = vunpack.c.l.b16 %v1157
      %v1414 = vunpack.c.l.b16 %v1158
      %v1415 = vunpack.c.l.b16 %v1159
      %v1416 = vunpack.c.l.b16 %v1160
      %v1417 = vunpack.c.l.b16 %v1161
      %v1418 = vunpack.c.l.b16 %v1162
      %v1419 = vunpack.c.l.b16 %v1163
      %v1420 = vunpack.c.l.b16 %v1164
      %v1421 = vunpack.c.l.b16 %v1165
      %v1422 = vunpack.c.l.b16 %v1166
      %v1423 = vunpack.c.l.b16 %v1167
      %v1424 = vunpack.c.l.b16 %v1168
      %v1425 = vunpack.c.l.b16 %v1169
      %v1426 = vunpack.c.l.b16 %v1170
      %v1427 = vunpack.c.l.b16 %v1171
      %v1428 = vunpack.c.l.b16 %v1172
      %v1429 = vunpack.c.l.b16 %v1173
      %v1430 = vunpack.c.l.b16 %v1174
      %v1431 = vunpack.c.l.b16 %v1175
      %v1432 = vunpack.c.l.b16 %v1176
      %v1433 = vunpack.c.l.b16 %v1177
      %v1434 = vunpack.c.l.b16 %v1178
      %v1435 = vunpack.c.l.b16 %v1179
      %v1436 = vunpack.c.l.b16 %v1180
      %v1437 = vunpack.c.l.b16 %v1181
      %v1438 = vunpack.c.l.b16 %v1182
      %v1439 = vunpack.c.l.b16 %v1183
      %v1440 = vunpack.c.l.b16 %v1184
      %v1441 = vunpack.c.l.b16 %v1185
      %v1442 = vunpack.c.l.b16 %v1186
      %v1443 = vunpack.c.l.b16 %v1187
      %v1444 = vunpack.c.l.b16 %v1188
      %v1445 = vunpack.c.l.b16 %v1189
      %v1446 = vunpack.c.l.b16 %v1190
      %v1447 = vunpack.c.l.b16 %v1191
      %v1448 = vunpack.c.l.b16 %v1192
      %v1449 = vunpack.c.l.b16 %v1193
      %v1450 = vunpack.c.l.b16 %v1194
      %v1451 = vunpack.c.l.b16 %v1195
      %v1452 = vunpack.c.l.b16 %v1196
      %v1453 = vunpack.c.l.b16 %v1197
      %v1454 = vunpack.c.l.b16 %v1198
      %v1455 = vunpack.c.l.b16 %v1199
      %v1456 = vunpack.c.l.b16 %v1200
      %v1457 = vpack.c.b16 %v1330, %v1329
      %v1458 = vpack.c.b16 %v1332, %v1331
      %v1459 = vpack.c.b16 %v1334, %v1333
      %v1460 = vpack.c.b16 %v1336, %v1335
      %v1461 = vpack.c.b16 %v1338, %v1337
      %v1462 = vpack.c.b16 %v1340, %v1339
      %v1463 = vpack.c.b16 %v1342, %v1341
      %v1464 = vpack.c.b16 %v1344, %v1343
      %v1465 = vpack.c.b16 %v1346, %v1345
      %v1466 = vpack.c.b16 %v1348, %v1347
      %v1467 = vpack.c.b16 %v1350, %v1349
      %v1468 = vpack.c.b16 %v1352, %v1351
      %v1469 = vpack.c.b16 %v1354, %v1353
      %v1470 = vpack.c.b16 %v1356, %v1355
      %v1471 = vpack.c.b16 %v1358, %v1357
      %v1472 = vpack.c.b16 %v1360, %v1359
      %v1473 = vpack.c.b16 %v1362, %v1361
      %v1474 = vpack.c.b16 %v1364, %v1363
      %v1475 = vpack.c.b16 %v1366, %v1365
      %v1476 = vpack.c.b16 %v1368, %v1367
      %v1477 = vpack.c.b16 %v1370, %v1369
      %v1478 = vpack.c.b16 %v1372, %v1371
      %v1479 = vpack.c.b16 %v1374, %v1373
      %v1480 = vpack.c.b16 %v1376, %v1375
      %v1481 = vpack.c.b16 %v1378, %v1377
      %v1482 = vpack.c.b16 %v1380, %v1379
      %v1483 = vpack.c.b16 %v1382, %v1381
      %v1484 = vpack.c.b16 %v1384, %v1383
      %v1485 = vpack.c.b16 %v1386, %v1385
      %v1486 = vpack.c.b16 %v1388, %v1387
      %v1487 = vpack.c.b16 %v1390, %v1389
      %v1488 = vpack.c.b16 %v1392, %v1391
      %v1489 = vpack.c.b16 %v1394, %v1393
      %v1490 = vpack.c.b16 %v1396, %v1395
      %v1491 = vpack.c.b16 %v1398, %v1397
      %v1492 = vpack.c.b16 %v1400, %v1399
      %v1493 = vpack.c.b16 %v1402, %v1401
      %v1494 = vpack.c.b16 %v1404, %v1403
      %v1495 = vpack.c.b16 %v1406, %v1405
      %v1496 = vpack.c.b16 %v1408, %v1407
      %v1497 = vpack.c.b16 %v1410, %v1409
      %v1498 = vpack.c.b16 %v1412, %v1411
      %v1499 = vpack.c.b16 %v1414, %v1413
      %v1500 = vpack.c.b16 %v1416, %v1415
      %v1501 = vpack.c.b16 %v1418, %v1417
      %v1502 = vpack.c.b16 %v1420, %v1419
      %v1503 = vpack.c.b16 %v1422, %v1421
      %v1504 = vpack.c.b16 %v1424, %v1423
      %v1505 = vpack.c.b16 %v1426, %v1425
      %v1506 = vpack.c.b16 %v1428, %v1427
      %v1507 = vpack.c.b16 %v1430, %v1429
      %v1508 = vpack.c.b16 %v1432, %v1431
      %v1509 = vpack.c.b16 %v1434, %v1433
      %v1510 = vpack.c.b16 %v1436, %v1435
      %v1511 = vpack.c.b16 %v1438, %v1437
      %v1512 = vpack.c.b16 %v1440, %v1439
      %v1513 = vpack.c.b16 %v1442, %v1441
      %v1514 = vpack.c.b16 %v1444, %v1443
      %v1515 = vpack.c.b16 %v1446, %v1445
      %v1516 = vpack.c.b16 %v1448, %v1447
      %v1517 = vpack.c.b16 %v1450, %v1449
      %v1518 = vpack.c.b16 %v1452, %v1451
      %v1519 = vpack.c.b16 %v1454, %v1453
      %v1520 = vpack.c.b16 %v1456, %v1455
      %1585 = vmatprep.subr.bf16.mxu0 %v1072
      %1586 = vmatpush1.bf16.msra.mxu0 %v1071
      %1587 = vmatprep.subr.bf16.mxu0 %v1070
      %1588 = vmatpush1.bf16.msra.mxu0 %v1069
      %1589 = vmatprep.subr.bf16.mxu0 %v1068
      %1590 = vmatpush1.bf16.msra.mxu0 %v1067
      %1591 = vmatprep.subr.bf16.mxu0 %v1066
      %1592 = vmatpush1.bf16.msra.mxu0 %v1065
      %1593 = vmatprep.subr.bf16.mxu0 %v1064
      %1594 = vmatpush1.bf16.msra.mxu0 %v1063
      %1595 = vmatprep.subr.bf16.mxu0 %v1062
      %1596 = vmatpush1.bf16.msra.mxu0 %v1061
      %1597 = vmatprep.subr.bf16.mxu0 %v1060
      %1598 = vmatpush1.bf16.msra.mxu0 %v1059
      %1599 = vmatprep.subr.bf16.mxu0 %v1058
      %1600 = vmatpush1.bf16.msra.mxu0 %v1057
      %1601 = vmatprep.subr.bf16.mxu0 0
      %1602 = vmatpush2.bf16.msra.mxu0 0
      %1603 = vmatprep.subr.bf16.mxu0 0
      %1604 = vmatpush2.bf16.msra.mxu0 0
      %1605 = vmatprep.subr.bf16.mxu0 0
      %1606 = vmatpush2.bf16.msra.mxu0 0
      %1607 = vmatprep.subr.bf16.mxu0 0
      %1608 = vmatpush2.bf16.msra.mxu0 0
      %1609 = vmatprep.subr.bf16.mxu0 0
      %1610 = vmatpush2.bf16.msra.mxu0 0
      %1611 = vmatprep.subr.bf16.mxu0 0
      %1612 = vmatpush2.bf16.msra.mxu0 0
      %1613 = vmatprep.subr.bf16.mxu0 0
      %1614 = vmatpush2.bf16.msra.mxu0 0
      %1615 = vmatprep.subr.bf16.mxu0 0
      %1616 = vmatpush2.bf16.msra.mxu0 0
      %1617 = vmatprep.mubr.bf16.mxu0 0
      %1618 = vmatmul.mubr.bf16.gmra.mxu0 %v1457
      %v1619 = vpop.f32.mrf.mxu0
      %v1620 = vadd.f32 0.0, %v1619
      %v1621 = vpop.f32.mrf.mxu0
      %v1622 = vadd.f32 0.0, %v1621
      %v1623 = vpop.f32.mrf.mxu0
      %v1624 = vadd.f32 0.0, %v1623
      %v1625 = vpop.f32.mrf.mxu0
      %v1626 = vadd.f32 0.0, %v1625
      %1627 = vmatprep.mubr.bf16.mxu0 0
      %1628 = vmatmul.mubr.bf16.gmra.mxu0 %v1458
      %v1629 = vpop.f32.mrf.mxu0
      %v1630 = vadd.f32 0.0, %v1629
      %v1631 = vpop.f32.mrf.mxu0
      %v1632 = vadd.f32 0.0, %v1631
      %v1633 = vpop.f32.mrf.mxu0
      %v1634 = vadd.f32 0.0, %v1633
      %v1635 = vpop.f32.mrf.mxu0
      %v1636 = vadd.f32 0.0, %v1635
      %1637 = vmatprep.mubr.bf16.mxu0 0
      %1638 = vmatmul.mubr.bf16.gmra.mxu0 %v1459
      %v1639 = vpop.f32.mrf.mxu0
      %v1640 = vadd.f32 0.0, %v1639
      %v1641 = vpop.f32.mrf.mxu0
      %v1642 = vadd.f32 0.0, %v1641
      %v1643 = vpop.f32.mrf.mxu0
      %v1644 = vadd.f32 0.0, %v1643
      %v1645 = vpop.f32.mrf.mxu0
      %v1646 = vadd.f32 0.0, %v1645
      %1647 = vmatprep.mubr.bf16.mxu0 0
      %1648 = vmatmul.mubr.bf16.gmra.mxu0 %v1460
      %v1649 = vpop.f32.mrf.mxu0
      %v1650 = vadd.f32 0.0, %v1649
      %v1651 = vpop.f32.mrf.mxu0
      %v1652 = vadd.f32 0.0, %v1651
      %v1653 = vpop.f32.mrf.mxu0
      %v1654 = vadd.f32 0.0, %v1653
      %v1655 = vpop.f32.mrf.mxu0
      %v1656 = vadd.f32 0.0, %v1655
      %1657 = vmatprep.mubr.bf16.mxu0 0
      %1658 = vmatmul.mubr.bf16.gmra.mxu0 %v1461
      %v1659 = vpop.f32.mrf.mxu0
      %v1660 = vadd.f32 0.0, %v1659
      %v1661 = vpop.f32.mrf.mxu0
      %v1662 = vadd.f32 0.0, %v1661
      %v1663 = vpop.f32.mrf.mxu0
      %v1664 = vadd.f32 0.0, %v1663
      %v1665 = vpop.f32.mrf.mxu0
      %v1666 = vadd.f32 0.0, %v1665
      %1667 = vmatprep.mubr.bf16.mxu0 0
      %1668 = vmatmul.mubr.bf16.gmra.mxu0 %v1462
      %v1669 = vpop.f32.mrf.mxu0
      %v1670 = vadd.f32 0.0, %v1669
      %v1671 = vpop.f32.mrf.mxu0
      %v1672 = vadd.f32 0.0, %v1671
      %v1673 = vpop.f32.mrf.mxu0
      %v1674 = vadd.f32 0.0, %v1673
      %v1675 = vpop.f32.mrf.mxu0
      %v1676 = vadd.f32 0.0, %v1675
      %1677 = vmatprep.mubr.bf16.mxu0 0
      %1678 = vmatmul.mubr.bf16.gmra.mxu0 %v1463
      %v1679 = vpop.f32.mrf.mxu0
      %v1680 = vadd.f32 0.0, %v1679
      %v1681 = vpop.f32.mrf.mxu0
      %v1682 = vadd.f32 0.0, %v1681
      %v1683 = vpop.f32.mrf.mxu0
      %v1684 = vadd.f32 0.0, %v1683
      %v1685 = vpop.f32.mrf.mxu0
      %v1686 = vadd.f32 0.0, %v1685
      %1687 = vmatprep.mubr.bf16.mxu0 0
      %1688 = vmatmul.mubr.bf16.gmra.mxu0 %v1464
      %v1689 = vpop.f32.mrf.mxu0
      %v1690 = vadd.f32 0.0, %v1689
      %v1691 = vpop.f32.mrf.mxu0
      %v1692 = vadd.f32 0.0, %v1691
      %v1693 = vpop.f32.mrf.mxu0
      %v1694 = vadd.f32 0.0, %v1693
      %v1695 = vpop.f32.mrf.mxu0
      %v1696 = vadd.f32 0.0, %v1695
      %1697 = vmatprep.mubr.bf16.mxu0 0
      %1698 = vmatmul.mubr.bf16.gmra.mxu0 %v1465
      %v1699 = vpop.f32.mrf.mxu0
      %v1700 = vadd.f32 0.0, %v1699
      %v1701 = vpop.f32.mrf.mxu0
      %v1702 = vadd.f32 0.0, %v1701
      %v1703 = vpop.f32.mrf.mxu0
      %v1704 = vadd.f32 0.0, %v1703
      %v1705 = vpop.f32.mrf.mxu0
      %v1706 = vadd.f32 0.0, %v1705
      %1707 = vmatprep.mubr.bf16.mxu0 0
      %1708 = vmatmul.mubr.bf16.gmra.mxu0 %v1466
      %v1709 = vpop.f32.mrf.mxu0
      %v1710 = vadd.f32 0.0, %v1709
      %v1711 = vpop.f32.mrf.mxu0
      %v1712 = vadd.f32 0.0, %v1711
      %v1713 = vpop.f32.mrf.mxu0
      %v1714 = vadd.f32 0.0, %v1713
      %v1715 = vpop.f32.mrf.mxu0
      %v1716 = vadd.f32 0.0, %v1715
      %1717 = vmatprep.mubr.bf16.mxu0 0
      %1718 = vmatmul.mubr.bf16.gmra.mxu0 %v1467
      %v1719 = vpop.f32.mrf.mxu0
      %v1720 = vadd.f32 0.0, %v1719
      %v1721 = vpop.f32.mrf.mxu0
      %v1722 = vadd.f32 0.0, %v1721
      %v1723 = vpop.f32.mrf.mxu0
      %v1724 = vadd.f32 0.0, %v1723
      %v1725 = vpop.f32.mrf.mxu0
      %v1726 = vadd.f32 0.0, %v1725
      %1727 = vmatprep.mubr.bf16.mxu0 0
      %1728 = vmatmul.mubr.bf16.gmra.mxu0 %v1468
      %v1729 = vpop.f32.mrf.mxu0
      %v1730 = vadd.f32 0.0, %v1729
      %v1731 = vpop.f32.mrf.mxu0
      %v1732 = vadd.f32 0.0, %v1731
      %v1733 = vpop.f32.mrf.mxu0
      %v1734 = vadd.f32 0.0, %v1733
      %v1735 = vpop.f32.mrf.mxu0
      %v1736 = vadd.f32 0.0, %v1735
      %1737 = vmatprep.mubr.bf16.mxu0 0
      %1738 = vmatmul.mubr.bf16.gmra.mxu0 %v1469
      %v1739 = vpop.f32.mrf.mxu0
      %v1740 = vadd.f32 0.0, %v1739
      %v1741 = vpop.f32.mrf.mxu0
      %v1742 = vadd.f32 0.0, %v1741
      %v1743 = vpop.f32.mrf.mxu0
      %v1744 = vadd.f32 0.0, %v1743
      %v1745 = vpop.f32.mrf.mxu0
      %v1746 = vadd.f32 0.0, %v1745
      %1747 = vmatprep.mubr.bf16.mxu0 0
      %1748 = vmatmul.mubr.bf16.gmra.mxu0 %v1470
      %v1749 = vpop.f32.mrf.mxu0
      %v1750 = vadd.f32 0.0, %v1749
      %v1751 = vpop.f32.mrf.mxu0
      %v1752 = vadd.f32 0.0, %v1751
      %v1753 = vpop.f32.mrf.mxu0
      %v1754 = vadd.f32 0.0, %v1753
      %v1755 = vpop.f32.mrf.mxu0
      %v1756 = vadd.f32 0.0, %v1755
      %1757 = vmatprep.mubr.bf16.mxu0 0
      %1758 = vmatmul.mubr.bf16.gmra.mxu0 %v1471
      %v1759 = vpop.f32.mrf.mxu0
      %v1760 = vadd.f32 0.0, %v1759
      %v1761 = vpop.f32.mrf.mxu0
      %v1762 = vadd.f32 0.0, %v1761
      %v1763 = vpop.f32.mrf.mxu0
      %v1764 = vadd.f32 0.0, %v1763
      %v1765 = vpop.f32.mrf.mxu0
      %v1766 = vadd.f32 0.0, %v1765
      %1767 = vmatprep.mubr.bf16.mxu0 0
      %1768 = vmatmul.mubr.bf16.gmra.mxu0 %v1472
      %v1769 = vpop.f32.mrf.mxu0
      %v1770 = vadd.f32 0.0, %v1769
      %v1771 = vpop.f32.mrf.mxu0
      %v1772 = vadd.f32 0.0, %v1771
      %v1773 = vpop.f32.mrf.mxu0
      %v1774 = vadd.f32 0.0, %v1773
      %v1775 = vpop.f32.mrf.mxu0
      %v1776 = vadd.f32 0.0, %v1775
      %1777 = vmatprep.mubr.bf16.mxu0 0
      %1778 = vmatmul.mubr.bf16.gmra.mxu0 %v1473
      %v1779 = vpop.f32.mrf.mxu0
      %v1780 = vadd.f32 0.0, %v1779
      %v1781 = vpop.f32.mrf.mxu0
      %v1782 = vadd.f32 0.0, %v1781
      %v1783 = vpop.f32.mrf.mxu0
      %v1784 = vadd.f32 0.0, %v1783
      %v1785 = vpop.f32.mrf.mxu0
      %v1786 = vadd.f32 0.0, %v1785
      %1787 = vmatprep.mubr.bf16.mxu0 0
      %1788 = vmatmul.mubr.bf16.gmra.mxu0 %v1474
      %v1789 = vpop.f32.mrf.mxu0
      %v1790 = vadd.f32 0.0, %v1789
      %v1791 = vpop.f32.mrf.mxu0
      %v1792 = vadd.f32 0.0, %v1791
      %v1793 = vpop.f32.mrf.mxu0
      %v1794 = vadd.f32 0.0, %v1793
      %v1795 = vpop.f32.mrf.mxu0
      %v1796 = vadd.f32 0.0, %v1795
      %1797 = vmatprep.mubr.bf16.mxu0 0
      %1798 = vmatmul.mubr.bf16.gmra.mxu0 %v1475
      %v1799 = vpop.f32.mrf.mxu0
      %v1800 = vadd.f32 0.0, %v1799
      %v1801 = vpop.f32.mrf.mxu0
      %v1802 = vadd.f32 0.0, %v1801
      %v1803 = vpop.f32.mrf.mxu0
      %v1804 = vadd.f32 0.0, %v1803
      %v1805 = vpop.f32.mrf.mxu0
      %v1806 = vadd.f32 0.0, %v1805
      %1807 = vmatprep.mubr.bf16.mxu0 0
      %1808 = vmatmul.mubr.bf16.gmra.mxu0 %v1476
      %v1809 = vpop.f32.mrf.mxu0
      %v1810 = vadd.f32 0.0, %v1809
      %v1811 = vpop.f32.mrf.mxu0
      %v1812 = vadd.f32 0.0, %v1811
      %v1813 = vpop.f32.mrf.mxu0
      %v1814 = vadd.f32 0.0, %v1813
      %v1815 = vpop.f32.mrf.mxu0
      %v1816 = vadd.f32 0.0, %v1815
      %1817 = vmatprep.mubr.bf16.mxu0 0
      %1818 = vmatmul.mubr.bf16.gmra.mxu0 %v1477
      %v1819 = vpop.f32.mrf.mxu0
      %v1820 = vadd.f32 0.0, %v1819
      %v1821 = vpop.f32.mrf.mxu0
      %v1822 = vadd.f32 0.0, %v1821
      %v1823 = vpop.f32.mrf.mxu0
      %v1824 = vadd.f32 0.0, %v1823
      %v1825 = vpop.f32.mrf.mxu0
      %v1826 = vadd.f32 0.0, %v1825
      %1827 = vmatprep.mubr.bf16.mxu0 0
      %1828 = vmatmul.mubr.bf16.gmra.mxu0 %v1478
      %v1829 = vpop.f32.mrf.mxu0
      %v1830 = vadd.f32 0.0, %v1829
      %v1831 = vpop.f32.mrf.mxu0
      %v1832 = vadd.f32 0.0, %v1831
      %v1833 = vpop.f32.mrf.mxu0
      %v1834 = vadd.f32 0.0, %v1833
      %v1835 = vpop.f32.mrf.mxu0
      %v1836 = vadd.f32 0.0, %v1835
      %1837 = vmatprep.mubr.bf16.mxu0 0
      %1838 = vmatmul.mubr.bf16.gmra.mxu0 %v1479
      %v1839 = vpop.f32.mrf.mxu0
      %v1840 = vadd.f32 0.0, %v1839
      %v1841 = vpop.f32.mrf.mxu0
      %v1842 = vadd.f32 0.0, %v1841
      %v1843 = vpop.f32.mrf.mxu0
      %v1844 = vadd.f32 0.0, %v1843
      %v1845 = vpop.f32.mrf.mxu0
      %v1846 = vadd.f32 0.0, %v1845
      %1847 = vmatprep.mubr.bf16.mxu0 0
      %1848 = vmatmul.mubr.bf16.gmra.mxu0 %v1480
      %v1849 = vpop.f32.mrf.mxu0
      %v1850 = vadd.f32 0.0, %v1849
      %v1851 = vpop.f32.mrf.mxu0
      %v1852 = vadd.f32 0.0, %v1851
      %v1853 = vpop.f32.mrf.mxu0
      %v1854 = vadd.f32 0.0, %v1853
      %v1855 = vpop.f32.mrf.mxu0
      %v1856 = vadd.f32 0.0, %v1855
      %1857 = vmatprep.mubr.bf16.mxu0 0
      %1858 = vmatmul.mubr.bf16.gmra.mxu0 %v1481
      %v1859 = vpop.f32.mrf.mxu0
      %v1860 = vadd.f32 0.0, %v1859
      %v1861 = vpop.f32.mrf.mxu0
      %v1862 = vadd.f32 0.0, %v1861
      %v1863 = vpop.f32.mrf.mxu0
      %v1864 = vadd.f32 0.0, %v1863
      %v1865 = vpop.f32.mrf.mxu0
      %v1866 = vadd.f32 0.0, %v1865
      %1867 = vmatprep.mubr.bf16.mxu0 0
      %1868 = vmatmul.mubr.bf16.gmra.mxu0 %v1482
      %v1869 = vpop.f32.mrf.mxu0
      %v1870 = vadd.f32 0.0, %v1869
      %v1871 = vpop.f32.mrf.mxu0
      %v1872 = vadd.f32 0.0, %v1871
      %v1873 = vpop.f32.mrf.mxu0
      %v1874 = vadd.f32 0.0, %v1873
      %v1875 = vpop.f32.mrf.mxu0
      %v1876 = vadd.f32 0.0, %v1875
      %1877 = vmatprep.mubr.bf16.mxu0 0
      %1878 = vmatmul.mubr.bf16.gmra.mxu0 %v1483
      %v1879 = vpop.f32.mrf.mxu0
      %v1880 = vadd.f32 0.0, %v1879
      %v1881 = vpop.f32.mrf.mxu0
      %v1882 = vadd.f32 0.0, %v1881
      %v1883 = vpop.f32.mrf.mxu0
      %v1884 = vadd.f32 0.0, %v1883
      %v1885 = vpop.f32.mrf.mxu0
      %v1886 = vadd.f32 0.0, %v1885
      %1887 = vmatprep.mubr.bf16.mxu0 0
      %1888 = vmatmul.mubr.bf16.gmra.mxu0 %v1484
      %v1889 = vpop.f32.mrf.mxu0
      %v1890 = vadd.f32 0.0, %v1889
      %v1891 = vpop.f32.mrf.mxu0
      %v1892 = vadd.f32 0.0, %v1891
      %v1893 = vpop.f32.mrf.mxu0
      %v1894 = vadd.f32 0.0, %v1893
      %v1895 = vpop.f32.mrf.mxu0
      %v1896 = vadd.f32 0.0, %v1895
      %1897 = vmatprep.mubr.bf16.mxu0 0
      %1898 = vmatmul.mubr.bf16.gmra.mxu0 %v1485
      %v1899 = vpop.f32.mrf.mxu0
      %v1900 = vadd.f32 0.0, %v1899
      %v1901 = vpop.f32.mrf.mxu0
      %v1902 = vadd.f32 0.0, %v1901
      %v1903 = vpop.f32.mrf.mxu0
      %v1904 = vadd.f32 0.0, %v1903
      %v1905 = vpop.f32.mrf.mxu0
      %v1906 = vadd.f32 0.0, %v1905
      %1907 = vmatprep.mubr.bf16.mxu0 0
      %1908 = vmatmul.mubr.bf16.gmra.mxu0 %v1486
      %v1909 = vpop.f32.mrf.mxu0
      %v1910 = vadd.f32 0.0, %v1909
      %v1911 = vpop.f32.mrf.mxu0
      %v1912 = vadd.f32 0.0, %v1911
      %v1913 = vpop.f32.mrf.mxu0
      %v1914 = vadd.f32 0.0, %v1913
      %v1915 = vpop.f32.mrf.mxu0
      %v1916 = vadd.f32 0.0, %v1915
      %1917 = vmatprep.mubr.bf16.mxu0 0
      %1918 = vmatmul.mubr.bf16.gmra.mxu0 %v1487
      %v1919 = vpop.f32.mrf.mxu0
      %v1920 = vadd.f32 0.0, %v1919
      %v1921 = vpop.f32.mrf.mxu0
      %v1922 = vadd.f32 0.0, %v1921
      %v1923 = vpop.f32.mrf.mxu0
      %v1924 = vadd.f32 0.0, %v1923
      %v1925 = vpop.f32.mrf.mxu0
      %v1926 = vadd.f32 0.0, %v1925
      %1927 = vmatprep.mubr.bf16.mxu0 0
      %1928 = vmatmul.mubr.bf16.gmra.mxu0 %v1488
      %v1929 = vpop.f32.mrf.mxu0
      %v1930 = vadd.f32 0.0, %v1929
      %v1931 = vpop.f32.mrf.mxu0
      %v1932 = vadd.f32 0.0, %v1931
      %v1933 = vpop.f32.mrf.mxu0
      %v1934 = vadd.f32 0.0, %v1933
      %v1935 = vpop.f32.mrf.mxu0
      %v1936 = vadd.f32 0.0, %v1935
      %1937 = vmatprep.mubr.bf16.mxu0 0
      %1938 = vmatmul.mubr.bf16.gmra.mxu0 %v1489
      %v1939 = vpop.f32.mrf.mxu0
      %v1940 = vadd.f32 0.0, %v1939
      %v1941 = vpop.f32.mrf.mxu0
      %v1942 = vadd.f32 0.0, %v1941
      %v1943 = vpop.f32.mrf.mxu0
      %v1944 = vadd.f32 0.0, %v1943
      %v1945 = vpop.f32.mrf.mxu0
      %v1946 = vadd.f32 0.0, %v1945
      %1947 = vmatprep.mubr.bf16.mxu0 0
      %1948 = vmatmul.mubr.bf16.gmra.mxu0 %v1490
      %v1949 = vpop.f32.mrf.mxu0
      %v1950 = vadd.f32 0.0, %v1949
      %v1951 = vpop.f32.mrf.mxu0
      %v1952 = vadd.f32 0.0, %v1951
      %v1953 = vpop.f32.mrf.mxu0
      %v1954 = vadd.f32 0.0, %v1953
      %v1955 = vpop.f32.mrf.mxu0
      %v1956 = vadd.f32 0.0, %v1955
      %1957 = vmatprep.mubr.bf16.mxu0 0
      %1958 = vmatmul.mubr.bf16.gmra.mxu0 %v1491
      %v1959 = vpop.f32.mrf.mxu0
      %v1960 = vadd.f32 0.0, %v1959
      %v1961 = vpop.f32.mrf.mxu0
      %v1962 = vadd.f32 0.0, %v1961
      %v1963 = vpop.f32.mrf.mxu0
      %v1964 = vadd.f32 0.0, %v1963
      %v1965 = vpop.f32.mrf.mxu0
      %v1966 = vadd.f32 0.0, %v1965
      %1967 = vmatprep.mubr.bf16.mxu0 0
      %1968 = vmatmul.mubr.bf16.gmra.mxu0 %v1492
      %v1969 = vpop.f32.mrf.mxu0
      %v1970 = vadd.f32 0.0, %v1969
      %v1971 = vpop.f32.mrf.mxu0
      %v1972 = vadd.f32 0.0, %v1971
      %v1973 = vpop.f32.mrf.mxu0
      %v1974 = vadd.f32 0.0, %v1973
      %v1975 = vpop.f32.mrf.mxu0
      %v1976 = vadd.f32 0.0, %v1975
      %1977 = vmatprep.mubr.bf16.mxu0 0
      %1978 = vmatmul.mubr.bf16.gmra.mxu0 %v1493
      %v1979 = vpop.f32.mrf.mxu0
      %v1980 = vadd.f32 0.0, %v1979
      %v1981 = vpop.f32.mrf.mxu0
      %v1982 = vadd.f32 0.0, %v1981
      %v1983 = vpop.f32.mrf.mxu0
      %v1984 = vadd.f32 0.0, %v1983
      %v1985 = vpop.f32.mrf.mxu0
      %v1986 = vadd.f32 0.0, %v1985
      %1987 = vmatprep.mubr.bf16.mxu0 0
      %1988 = vmatmul.mubr.bf16.gmra.mxu0 %v1494
      %v1989 = vpop.f32.mrf.mxu0
      %v1990 = vadd.f32 0.0, %v1989
      %v1991 = vpop.f32.mrf.mxu0
      %v1992 = vadd.f32 0.0, %v1991
      %v1993 = vpop.f32.mrf.mxu0
      %v1994 = vadd.f32 0.0, %v1993
      %v1995 = vpop.f32.mrf.mxu0
      %v1996 = vadd.f32 0.0, %v1995
      %1997 = vmatprep.mubr.bf16.mxu0 0
      %1998 = vmatmul.mubr.bf16.gmra.mxu0 %v1495
      %v1999 = vpop.f32.mrf.mxu0
      %v2000 = vadd.f32 0.0, %v1999
      %v2001 = vpop.f32.mrf.mxu0
      %v2002 = vadd.f32 0.0, %v2001
      %v2003 = vpop.f32.mrf.mxu0
      %v2004 = vadd.f32 0.0, %v2003
      %v2005 = vpop.f32.mrf.mxu0
      %v2006 = vadd.f32 0.0, %v2005
      %2007 = vmatprep.mubr.bf16.mxu0 0
      %2008 = vmatmul.mubr.bf16.gmra.mxu0 %v1496
      %v2009 = vpop.f32.mrf.mxu0
      %v2010 = vadd.f32 0.0, %v2009
      %v2011 = vpop.f32.mrf.mxu0
      %v2012 = vadd.f32 0.0, %v2011
      %v2013 = vpop.f32.mrf.mxu0
      %v2014 = vadd.f32 0.0, %v2013
      %v2015 = vpop.f32.mrf.mxu0
      %v2016 = vadd.f32 0.0, %v2015
      %2017 = vmatprep.mubr.bf16.mxu0 0
      %2018 = vmatmul.mubr.bf16.gmra.mxu0 %v1497
      %v2019 = vpop.f32.mrf.mxu0
      %v2020 = vadd.f32 0.0, %v2019
      %v2021 = vpop.f32.mrf.mxu0
      %v2022 = vadd.f32 0.0, %v2021
      %v2023 = vpop.f32.mrf.mxu0
      %v2024 = vadd.f32 0.0, %v2023
      %v2025 = vpop.f32.mrf.mxu0
      %v2026 = vadd.f32 0.0, %v2025
      %2027 = vmatprep.mubr.bf16.mxu0 0
      %2028 = vmatmul.mubr.bf16.gmra.mxu0 %v1498
      %v2029 = vpop.f32.mrf.mxu0
      %v2030 = vadd.f32 0.0, %v2029
      %v2031 = vpop.f32.mrf.mxu0
      %v2032 = vadd.f32 0.0, %v2031
      %v2033 = vpop.f32.mrf.mxu0
      %v2034 = vadd.f32 0.0, %v2033
      %v2035 = vpop.f32.mrf.mxu0
      %v2036 = vadd.f32 0.0, %v2035
      %2037 = vmatprep.mubr.bf16.mxu0 0
      %2038 = vmatmul.mubr.bf16.gmra.mxu0 %v1499
      %v2039 = vpop.f32.mrf.mxu0
      %v2040 = vadd.f32 0.0, %v2039
      %v2041 = vpop.f32.mrf.mxu0
      %v2042 = vadd.f32 0.0, %v2041
      %v2043 = vpop.f32.mrf.mxu0
      %v2044 = vadd.f32 0.0, %v2043
      %v2045 = vpop.f32.mrf.mxu0
      %v2046 = vadd.f32 0.0, %v2045
      %2047 = vmatprep.mubr.bf16.mxu0 0
      %2048 = vmatmul.mubr.bf16.gmra.mxu0 %v1500
      %v2049 = vpop.f32.mrf.mxu0
      %v2050 = vadd.f32 0.0, %v2049
      %v2051 = vpop.f32.mrf.mxu0
      %v2052 = vadd.f32 0.0, %v2051
      %v2053 = vpop.f32.mrf.mxu0
      %v2054 = vadd.f32 0.0, %v2053
      %v2055 = vpop.f32.mrf.mxu0
      %v2056 = vadd.f32 0.0, %v2055
      %2057 = vmatprep.mubr.bf16.mxu0 0
      %2058 = vmatmul.mubr.bf16.gmra.mxu0 %v1501
      %v2059 = vpop.f32.mrf.mxu0
      %v2060 = vadd.f32 0.0, %v2059
      %v2061 = vpop.f32.mrf.mxu0
      %v2062 = vadd.f32 0.0, %v2061
      %v2063 = vpop.f32.mrf.mxu0
      %v2064 = vadd.f32 0.0, %v2063
      %v2065 = vpop.f32.mrf.mxu0
      %v2066 = vadd.f32 0.0, %v2065
      %2067 = vmatprep.mubr.bf16.mxu0 0
      %2068 = vmatmul.mubr.bf16.gmra.mxu0 %v1502
      %v2069 = vpop.f32.mrf.mxu0
      %v2070 = vadd.f32 0.0, %v2069
      %v2071 = vpop.f32.mrf.mxu0
      %v2072 = vadd.f32 0.0, %v2071
      %v2073 = vpop.f32.mrf.mxu0
      %v2074 = vadd.f32 0.0, %v2073
      %v2075 = vpop.f32.mrf.mxu0
      %v2076 = vadd.f32 0.0, %v2075
      %2077 = vmatprep.mubr.bf16.mxu0 0
      %2078 = vmatmul.mubr.bf16.gmra.mxu0 %v1503
      %v2079 = vpop.f32.mrf.mxu0
      %v2080 = vadd.f32 0.0, %v2079
      %v2081 = vpop.f32.mrf.mxu0
      %v2082 = vadd.f32 0.0, %v2081
      %v2083 = vpop.f32.mrf.mxu0
      %v2084 = vadd.f32 0.0, %v2083
      %v2085 = vpop.f32.mrf.mxu0
      %v2086 = vadd.f32 0.0, %v2085
      %2087 = vmatprep.mubr.bf16.mxu0 0
      %2088 = vmatmul.mubr.bf16.gmra.mxu0 %v1504
      %v2089 = vpop.f32.mrf.mxu0
      %v2090 = vadd.f32 0.0, %v2089
      %v2091 = vpop.f32.mrf.mxu0
      %v2092 = vadd.f32 0.0, %v2091
      %v2093 = vpop.f32.mrf.mxu0
      %v2094 = vadd.f32 0.0, %v2093
      %v2095 = vpop.f32.mrf.mxu0
      %v2096 = vadd.f32 0.0, %v2095
      %2097 = vmatprep.mubr.bf16.mxu0 0
      %2098 = vmatmul.mubr.bf16.gmra.mxu0 %v1505
      %v2099 = vpop.f32.mrf.mxu0
      %v2100 = vadd.f32 0.0, %v2099
      %v2101 = vpop.f32.mrf.mxu0
      %v2102 = vadd.f32 0.0, %v2101
      %v2103 = vpop.f32.mrf.mxu0
      %v2104 = vadd.f32 0.0, %v2103
      %v2105 = vpop.f32.mrf.mxu0
      %v2106 = vadd.f32 0.0, %v2105
      %2107 = vmatprep.mubr.bf16.mxu0 0
      %2108 = vmatmul.mubr.bf16.gmra.mxu0 %v1506
      %v2109 = vpop.f32.mrf.mxu0
      %v2110 = vadd.f32 0.0, %v2109
      %v2111 = vpop.f32.mrf.mxu0
      %v2112 = vadd.f32 0.0, %v2111
      %v2113 = vpop.f32.mrf.mxu0
      %v2114 = vadd.f32 0.0, %v2113
      %v2115 = vpop.f32.mrf.mxu0
      %v2116 = vadd.f32 0.0, %v2115
      %2117 = vmatprep.mubr.bf16.mxu0 0
      %2118 = vmatmul.mubr.bf16.gmra.mxu0 %v1507
      %v2119 = vpop.f32.mrf.mxu0
      %v2120 = vadd.f32 0.0, %v2119
      %v2121 = vpop.f32.mrf.mxu0
      %v2122 = vadd.f32 0.0, %v2121
      %v2123 = vpop.f32.mrf.mxu0
      %v2124 = vadd.f32 0.0, %v2123
      %v2125 = vpop.f32.mrf.mxu0
      %v2126 = vadd.f32 0.0, %v2125
      %2127 = vmatprep.mubr.bf16.mxu0 0
      %2128 = vmatmul.mubr.bf16.gmra.mxu0 %v1508
      %v2129 = vpop.f32.mrf.mxu0
      %v2130 = vadd.f32 0.0, %v2129
      %v2131 = vpop.f32.mrf.mxu0
      %v2132 = vadd.f32 0.0, %v2131
      %v2133 = vpop.f32.mrf.mxu0
      %v2134 = vadd.f32 0.0, %v2133
      %v2135 = vpop.f32.mrf.mxu0
      %v2136 = vadd.f32 0.0, %v2135
      %2137 = vmatprep.mubr.bf16.mxu0 0
      %2138 = vmatmul.mubr.bf16.gmra.mxu0 %v1509
      %v2139 = vpop.f32.mrf.mxu0
      %v2140 = vadd.f32 0.0, %v2139
      %v2141 = vpop.f32.mrf.mxu0
      %v2142 = vadd.f32 0.0, %v2141
      %v2143 = vpop.f32.mrf.mxu0
      %v2144 = vadd.f32 0.0, %v2143
      %v2145 = vpop.f32.mrf.mxu0
      %v2146 = vadd.f32 0.0, %v2145
      %2147 = vmatprep.mubr.bf16.mxu0 0
      %2148 = vmatmul.mubr.bf16.gmra.mxu0 %v1510
      %v2149 = vpop.f32.mrf.mxu0
      %v2150 = vadd.f32 0.0, %v2149
      %v2151 = vpop.f32.mrf.mxu0
      %v2152 = vadd.f32 0.0, %v2151
      %v2153 = vpop.f32.mrf.mxu0
      %v2154 = vadd.f32 0.0, %v2153
      %v2155 = vpop.f32.mrf.mxu0
      %v2156 = vadd.f32 0.0, %v2155
      %2157 = vmatprep.mubr.bf16.mxu0 0
      %2158 = vmatmul.mubr.bf16.gmra.mxu0 %v1511
      %v2159 = vpop.f32.mrf.mxu0
      %v2160 = vadd.f32 0.0, %v2159
      %v2161 = vpop.f32.mrf.mxu0
      %v2162 = vadd.f32 0.0, %v2161
      %v2163 = vpop.f32.mrf.mxu0
      %v2164 = vadd.f32 0.0, %v2163
      %v2165 = vpop.f32.mrf.mxu0
      %v2166 = vadd.f32 0.0, %v2165
      %2167 = vmatprep.mubr.bf16.mxu0 0
      %2168 = vmatmul.mubr.bf16.gmra.mxu0 %v1512
      %v2169 = vpop.f32.mrf.mxu0
      %v2170 = vadd.f32 0.0, %v2169
      %v2171 = vpop.f32.mrf.mxu0
      %v2172 = vadd.f32 0.0, %v2171
      %v2173 = vpop.f32.mrf.mxu0
      %v2174 = vadd.f32 0.0, %v2173
      %v2175 = vpop.f32.mrf.mxu0
      %v2176 = vadd.f32 0.0, %v2175
      %2177 = vmatprep.mubr.bf16.mxu0 0
      %2178 = vmatmul.mubr.bf16.gmra.mxu0 %v1513
      %v2179 = vpop.f32.mrf.mxu0
      %v2180 = vadd.f32 0.0, %v2179
      %v2181 = vpop.f32.mrf.mxu0
      %v2182 = vadd.f32 0.0, %v2181
      %v2183 = vpop.f32.mrf.mxu0
      %v2184 = vadd.f32 0.0, %v2183
      %v2185 = vpop.f32.mrf.mxu0
      %v2186 = vadd.f32 0.0, %v2185
      %2187 = vmatprep.mubr.bf16.mxu0 0
      %2188 = vmatmul.mubr.bf16.gmra.mxu0 %v1514
      %v2189 = vpop.f32.mrf.mxu0
      %v2190 = vadd.f32 0.0, %v2189
      %v2191 = vpop.f32.mrf.mxu0
      %v2192 = vadd.f32 0.0, %v2191
      %v2193 = vpop.f32.mrf.mxu0
      %v2194 = vadd.f32 0.0, %v2193
      %v2195 = vpop.f32.mrf.mxu0
      %v2196 = vadd.f32 0.0, %v2195
      %2197 = vmatprep.mubr.bf16.mxu0 0
      %2198 = vmatmul.mubr.bf16.gmra.mxu0 %v1515
      %v2199 = vpop.f32.mrf.mxu0
      %v2200 = vadd.f32 0.0, %v2199
      %v2201 = vpop.f32.mrf.mxu0
      %v2202 = vadd.f32 0.0, %v2201
      %v2203 = vpop.f32.mrf.mxu0
      %v2204 = vadd.f32 0.0, %v2203
      %v2205 = vpop.f32.mrf.mxu0
      %v2206 = vadd.f32 0.0, %v2205
      %2207 = vmatprep.mubr.bf16.mxu0 0
      %2208 = vmatmul.mubr.bf16.gmra.mxu0 %v1516
      %v2209 = vpop.f32.mrf.mxu0
      %v2210 = vadd.f32 0.0, %v2209
      %v2211 = vpop.f32.mrf.mxu0
      %v2212 = vadd.f32 0.0, %v2211
      %v2213 = vpop.f32.mrf.mxu0
      %v2214 = vadd.f32 0.0, %v2213
      %v2215 = vpop.f32.mrf.mxu0
      %v2216 = vadd.f32 0.0, %v2215
      %2217 = vmatprep.mubr.bf16.mxu0 0
      %2218 = vmatmul.mubr.bf16.gmra.mxu0 %v1517
      %v2219 = vpop.f32.mrf.mxu0
      %v2220 = vadd.f32 0.0, %v2219
      %v2221 = vpop.f32.mrf.mxu0
      %v2222 = vadd.f32 0.0, %v2221
      %v2223 = vpop.f32.mrf.mxu0
      %v2224 = vadd.f32 0.0, %v2223
      %v2225 = vpop.f32.mrf.mxu0
      %v2226 = vadd.f32 0.0, %v2225
      %2227 = vmatprep.mubr.bf16.mxu0 0
      %2228 = vmatmul.mubr.bf16.gmra.mxu0 %v1518
      %v2229 = vpop.f32.mrf.mxu0
      %v2230 = vadd.f32 0.0, %v2229
      %v2231 = vpop.f32.mrf.mxu0
      %v2232 = vadd.f32 0.0, %v2231
      %v2233 = vpop.f32.mrf.mxu0
      %v2234 = vadd.f32 0.0, %v2233
      %v2235 = vpop.f32.mrf.mxu0
      %v2236 = vadd.f32 0.0, %v2235
      %2237 = vmatprep.mubr.bf16.mxu0 0
      %2238 = vmatmul.mubr.bf16.gmra.mxu0 %v1519
      %v2239 = vpop.f32.mrf.mxu0
      %v2240 = vadd.f32 0.0, %v2239
      %v2241 = vpop.f32.mrf.mxu0
      %v2242 = vadd.f32 0.0, %v2241
      %v2243 = vpop.f32.mrf.mxu0
      %v2244 = vadd.f32 0.0, %v2243
      %v2245 = vpop.f32.mrf.mxu0
      %v2246 = vadd.f32 0.0, %v2245
      %2247 = vmatprep.mubr.bf16.mxu0 0
      %2248 = vmatmul.mubr.bf16.gmra.mxu0 %v1520
      %v2249 = vpop.f32.mrf.mxu0
      %v2250 = vadd.f32 0.0, %v2249
      %v2251 = vpop.f32.mrf.mxu0
      %v2252 = vadd.f32 0.0, %v2251
      %v2253 = vpop.f32.mrf.mxu0
      %v2254 = vadd.f32 0.0, %v2253
      %v2255 = vpop.f32.mrf.mxu0
      %v2256 = vadd.f32 0.0, %v2255
      %2257 = vdwg.mxu0
      %v2258 = vmax.f32 %v1620, %v1622
      %v2259 = vmax.f32 %v1624, %v1626
      %v2260 = vmax.f32 %v1630, %v1632
      %v2261 = vmax.f32 %v1634, %v1636
      %v2262 = vmax.f32 %v1640, %v1642
      %v2263 = vmax.f32 %v1644, %v1646
      %v2264 = vmax.f32 %v1650, %v1652
      %v2265 = vmax.f32 %v1654, %v1656
      %v2266 = vmax.f32 %v1660, %v1662
      %v2267 = vmax.f32 %v1664, %v1666
      %v2268 = vmax.f32 %v1670, %v1672
      %v2269 = vmax.f32 %v1674, %v1676
      %v2270 = vmax.f32 %v1680, %v1682
      %v2271 = vmax.f32 %v1684, %v1686
      %v2272 = vmax.f32 %v1690, %v1692
      %v2273 = vmax.f32 %v1694, %v1696
      %v2274 = vmax.f32 %v1700, %v1702
      %v2275 = vmax.f32 %v1704, %v1706
      %v2276 = vmax.f32 %v1710, %v1712
      %v2277 = vmax.f32 %v1714, %v1716
      %v2278 = vmax.f32 %v1720, %v1722
      %v2279 = vmax.f32 %v1724, %v1726
      %v2280 = vmax.f32 %v1730, %v1732
      %v2281 = vmax.f32 %v1734, %v1736
      %v2282 = vmax.f32 %v1740, %v1742
      %v2283 = vmax.f32 %v1744, %v1746
      %v2284 = vmax.f32 %v1750, %v1752
      %v2285 = vmax.f32 %v1754, %v1756
      %v2286 = vmax.f32 %v1760, %v1762
      %v2287 = vmax.f32 %v1764, %v1766
      %v2288 = vmax.f32 %v1770, %v1772
      %v2289 = vmax.f32 %v1774, %v1776
      %v2290 = vmax.f32 %v1780, %v1782
      %v2291 = vmax.f32 %v1784, %v1786
      %v2292 = vmax.f32 %v1790, %v1792
      %v2293 = vmax.f32 %v1794, %v1796
      %v2294 = vmax.f32 %v1800, %v1802
      %v2295 = vmax.f32 %v1804, %v1806
      %v2296 = vmax.f32 %v1810, %v1812
      %v2297 = vmax.f32 %v1814, %v1816
      %v2298 = vmax.f32 %v1820, %v1822
      %v2299 = vmax.f32 %v1824, %v1826
      %v2300 = vmax.f32 %v1830, %v1832
      %v2301 = vmax.f32 %v1834, %v1836
      %v2302 = vmax.f32 %v1840, %v1842
      %v2303 = vmax.f32 %v1844, %v1846
      %v2304 = vmax.f32 %v1850, %v1852
      %v2305 = vmax.f32 %v1854, %v1856
      %v2306 = vmax.f32 %v1860, %v1862
      %v2307 = vmax.f32 %v1864, %v1866
      %v2308 = vmax.f32 %v1870, %v1872
      %v2309 = vmax.f32 %v1874, %v1876
      %v2310 = vmax.f32 %v1880, %v1882
      %v2311 = vmax.f32 %v1884, %v1886
      %v2312 = vmax.f32 %v1890, %v1892
      %v2313 = vmax.f32 %v1894, %v1896
      %v2314 = vmax.f32 %v1900, %v1902
      %v2315 = vmax.f32 %v1904, %v1906
      %v2316 = vmax.f32 %v1910, %v1912
      %v2317 = vmax.f32 %v1914, %v1916
      %v2318 = vmax.f32 %v1920, %v1922
      %v2319 = vmax.f32 %v1924, %v1926
      %v2320 = vmax.f32 %v1930, %v1932
      %v2321 = vmax.f32 %v1934, %v1936
      %v2322 = vmax.f32 %v1940, %v1942
      %v2323 = vmax.f32 %v1944, %v1946
      %v2324 = vmax.f32 %v1950, %v1952
      %v2325 = vmax.f32 %v1954, %v1956
      %v2326 = vmax.f32 %v1960, %v1962
      %v2327 = vmax.f32 %v1964, %v1966
      %v2328 = vmax.f32 %v1970, %v1972
      %v2329 = vmax.f32 %v1974, %v1976
      %v2330 = vmax.f32 %v1980, %v1982
      %v2331 = vmax.f32 %v1984, %v1986
      %v2332 = vmax.f32 %v1990, %v1992
      %v2333 = vmax.f32 %v1994, %v1996
      %v2334 = vmax.f32 %v2000, %v2002
      %v2335 = vmax.f32 %v2004, %v2006
      %v2336 = vmax.f32 %v2010, %v2012
      %v2337 = vmax.f32 %v2014, %v2016
      %v2338 = vmax.f32 %v2020, %v2022
      %v2339 = vmax.f32 %v2024, %v2026
      %v2340 = vmax.f32 %v2030, %v2032
      %v2341 = vmax.f32 %v2034, %v2036
      %v2342 = vmax.f32 %v2040, %v2042
      %v2343 = vmax.f32 %v2044, %v2046
      %v2344 = vmax.f32 %v2050, %v2052
      %v2345 = vmax.f32 %v2054, %v2056
      %v2346 = vmax.f32 %v2060, %v2062
      %v2347 = vmax.f32 %v2064, %v2066
      %v2348 = vmax.f32 %v2070, %v2072
      %v2349 = vmax.f32 %v2074, %v2076
      %v2350 = vmax.f32 %v2080, %v2082
      %v2351 = vmax.f32 %v2084, %v2086
      %v2352 = vmax.f32 %v2090, %v2092
      %v2353 = vmax.f32 %v2094, %v2096
      %v2354 = vmax.f32 %v2100, %v2102
      %v2355 = vmax.f32 %v2104, %v2106
      %v2356 = vmax.f32 %v2110, %v2112
      %v2357 = vmax.f32 %v2114, %v2116
      %v2358 = vmax.f32 %v2120, %v2122
      %v2359 = vmax.f32 %v2124, %v2126
      %v2360 = vmax.f32 %v2130, %v2132
      %v2361 = vmax.f32 %v2134, %v2136
      %v2362 = vmax.f32 %v2140, %v2142
      %v2363 = vmax.f32 %v2144, %v2146
      %v2364 = vmax.f32 %v2150, %v2152
      %v2365 = vmax.f32 %v2154, %v2156
      %v2366 = vmax.f32 %v2160, %v2162
      %v2367 = vmax.f32 %v2164, %v2166
      %v2368 = vmax.f32 %v2170, %v2172
      %v2369 = vmax.f32 %v2174, %v2176
      %v2370 = vmax.f32 %v2180, %v2182
      %v2371 = vmax.f32 %v2184, %v2186
      %v2372 = vmax.f32 %v2190, %v2192
      %v2373 = vmax.f32 %v2194, %v2196
      %v2374 = vmax.f32 %v2200, %v2202
      %v2375 = vmax.f32 %v2204, %v2206
      %v2376 = vmax.f32 %v2210, %v2212
      %v2377 = vmax.f32 %v2214, %v2216
      %v2378 = vmax.f32 %v2220, %v2222
      %v2379 = vmax.f32 %v2224, %v2226
      %v2380 = vmax.f32 %v2230, %v2232
      %v2381 = vmax.f32 %v2234, %v2236
      %v2382 = vmax.f32 %v2240, %v2242
      %v2383 = vmax.f32 %v2244, %v2246
      %v2384 = vmax.f32 %v2250, %v2252
      %v2385 = vmax.f32 %v2254, %v2256
      %p2386 = scmp.eq.s32.totalorder %s23, 0
      // Predicated region
      $region49: #{tpu_custom_call.1} parent=47 // pred_check
        %p2387 = pneg %p2386
      $region50: #{tpu_custom_call.1} parent=47 // pred_check_branch
        %2389 = sbr.rel (%p2387) target = $region52
      $region51: #{tpu_custom_call.1} parent=47 // pred_region
        %2390 = vst [vmem:[#allocation2] sm:$0xff] %v2258
        %2391 = vst [vmem:[#allocation2 + $0x8] sm:$0xff] %v2259
        %2392 = vst [vmem:[#allocation2 + $0x10] sm:$0xff] %v2260
        %2393 = vst [vmem:[#allocation2 + $0x18] sm:$0xff] %v2261
        %2394 = vst [vmem:[#allocation2 + $0x20] sm:$0xff] %v2262
        %2395 = vst [vmem:[#allocation2 + $0x28] sm:$0xff] %v2263
        %2396 = vst [vmem:[#allocation2 + $0x30] sm:$0xff] %v2264
        %2397 = vst [vmem:[#allocation2 + $0x38] sm:$0xff] %v2265
        %2398 = vst [vmem:[#allocation2 + $0x40] sm:$0xff] %v2266
        %2399 = vst [vmem:[#allocation2 + $0x48] sm:$0xff] %v2267
        %2400 = vst [vmem:[#allocation2 + $0x50] sm:$0xff] %v2268
        %2401 = vst [vmem:[#allocation2 + $0x58] sm:$0xff] %v2269
        %2402 = vst [vmem:[#allocation2 + $0x60] sm:$0xff] %v2270
        %2403 = vst [vmem:[#allocation2 + $0x68] sm:$0xff] %v2271
        %2404 = vst [vmem:[#allocation2 + $0x70] sm:$0xff] %v2272
        %2405 = vst [vmem:[#allocation2 + $0x78] sm:$0xff] %v2273
        %2406 = vst [vmem:[#allocation2 + $0x80] sm:$0xff] %v2274
        %2407 = vst [vmem:[#allocation2 + $0x88] sm:$0xff] %v2275
        %2408 = vst [vmem:[#allocation2 + $0x90] sm:$0xff] %v2276
        %2409 = vst [vmem:[#allocation2 + $0x98] sm:$0xff] %v2277
        %2410 = vst [vmem:[#allocation2 + $0xa0] sm:$0xff] %v2278
        %2411 = vst [vmem:[#allocation2 + $0xa8] sm:$0xff] %v2279
        %2412 = vst [vmem:[#allocation2 + $0xb0] sm:$0xff] %v2280
        %2413 = vst [vmem:[#allocation2 + $0xb8] sm:$0xff] %v2281
        %2414 = vst [vmem:[#allocation2 + $0xc0] sm:$0xff] %v2282
        %2415 = vst [vmem:[#allocation2 + $0xc8] sm:$0xff] %v2283
        %2416 = vst [vmem:[#allocation2 + $0xd0] sm:$0xff] %v2284
        %2417 = vst [vmem:[#allocation2 + $0xd8] sm:$0xff] %v2285
        %2418 = vst [vmem:[#allocation2 + $0xe0] sm:$0xff] %v2286
        %2419 = vst [vmem:[#allocation2 + $0xe8] sm:$0xff] %v2287
        %2420 = vst [vmem:[#allocation2 + $0xf0] sm:$0xff] %v2288
        %2421 = vst [vmem:[#allocation2 + $0xf8] sm:$0xff] %v2289
        %2422 = vst [vmem:[#allocation2 + $0x100] sm:$0xff] %v2290
        %2423 = vst [vmem:[#allocation2 + $0x108] sm:$0xff] %v2291
        %2424 = vst [vmem:[#allocation2 + $0x110] sm:$0xff] %v2292
        %2425 = vst [vmem:[#allocation2 + $0x118] sm:$0xff] %v2293
        %2426 = vst [vmem:[#allocation2 + $0x120] sm:$0xff] %v2294
        %2427 = vst [vmem:[#allocation2 + $0x128] sm:$0xff] %v2295
        %2428 = vst [vmem:[#allocation2 + $0x130] sm:$0xff] %v2296
        %2429 = vst [vmem:[#allocation2 + $0x138] sm:$0xff] %v2297
        %2430 = vst [vmem:[#allocation2 + $0x140] sm:$0xff] %v2298
        %2431 = vst [vmem:[#allocation2 + $0x148] sm:$0xff] %v2299
        %2432 = vst [vmem:[#allocation2 + $0x150] sm:$0xff] %v2300
        %2433 = vst [vmem:[#allocation2 + $0x158] sm:$0xff] %v2301
        %2434 = vst [vmem:[#allocation2 + $0x160] sm:$0xff] %v2302
        %2435 = vst [vmem:[#allocation2 + $0x168] sm:$0xff] %v2303
        %2436 = vst [vmem:[#allocation2 + $0x170] sm:$0xff] %v2304
        %2437 = vst [vmem:[#allocation2 + $0x178] sm:$0xff] %v2305
        %2438 = vst [vmem:[#allocation2 + $0x180] sm:$0xff] %v2306
        %2439 = vst [vmem:[#allocation2 + $0x188] sm:$0xff] %v2307
        %2440 = vst [vmem:[#allocation2 + $0x190] sm:$0xff] %v2308
        %2441 = vst [vmem:[#allocation2 + $0x198] sm:$0xff] %v2309
        %2442 = vst [vmem:[#allocation2 + $0x1a0] sm:$0xff] %v2310
        %2443 = vst [vmem:[#allocation2 + $0x1a8] sm:$0xff] %v2311
        %2444 = vst [vmem:[#allocation2 + $0x1b0] sm:$0xff] %v2312
        %2445 = vst [vmem:[#allocation2 + $0x1b8] sm:$0xff] %v2313
        %2446 = vst [vmem:[#allocation2 + $0x1c0] sm:$0xff] %v2314
        %2447 = vst [vmem:[#allocation2 + $0x1c8] sm:$0xff] %v2315
        %2448 = vst [vmem:[#allocation2 + $0x1d0] sm:$0xff] %v2316
        %2449 = vst [vmem:[#allocation2 + $0x1d8] sm:$0xff] %v2317
        %2450 = vst [vmem:[#allocation2 + $0x1e0] sm:$0xff] %v2318
        %2451 = vst [vmem:[#allocation2 + $0x1e8] sm:$0xff] %v2319
        %2452 = vst [vmem:[#allocation2 + $0x1f0] sm:$0xff] %v2320
        %2453 = vst [vmem:[#allocation2 + $0x1f8] sm:$0xff] %v2321
        %2454 = vst [vmem:[#allocation2 + $0x200] sm:$0xff] %v2322
        %2455 = vst [vmem:[#allocation2 + $0x208] sm:$0xff] %v2323
        %2456 = vst [vmem:[#allocation2 + $0x210] sm:$0xff] %v2324
        %2457 = vst [vmem:[#allocation2 + $0x218] sm:$0xff] %v2325
        %2458 = vst [vmem:[#allocation2 + $0x220] sm:$0xff] %v2326
        %2459 = vst [vmem:[#allocation2 + $0x228] sm:$0xff] %v2327
        %2460 = vst [vmem:[#allocation2 + $0x230] sm:$0xff] %v2328
        %2461 = vst [vmem:[#allocation2 + $0x238] sm:$0xff] %v2329
        %2462 = vst [vmem:[#allocation2 + $0x240] sm:$0xff] %v2330
        %2463 = vst [vmem:[#allocation2 + $0x248] sm:$0xff] %v2331
        %2464 = vst [vmem:[#allocation2 + $0x250] sm:$0xff] %v2332
        %2465 = vst [vmem:[#allocation2 + $0x258] sm:$0xff] %v2333
        %2466 = vst [vmem:[#allocation2 + $0x260] sm:$0xff] %v2334
        %2467 = vst [vmem:[#allocation2 + $0x268] sm:$0xff] %v2335
        %2468 = vst [vmem:[#allocation2 + $0x270] sm:$0xff] %v2336
        %2469 = vst [vmem:[#allocation2 + $0x278] sm:$0xff] %v2337
        %2470 = vst [vmem:[#allocation2 + $0x280] sm:$0xff] %v2338
        %2471 = vst [vmem:[#allocation2 + $0x288] sm:$0xff] %v2339
        %2472 = vst [vmem:[#allocation2 + $0x290] sm:$0xff] %v2340
        %2473 = vst [vmem:[#allocation2 + $0x298] sm:$0xff] %v2341
        %2474 = vst [vmem:[#allocation2 + $0x2a0] sm:$0xff] %v2342
        %2475 = vst [vmem:[#allocation2 + $0x2a8] sm:$0xff] %v2343
        %2476 = vst [vmem:[#allocation2 + $0x2b0] sm:$0xff] %v2344
        %2477 = vst [vmem:[#allocation2 + $0x2b8] sm:$0xff] %v2345
        %2478 = vst [vmem:[#allocation2 + $0x2c0] sm:$0xff] %v2346
        %2479 = vst [vmem:[#allocation2 + $0x2c8] sm:$0xff] %v2347
        %2480 = vst [vmem:[#allocation2 + $0x2d0] sm:$0xff] %v2348
        %2481 = vst [vmem:[#allocation2 + $0x2d8] sm:$0xff] %v2349
        %2482 = vst [vmem:[#allocation2 + $0x2e0] sm:$0xff] %v2350
        %2483 = vst [vmem:[#allocation2 + $0x2e8] sm:$0xff] %v2351
        %2484 = vst [vmem:[#allocation2 + $0x2f0] sm:$0xff] %v2352
        %2485 = vst [vmem:[#allocation2 + $0x2f8] sm:$0xff] %v2353
        %2486 = vst [vmem:[#allocation2 + $0x300] sm:$0xff] %v2354
        %2487 = vst [vmem:[#allocation2 + $0x308] sm:$0xff] %v2355
        %2488 = vst [vmem:[#allocation2 + $0x310] sm:$0xff] %v2356
        %2489 = vst [vmem:[#allocation2 + $0x318] sm:$0xff] %v2357
        %2490 = vst [vmem:[#allocation2 + $0x320] sm:$0xff] %v2358
        %2491 = vst [vmem:[#allocation2 + $0x328] sm:$0xff] %v2359
        %2492 = vst [vmem:[#allocation2 + $0x330] sm:$0xff] %v2360
        %2493 = vst [vmem:[#allocation2 + $0x338] sm:$0xff] %v2361
        %2494 = vst [vmem:[#allocation2 + $0x340] sm:$0xff] %v2362
        %2495 = vst [vmem:[#allocation2 + $0x348] sm:$0xff] %v2363
        %2496 = vst [vmem:[#allocation2 + $0x350] sm:$0xff] %v2364
        %2497 = vst [vmem:[#allocation2 + $0x358] sm:$0xff] %v2365
        %2498 = vst [vmem:[#allocation2 + $0x360] sm:$0xff] %v2366
        %2499 = vst [vmem:[#allocation2 + $0x368] sm:$0xff] %v2367
        %2500 = vst [vmem:[#allocation2 + $0x370] sm:$0xff] %v2368
        %2501 = vst [vmem:[#allocation2 + $0x378] sm:$0xff] %v2369
        %2502 = vst [vmem:[#allocation2 + $0x380] sm:$0xff] %v2370
        %2503 = vst [vmem:[#allocation2 + $0x388] sm:$0xff] %v2371
        %2504 = vst [vmem:[#allocation2 + $0x390] sm:$0xff] %v2372
        %2505 = vst [vmem:[#allocation2 + $0x398] sm:$0xff] %v2373
        %2506 = vst [vmem:[#allocation2 + $0x3a0] sm:$0xff] %v2374
        %2507 = vst [vmem:[#allocation2 + $0x3a8] sm:$0xff] %v2375
        %2508 = vst [vmem:[#allocation2 + $0x3b0] sm:$0xff] %v2376
        %2509 = vst [vmem:[#allocation2 + $0x3b8] sm:$0xff] %v2377
        %2510 = vst [vmem:[#allocation2 + $0x3c0] sm:$0xff] %v2378
        %2511 = vst [vmem:[#allocation2 + $0x3c8] sm:$0xff] %v2379
        %2512 = vst [vmem:[#allocation2 + $0x3d0] sm:$0xff] %v2380
        %2513 = vst [vmem:[#allocation2 + $0x3d8] sm:$0xff] %v2381
        %2514 = vst [vmem:[#allocation2 + $0x3e0] sm:$0xff] %v2382
        %2515 = vst [vmem:[#allocation2 + $0x3e8] sm:$0xff] %v2383
        %2516 = vst [vmem:[#allocation2 + $0x3f0] sm:$0xff] %v2384
        %2517 = vst [vmem:[#allocation2 + $0x3f8] sm:$0xff] %v2385
      $region52: #{tpu_custom_call.1} parent=47 // pred_fallthru
        _
      %p2518 = scmp.gt.s32.totalorder %s23, 0
      // Predicated region
      $region53: #{tpu_custom_call.1} parent=47 // pred_check
        %p2519 = pneg %p2518
      $region54: #{tpu_custom_call.1} parent=47 // pred_check_branch
        %2521 = sbr.rel (%p2519) target = $region56
      $region55: #{tpu_custom_call.1} parent=47 // pred_region
        %v2522 = vld [vmem:[#allocation2] sm:$0xff]
        %v2523 = vld [vmem:[#allocation2 + $0x8] sm:$0xff]
        %v2524 = vld [vmem:[#allocation2 + $0x10] sm:$0xff]
        %v2525 = vld [vmem:[#allocation2 + $0x18] sm:$0xff]
        %v2526 = vld [vmem:[#allocation2 + $0x20] sm:$0xff]
        %v2527 = vld [vmem:[#allocation2 + $0x28] sm:$0xff]
        %v2528 = vld [vmem:[#allocation2 + $0x30] sm:$0xff]
        %v2529 = vld [vmem:[#allocation2 + $0x38] sm:$0xff]
        %v2530 = vld [vmem:[#allocation2 + $0x40] sm:$0xff]
        %v2531 = vld [vmem:[#allocation2 + $0x48] sm:$0xff]
        %v2532 = vld [vmem:[#allocation2 + $0x50] sm:$0xff]
        %v2533 = vld [vmem:[#allocation2 + $0x58] sm:$0xff]
        %v2534 = vld [vmem:[#allocation2 + $0x60] sm:$0xff]
        %v2535 = vld [vmem:[#allocation2 + $0x68] sm:$0xff]
        %v2536 = vld [vmem:[#allocation2 + $0x70] sm:$0xff]
        %v2537 = vld [vmem:[#allocation2 + $0x78] sm:$0xff]
        %v2538 = vld [vmem:[#allocation2 + $0x80] sm:$0xff]
        %v2539 = vld [vmem:[#allocation2 + $0x88] sm:$0xff]
        %v2540 = vld [vmem:[#allocation2 + $0x90] sm:$0xff]
        %v2541 = vld [vmem:[#allocation2 + $0x98] sm:$0xff]
        %v2542 = vld [vmem:[#allocation2 + $0xa0] sm:$0xff]
        %v2543 = vld [vmem:[#allocation2 + $0xa8] sm:$0xff]
        %v2544 = vld [vmem:[#allocation2 + $0xb0] sm:$0xff]
        %v2545 = vld [vmem:[#allocation2 + $0xb8] sm:$0xff]
        %v2546 = vld [vmem:[#allocation2 + $0xc0] sm:$0xff]
        %v2547 = vld [vmem:[#allocation2 + $0xc8] sm:$0xff]
        %v2548 = vld [vmem:[#allocation2 + $0xd0] sm:$0xff]
        %v2549 = vld [vmem:[#allocation2 + $0xd8] sm:$0xff]
        %v2550 = vld [vmem:[#allocation2 + $0xe0] sm:$0xff]
        %v2551 = vld [vmem:[#allocation2 + $0xe8] sm:$0xff]
        %v2552 = vld [vmem:[#allocation2 + $0xf0] sm:$0xff]
        %v2553 = vld [vmem:[#allocation2 + $0xf8] sm:$0xff]
        %v2554 = vld [vmem:[#allocation2 + $0x100] sm:$0xff]
        %v2555 = vld [vmem:[#allocation2 + $0x108] sm:$0xff]
        %v2556 = vld [vmem:[#allocation2 + $0x110] sm:$0xff]
        %v2557 = vld [vmem:[#allocation2 + $0x118] sm:$0xff]
        %v2558 = vld [vmem:[#allocation2 + $0x120] sm:$0xff]
        %v2559 = vld [vmem:[#allocation2 + $0x128] sm:$0xff]
        %v2560 = vld [vmem:[#allocation2 + $0x130] sm:$0xff]
        %v2561 = vld [vmem:[#allocation2 + $0x138] sm:$0xff]
        %v2562 = vld [vmem:[#allocation2 + $0x140] sm:$0xff]
        %v2563 = vld [vmem:[#allocation2 + $0x148] sm:$0xff]
        %v2564 = vld [vmem:[#allocation2 + $0x150] sm:$0xff]
        %v2565 = vld [vmem:[#allocation2 + $0x158] sm:$0xff]
        %v2566 = vld [vmem:[#allocation2 + $0x160] sm:$0xff]
        %v2567 = vld [vmem:[#allocation2 + $0x168] sm:$0xff]
        %v2568 = vld [vmem:[#allocation2 + $0x170] sm:$0xff]
        %v2569 = vld [vmem:[#allocation2 + $0x178] sm:$0xff]
        %v2570 = vld [vmem:[#allocation2 + $0x180] sm:$0xff]
        %v2571 = vld [vmem:[#allocation2 + $0x188] sm:$0xff]
        %v2572 = vld [vmem:[#allocation2 + $0x190] sm:$0xff]
        %v2573 = vld [vmem:[#allocation2 + $0x198] sm:$0xff]
        %v2574 = vld [vmem:[#allocation2 + $0x1a0] sm:$0xff]
        %v2575 = vld [vmem:[#allocation2 + $0x1a8] sm:$0xff]
        %v2576 = vld [vmem:[#allocation2 + $0x1b0] sm:$0xff]
        %v2577 = vld [vmem:[#allocation2 + $0x1b8] sm:$0xff]
        %v2578 = vld [vmem:[#allocation2 + $0x1c0] sm:$0xff]
        %v2579 = vld [vmem:[#allocation2 + $0x1c8] sm:$0xff]
        %v2580 = vld [vmem:[#allocation2 + $0x1d0] sm:$0xff]
        %v2581 = vld [vmem:[#allocation2 + $0x1d8] sm:$0xff]
        %v2582 = vld [vmem:[#allocation2 + $0x1e0] sm:$0xff]
        %v2583 = vld [vmem:[#allocation2 + $0x1e8] sm:$0xff]
        %v2584 = vld [vmem:[#allocation2 + $0x1f0] sm:$0xff]
        %v2585 = vld [vmem:[#allocation2 + $0x1f8] sm:$0xff]
        %v2586 = vld [vmem:[#allocation2 + $0x200] sm:$0xff]
        %v2587 = vld [vmem:[#allocation2 + $0x208] sm:$0xff]
        %v2588 = vld [vmem:[#allocation2 + $0x210] sm:$0xff]
        %v2589 = vld [vmem:[#allocation2 + $0x218] sm:$0xff]
        %v2590 = vld [vmem:[#allocation2 + $0x220] sm:$0xff]
        %v2591 = vld [vmem:[#allocation2 + $0x228] sm:$0xff]
        %v2592 = vld [vmem:[#allocation2 + $0x230] sm:$0xff]
        %v2593 = vld [vmem:[#allocation2 + $0x238] sm:$0xff]
        %v2594 = vld [vmem:[#allocation2 + $0x240] sm:$0xff]
        %v2595 = vld [vmem:[#allocation2 + $0x248] sm:$0xff]
        %v2596 = vld [vmem:[#allocation2 + $0x250] sm:$0xff]
        %v2597 = vld [vmem:[#allocation2 + $0x258] sm:$0xff]
        %v2598 = vld [vmem:[#allocation2 + $0x260] sm:$0xff]
        %v2599 = vld [vmem:[#allocation2 + $0x268] sm:$0xff]
        %v2600 = vld [vmem:[#allocation2 + $0x270] sm:$0xff]
        %v2601 = vld [vmem:[#allocation2 + $0x278] sm:$0xff]
        %v2602 = vld [vmem:[#allocation2 + $0x280] sm:$0xff]
        %v2603 = vld [vmem:[#allocation2 + $0x288] sm:$0xff]
        %v2604 = vld [vmem:[#allocation2 + $0x290] sm:$0xff]
        %v2605 = vld [vmem:[#allocation2 + $0x298] sm:$0xff]
        %v2606 = vld [vmem:[#allocation2 + $0x2a0] sm:$0xff]
        %v2607 = vld [vmem:[#allocation2 + $0x2a8] sm:$0xff]
        %v2608 = vld [vmem:[#allocation2 + $0x2b0] sm:$0xff]
        %v2609 = vld [vmem:[#allocation2 + $0x2b8] sm:$0xff]
        %v2610 = vld [vmem:[#allocation2 + $0x2c0] sm:$0xff]
        %v2611 = vld [vmem:[#allocation2 + $0x2c8] sm:$0xff]
        %v2612 = vld [vmem:[#allocation2 + $0x2d0] sm:$0xff]
        %v2613 = vld [vmem:[#allocation2 + $0x2d8] sm:$0xff]
        %v2614 = vld [vmem:[#allocation2 + $0x2e0] sm:$0xff]
        %v2615 = vld [vmem:[#allocation2 + $0x2e8] sm:$0xff]
        %v2616 = vld [vmem:[#allocation2 + $0x2f0] sm:$0xff]
        %v2617 = vld [vmem:[#allocation2 + $0x2f8] sm:$0xff]
        %v2618 = vld [vmem:[#allocation2 + $0x300] sm:$0xff]
        %v2619 = vld [vmem:[#allocation2 + $0x308] sm:$0xff]
        %v2620 = vld [vmem:[#allocation2 + $0x310] sm:$0xff]
        %v2621 = vld [vmem:[#allocation2 + $0x318] sm:$0xff]
        %v2622 = vld [vmem:[#allocation2 + $0x320] sm:$0xff]
        %v2623 = vld [vmem:[#allocation2 + $0x328] sm:$0xff]
        %v2624 = vld [vmem:[#allocation2 + $0x330] sm:$0xff]
        %v2625 = vld [vmem:[#allocation2 + $0x338] sm:$0xff]
        %v2626 = vld [vmem:[#allocation2 + $0x340] sm:$0xff]
        %v2627 = vld [vmem:[#allocation2 + $0x348] sm:$0xff]
        %v2628 = vld [vmem:[#allocation2 + $0x350] sm:$0xff]
        %v2629 = vld [vmem:[#allocation2 + $0x358] sm:$0xff]
        %v2630 = vld [vmem:[#allocation2 + $0x360] sm:$0xff]
        %v2631 = vld [vmem:[#allocation2 + $0x368] sm:$0xff]
        %v2632 = vld [vmem:[#allocation2 + $0x370] sm:$0xff]
        %v2633 = vld [vmem:[#allocation2 + $0x378] sm:$0xff]
        %v2634 = vld [vmem:[#allocation2 + $0x380] sm:$0xff]
        %v2635 = vld [vmem:[#allocation2 + $0x388] sm:$0xff]
        %v2636 = vld [vmem:[#allocation2 + $0x390] sm:$0xff]
        %v2637 = vld [vmem:[#allocation2 + $0x398] sm:$0xff]
        %v2638 = vld [vmem:[#allocation2 + $0x3a0] sm:$0xff]
        %v2639 = vld [vmem:[#allocation2 + $0x3a8] sm:$0xff]
        %v2640 = vld [vmem:[#allocation2 + $0x3b0] sm:$0xff]
        %v2641 = vld [vmem:[#allocation2 + $0x3b8] sm:$0xff]
        %v2642 = vld [vmem:[#allocation2 + $0x3c0] sm:$0xff]
        %v2643 = vld [vmem:[#allocation2 + $0x3c8] sm:$0xff]
        %v2644 = vld [vmem:[#allocation2 + $0x3d0] sm:$0xff]
        %v2645 = vld [vmem:[#allocation2 + $0x3d8] sm:$0xff]
        %v2646 = vld [vmem:[#allocation2 + $0x3e0] sm:$0xff]
        %v2647 = vld [vmem:[#allocation2 + $0x3e8] sm:$0xff]
        %v2648 = vld [vmem:[#allocation2 + $0x3f0] sm:$0xff]
        %v2649 = vld [vmem:[#allocation2 + $0x3f8] sm:$0xff]
        %v2650 = vmax.f32 %v2522, %v2258
        %v2651 = vmax.f32 %v2523, %v2259
        %v2652 = vmax.f32 %v2524, %v2260
        %v2653 = vmax.f32 %v2525, %v2261
        %v2654 = vmax.f32 %v2526, %v2262
        %v2655 = vmax.f32 %v2527, %v2263
        %v2656 = vmax.f32 %v2528, %v2264
        %v2657 = vmax.f32 %v2529, %v2265
        %v2658 = vmax.f32 %v2530, %v2266
        %v2659 = vmax.f32 %v2531, %v2267
        %v2660 = vmax.f32 %v2532, %v2268
        %v2661 = vmax.f32 %v2533, %v2269
        %v2662 = vmax.f32 %v2534, %v2270
        %v2663 = vmax.f32 %v2535, %v2271
        %v2664 = vmax.f32 %v2536, %v2272
        %v2665 = vmax.f32 %v2537, %v2273
        %v2666 = vmax.f32 %v2538, %v2274
        %v2667 = vmax.f32 %v2539, %v2275
        %v2668 = vmax.f32 %v2540, %v2276
        %v2669 = vmax.f32 %v2541, %v2277
        %v2670 = vmax.f32 %v2542, %v2278
        %v2671 = vmax.f32 %v2543, %v2279
        %v2672 = vmax.f32 %v2544, %v2280
        %v2673 = vmax.f32 %v2545, %v2281
        %v2674 = vmax.f32 %v2546, %v2282
        %v2675 = vmax.f32 %v2547, %v2283
        %v2676 = vmax.f32 %v2548, %v2284
        %v2677 = vmax.f32 %v2549, %v2285
        %v2678 = vmax.f32 %v2550, %v2286
        %v2679 = vmax.f32 %v2551, %v2287
        %v2680 = vmax.f32 %v2552, %v2288
        %v2681 = vmax.f32 %v2553, %v2289
        %v2682 = vmax.f32 %v2554, %v2290
        %v2683 = vmax.f32 %v2555, %v2291
        %v2684 = vmax.f32 %v2556, %v2292
        %v2685 = vmax.f32 %v2557, %v2293
        %v2686 = vmax.f32 %v2558, %v2294
        %v2687 = vmax.f32 %v2559, %v2295
        %v2688 = vmax.f32 %v2560, %v2296
        %v2689 = vmax.f32 %v2561, %v2297
        %v2690 = vmax.f32 %v2562, %v2298
        %v2691 = vmax.f32 %v2563, %v2299
        %v2692 = vmax.f32 %v2564, %v2300
        %v2693 = vmax.f32 %v2565, %v2301
        %v2694 = vmax.f32 %v2566, %v2302
        %v2695 = vmax.f32 %v2567, %v2303
        %v2696 = vmax.f32 %v2568, %v2304
        %v2697 = vmax.f32 %v2569, %v2305
        %v2698 = vmax.f32 %v2570, %v2306
        %v2699 = vmax.f32 %v2571, %v2307
        %v2700 = vmax.f32 %v2572, %v2308
        %v2701 = vmax.f32 %v2573, %v2309
        %v2702 = vmax.f32 %v2574, %v2310
        %v2703 = vmax.f32 %v2575, %v2311
        %v2704 = vmax.f32 %v2576, %v2312
        %v2705 = vmax.f32 %v2577, %v2313
        %v2706 = vmax.f32 %v2578, %v2314
        %v2707 = vmax.f32 %v2579, %v2315
        %v2708 = vmax.f32 %v2580, %v2316
        %v2709 = vmax.f32 %v2581, %v2317
        %v2710 = vmax.f32 %v2582, %v2318
        %v2711 = vmax.f32 %v2583, %v2319
        %v2712 = vmax.f32 %v2584, %v2320
        %v2713 = vmax.f32 %v2585, %v2321
        %v2714 = vmax.f32 %v2586, %v2322
        %v2715 = vmax.f32 %v2587, %v2323
        %v2716 = vmax.f32 %v2588, %v2324
        %v2717 = vmax.f32 %v2589, %v2325
        %v2718 = vmax.f32 %v2590, %v2326
        %v2719 = vmax.f32 %v2591, %v2327
        %v2720 = vmax.f32 %v2592, %v2328
        %v2721 = vmax.f32 %v2593, %v2329
        %v2722 = vmax.f32 %v2594, %v2330
        %v2723 = vmax.f32 %v2595, %v2331
        %v2724 = vmax.f32 %v2596, %v2332
        %v2725 = vmax.f32 %v2597, %v2333
        %v2726 = vmax.f32 %v2598, %v2334
        %v2727 = vmax.f32 %v2599, %v2335
        %v2728 = vmax.f32 %v2600, %v2336
        %v2729 = vmax.f32 %v2601, %v2337
        %v2730 = vmax.f32 %v2602, %v2338
        %v2731 = vmax.f32 %v2603, %v2339
        %v2732 = vmax.f32 %v2604, %v2340
        %v2733 = vmax.f32 %v2605, %v2341
        %v2734 = vmax.f32 %v2606, %v2342
        %v2735 = vmax.f32 %v2607, %v2343
        %v2736 = vmax.f32 %v2608, %v2344
        %v2737 = vmax.f32 %v2609, %v2345
        %v2738 = vmax.f32 %v2610, %v2346
        %v2739 = vmax.f32 %v2611, %v2347
        %v2740 = vmax.f32 %v2612, %v2348
        %v2741 = vmax.f32 %v2613, %v2349
        %v2742 = vmax.f32 %v2614, %v2350
        %v2743 = vmax.f32 %v2615, %v2351
        %v2744 = vmax.f32 %v2616, %v2352
        %v2745 = vmax.f32 %v2617, %v2353
        %v2746 = vmax.f32 %v2618, %v2354
        %v2747 = vmax.f32 %v2619, %v2355
        %v2748 = vmax.f32 %v2620, %v2356
        %v2749 = vmax.f32 %v2621, %v2357
        %v2750 = vmax.f32 %v2622, %v2358
        %v2751 = vmax.f32 %v2623, %v2359
        %v2752 = vmax.f32 %v2624, %v2360
        %v2753 = vmax.f32 %v2625, %v2361
        %v2754 = vmax.f32 %v2626, %v2362
        %v2755 = vmax.f32 %v2627, %v2363
        %v2756 = vmax.f32 %v2628, %v2364
        %v2757 = vmax.f32 %v2629, %v2365
        %v2758 = vmax.f32 %v2630, %v2366
        %v2759 = vmax.f32 %v2631, %v2367
        %v2760 = vmax.f32 %v2632, %v2368
        %v2761 = vmax.f32 %v2633, %v2369
        %v2762 = vmax.f32 %v2634, %v2370
        %v2763 = vmax.f32 %v2635, %v2371
        %v2764 = vmax.f32 %v2636, %v2372
        %v2765 = vmax.f32 %v2637, %v2373
        %v2766 = vmax.f32 %v2638, %v2374
        %v2767 = vmax.f32 %v2639, %v2375
        %v2768 = vmax.f32 %v2640, %v2376
        %v2769 = vmax.f32 %v2641, %v2377
        %v2770 = vmax.f32 %v2642, %v2378
        %v2771 = vmax.f32 %v2643, %v2379
        %v2772 = vmax.f32 %v2644, %v2380
        %v2773 = vmax.f32 %v2645, %v2381
        %v2774 = vmax.f32 %v2646, %v2382
        %v2775 = vmax.f32 %v2647, %v2383
        %v2776 = vmax.f32 %v2648, %v2384
        %v2777 = vmax.f32 %v2649, %v2385
        %2778 = vst [vmem:[#allocation2] sm:$0xff] %v2650
        %2779 = vst [vmem:[#allocation2 + $0x8] sm:$0xff] %v2651
        %2780 = vst [vmem:[#allocation2 + $0x10] sm:$0xff] %v2652
        %2781 = vst [vmem:[#allocation2 + $0x18] sm:$0xff] %v2653
        %2782 = vst [vmem:[#allocation2 + $0x20] sm:$0xff] %v2654
        %2783 = vst [vmem:[#allocation2 + $0x28] sm:$0xff] %v2655
        %2784 = vst [vmem:[#allocation2 + $0x30] sm:$0xff] %v2656
        %2785 = vst [vmem:[#allocation2 + $0x38] sm:$0xff] %v2657
        %2786 = vst [vmem:[#allocation2 + $0x40] sm:$0xff] %v2658
        %2787 = vst [vmem:[#allocation2 + $0x48] sm:$0xff] %v2659
        %2788 = vst [vmem:[#allocation2 + $0x50] sm:$0xff] %v2660
        %2789 = vst [vmem:[#allocation2 + $0x58] sm:$0xff] %v2661
        %2790 = vst [vmem:[#allocation2 + $0x60] sm:$0xff] %v2662
        %2791 = vst [vmem:[#allocation2 + $0x68] sm:$0xff] %v2663
        %2792 = vst [vmem:[#allocation2 + $0x70] sm:$0xff] %v2664
        %2793 = vst [vmem:[#allocation2 + $0x78] sm:$0xff] %v2665
        %2794 = vst [vmem:[#allocation2 + $0x80] sm:$0xff] %v2666
        %2795 = vst [vmem:[#allocation2 + $0x88] sm:$0xff] %v2667
        %2796 = vst [vmem:[#allocation2 + $0x90] sm:$0xff] %v2668
        %2797 = vst [vmem:[#allocation2 + $0x98] sm:$0xff] %v2669
        %2798 = vst [vmem:[#allocation2 + $0xa0] sm:$0xff] %v2670
        %2799 = vst [vmem:[#allocation2 + $0xa8] sm:$0xff] %v2671
        %2800 = vst [vmem:[#allocation2 + $0xb0] sm:$0xff] %v2672
        %2801 = vst [vmem:[#allocation2 + $0xb8] sm:$0xff] %v2673
        %2802 = vst [vmem:[#allocation2 + $0xc0] sm:$0xff] %v2674
        %2803 = vst [vmem:[#allocation2 + $0xc8] sm:$0xff] %v2675
        %2804 = vst [vmem:[#allocation2 + $0xd0] sm:$0xff] %v2676
        %2805 = vst [vmem:[#allocation2 + $0xd8] sm:$0xff] %v2677
        %2806 = vst [vmem:[#allocation2 + $0xe0] sm:$0xff] %v2678
        %2807 = vst [vmem:[#allocation2 + $0xe8] sm:$0xff] %v2679
        %2808 = vst [vmem:[#allocation2 + $0xf0] sm:$0xff] %v2680
        %2809 = vst [vmem:[#allocation2 + $0xf8] sm:$0xff] %v2681
        %2810 = vst [vmem:[#allocation2 + $0x100] sm:$0xff] %v2682
        %2811 = vst [vmem:[#allocation2 + $0x108] sm:$0xff] %v2683
        %2812 = vst [vmem:[#allocation2 + $0x110] sm:$0xff] %v2684
        %2813 = vst [vmem:[#allocation2 + $0x118] sm:$0xff] %v2685
        %2814 = vst [vmem:[#allocation2 + $0x120] sm:$0xff] %v2686
        %2815 = vst [vmem:[#allocation2 + $0x128] sm:$0xff] %v2687
        %2816 = vst [vmem:[#allocation2 + $0x130] sm:$0xff] %v2688
        %2817 = vst [vmem:[#allocation2 + $0x138] sm:$0xff] %v2689
        %2818 = vst [vmem:[#allocation2 + $0x140] sm:$0xff] %v2690
        %2819 = vst [vmem:[#allocation2 + $0x148] sm:$0xff] %v2691
        %2820 = vst [vmem:[#allocation2 + $0x150] sm:$0xff] %v2692
        %2821 = vst [vmem:[#allocation2 + $0x158] sm:$0xff] %v2693
        %2822 = vst [vmem:[#allocation2 + $0x160] sm:$0xff] %v2694
        %2823 = vst [vmem:[#allocation2 + $0x168] sm:$0xff] %v2695
        %2824 = vst [vmem:[#allocation2 + $0x170] sm:$0xff] %v2696
        %2825 = vst [vmem:[#allocation2 + $0x178] sm:$0xff] %v2697
        %2826 = vst [vmem:[#allocation2 + $0x180] sm:$0xff] %v2698
        %2827 = vst [vmem:[#allocation2 + $0x188] sm:$0xff] %v2699
        %2828 = vst [vmem:[#allocation2 + $0x190] sm:$0xff] %v2700
        %2829 = vst [vmem:[#allocation2 + $0x198] sm:$0xff] %v2701
        %2830 = vst [vmem:[#allocation2 + $0x1a0] sm:$0xff] %v2702
        %2831 = vst [vmem:[#allocation2 + $0x1a8] sm:$0xff] %v2703
        %2832 = vst [vmem:[#allocation2 + $0x1b0] sm:$0xff] %v2704
        %2833 = vst [vmem:[#allocation2 + $0x1b8] sm:$0xff] %v2705
        %2834 = vst [vmem:[#allocation2 + $0x1c0] sm:$0xff] %v2706
        %2835 = vst [vmem:[#allocation2 + $0x1c8] sm:$0xff] %v2707
        %2836 = vst [vmem:[#allocation2 + $0x1d0] sm:$0xff] %v2708
        %2837 = vst [vmem:[#allocation2 + $0x1d8] sm:$0xff] %v2709
        %2838 = vst [vmem:[#allocation2 + $0x1e0] sm:$0xff] %v2710
        %2839 = vst [vmem:[#allocation2 + $0x1e8] sm:$0xff] %v2711
        %2840 = vst [vmem:[#allocation2 + $0x1f0] sm:$0xff] %v2712
        %2841 = vst [vmem:[#allocation2 + $0x1f8] sm:$0xff] %v2713
        %2842 = vst [vmem:[#allocation2 + $0x200] sm:$0xff] %v2714
        %2843 = vst [vmem:[#allocation2 + $0x208] sm:$0xff] %v2715
        %2844 = vst [vmem:[#allocation2 + $0x210] sm:$0xff] %v2716
        %2845 = vst [vmem:[#allocation2 + $0x218] sm:$0xff] %v2717
        %2846 = vst [vmem:[#allocation2 + $0x220] sm:$0xff] %v2718
        %2847 = vst [vmem:[#allocation2 + $0x228] sm:$0xff] %v2719
        %2848 = vst [vmem:[#allocation2 + $0x230] sm:$0xff] %v2720
        %2849 = vst [vmem:[#allocation2 + $0x238] sm:$0xff] %v2721
        %2850 = vst [vmem:[#allocation2 + $0x240] sm:$0xff] %v2722
        %2851 = vst [vmem:[#allocation2 + $0x248] sm:$0xff] %v2723
        %2852 = vst [vmem:[#allocation2 + $0x250] sm:$0xff] %v2724
        %2853 = vst [vmem:[#allocation2 + $0x258] sm:$0xff] %v2725
        %2854 = vst [vmem:[#allocation2 + $0x260] sm:$0xff] %v2726
        %2855 = vst [vmem:[#allocation2 + $0x268] sm:$0xff] %v2727
        %2856 = vst [vmem:[#allocation2 + $0x270] sm:$0xff] %v2728
        %2857 = vst [vmem:[#allocation2 + $0x278] sm:$0xff] %v2729
        %2858 = vst [vmem:[#allocation2 + $0x280] sm:$0xff] %v2730
        %2859 = vst [vmem:[#allocation2 + $0x288] sm:$0xff] %v2731
        %2860 = vst [vmem:[#allocation2 + $0x290] sm:$0xff] %v2732
        %2861 = vst [vmem:[#allocation2 + $0x298] sm:$0xff] %v2733
        %2862 = vst [vmem:[#allocation2 + $0x2a0] sm:$0xff] %v2734
        %2863 = vst [vmem:[#allocation2 + $0x2a8] sm:$0xff] %v2735
        %2864 = vst [vmem:[#allocation2 + $0x2b0] sm:$0xff] %v2736
        %2865 = vst [vmem:[#allocation2 + $0x2b8] sm:$0xff] %v2737
        %2866 = vst [vmem:[#allocation2 + $0x2c0] sm:$0xff] %v2738
        %2867 = vst [vmem:[#allocation2 + $0x2c8] sm:$0xff] %v2739
        %2868 = vst [vmem:[#allocation2 + $0x2d0] sm:$0xff] %v2740
        %2869 = vst [vmem:[#allocation2 + $0x2d8] sm:$0xff] %v2741
        %2870 = vst [vmem:[#allocation2 + $0x2e0] sm:$0xff] %v2742
        %2871 = vst [vmem:[#allocation2 + $0x2e8] sm:$0xff] %v2743
        %2872 = vst [vmem:[#allocation2 + $0x2f0] sm:$0xff] %v2744
        %2873 = vst [vmem:[#allocation2 + $0x2f8] sm:$0xff] %v2745
        %2874 = vst [vmem:[#allocation2 + $0x300] sm:$0xff] %v2746
        %2875 = vst [vmem:[#allocation2 + $0x308] sm:$0xff] %v2747
        %2876 = vst [vmem:[#allocation2 + $0x310] sm:$0xff] %v2748
        %2877 = vst [vmem:[#allocation2 + $0x318] sm:$0xff] %v2749
        %2878 = vst [vmem:[#allocation2 + $0x320] sm:$0xff] %v2750
        %2879 = vst [vmem:[#allocation2 + $0x328] sm:$0xff] %v2751
        %2880 = vst [vmem:[#allocation2 + $0x330] sm:$0xff] %v2752
        %2881 = vst [vmem:[#allocation2 + $0x338] sm:$0xff] %v2753
        %2882 = vst [vmem:[#allocation2 + $0x340] sm:$0xff] %v2754
        %2883 = vst [vmem:[#allocation2 + $0x348] sm:$0xff] %v2755
        %2884 = vst [vmem:[#allocation2 + $0x350] sm:$0xff] %v2756
        %2885 = vst [vmem:[#allocation2 + $0x358] sm:$0xff] %v2757
        %2886 = vst [vmem:[#allocation2 + $0x360] sm:$0xff] %v2758
        %2887 = vst [vmem:[#allocation2 + $0x368] sm:$0xff] %v2759
        %2888 = vst [vmem:[#allocation2 + $0x370] sm:$0xff] %v2760
        %2889 = vst [vmem:[#allocation2 + $0x378] sm:$0xff] %v2761
        %2890 = vst [vmem:[#allocation2 + $0x380] sm:$0xff] %v2762
        %2891 = vst [vmem:[#allocation2 + $0x388] sm:$0xff] %v2763
        %2892 = vst [vmem:[#allocation2 + $0x390] sm:$0xff] %v2764
        %2893 = vst [vmem:[#allocation2 + $0x398] sm:$0xff] %v2765
        %2894 = vst [vmem:[#allocation2 + $0x3a0] sm:$0xff] %v2766
        %2895 = vst [vmem:[#allocation2 + $0x3a8] sm:$0xff] %v2767
        %2896 = vst [vmem:[#allocation2 + $0x3b0] sm:$0xff] %v2768
        %2897 = vst [vmem:[#allocation2 + $0x3b8] sm:$0xff] %v2769
        %2898 = vst [vmem:[#allocation2 + $0x3c0] sm:$0xff] %v2770
        %2899 = vst [vmem:[#allocation2 + $0x3c8] sm:$0xff] %v2771
        %2900 = vst [vmem:[#allocation2 + $0x3d0] sm:$0xff] %v2772
        %2901 = vst [vmem:[#allocation2 + $0x3d8] sm:$0xff] %v2773
        %2902 = vst [vmem:[#allocation2 + $0x3e0] sm:$0xff] %v2774
        %2903 = vst [vmem:[#allocation2 + $0x3e8] sm:$0xff] %v2775
        %2904 = vst [vmem:[#allocation2 + $0x3f0] sm:$0xff] %v2776
        %2905 = vst [vmem:[#allocation2 + $0x3f8] sm:$0xff] %v2777
      $region56: #{tpu_custom_call.1} parent=47 // pred_fallthru
        _
      // Predicated region
      $region57: #{tpu_custom_call.1} parent=47 // pred_check
        %p2906 = pneg %p2386
      $region58: #{tpu_custom_call.1} parent=47 // pred_check_branch
        %2908 = sbr.rel (%p2906) target = $region60
      $region59: #{tpu_custom_call.1} parent=47 // pred_region
        %v2909 = vld [vmem:[#allocation2] sm:$0xff]
        %v2910 = vld [vmem:[#allocation2 + $0x8] sm:$0xff]
        %v2911 = vld [vmem:[#allocation2 + $0x10] sm:$0xff]
        %v2912 = vld [vmem:[#allocation2 + $0x18] sm:$0xff]
        %v2913 = vld [vmem:[#allocation2 + $0x20] sm:$0xff]
        %v2914 = vld [vmem:[#allocation2 + $0x28] sm:$0xff]
        %v2915 = vld [vmem:[#allocation2 + $0x30] sm:$0xff]
        %v2916 = vld [vmem:[#allocation2 + $0x38] sm:$0xff]
        %v2917 = vld [vmem:[#allocation2 + $0x40] sm:$0xff]
        %v2918 = vld [vmem:[#allocation2 + $0x48] sm:$0xff]
        %v2919 = vld [vmem:[#allocation2 + $0x50] sm:$0xff]
        %v2920 = vld [vmem:[#allocation2 + $0x58] sm:$0xff]
        %v2921 = vld [vmem:[#allocation2 + $0x60] sm:$0xff]
        %v2922 = vld [vmem:[#allocation2 + $0x68] sm:$0xff]
        %v2923 = vld [vmem:[#allocation2 + $0x70] sm:$0xff]
        %v2924 = vld [vmem:[#allocation2 + $0x78] sm:$0xff]
        %v2925 = vld [vmem:[#allocation2 + $0x80] sm:$0xff]
        %v2926 = vld [vmem:[#allocation2 + $0x88] sm:$0xff]
        %v2927 = vld [vmem:[#allocation2 + $0x90] sm:$0xff]
        %v2928 = vld [vmem:[#allocation2 + $0x98] sm:$0xff]
        %v2929 = vld [vmem:[#allocation2 + $0xa0] sm:$0xff]
        %v2930 = vld [vmem:[#allocation2 + $0xa8] sm:$0xff]
        %v2931 = vld [vmem:[#allocation2 + $0xb0] sm:$0xff]
        %v2932 = vld [vmem:[#allocation2 + $0xb8] sm:$0xff]
        %v2933 = vld [vmem:[#allocation2 + $0xc0] sm:$0xff]
        %v2934 = vld [vmem:[#allocation2 + $0xc8] sm:$0xff]
        %v2935 = vld [vmem:[#allocation2 + $0xd0] sm:$0xff]
        %v2936 = vld [vmem:[#allocation2 + $0xd8] sm:$0xff]
        %v2937 = vld [vmem:[#allocation2 + $0xe0] sm:$0xff]
        %v2938 = vld [vmem:[#allocation2 + $0xe8] sm:$0xff]
        %v2939 = vld [vmem:[#allocation2 + $0xf0] sm:$0xff]
        %v2940 = vld [vmem:[#allocation2 + $0xf8] sm:$0xff]
        %v2941 = vld [vmem:[#allocation2 + $0x100] sm:$0xff]
        %v2942 = vld [vmem:[#allocation2 + $0x108] sm:$0xff]
        %v2943 = vld [vmem:[#allocation2 + $0x110] sm:$0xff]
        %v2944 = vld [vmem:[#allocation2 + $0x118] sm:$0xff]
        %v2945 = vld [vmem:[#allocation2 + $0x120] sm:$0xff]
        %v2946 = vld [vmem:[#allocation2 + $0x128] sm:$0xff]
        %v2947 = vld [vmem:[#allocation2 + $0x130] sm:$0xff]
        %v2948 = vld [vmem:[#allocation2 + $0x138] sm:$0xff]
        %v2949 = vld [vmem:[#allocation2 + $0x140] sm:$0xff]
        %v2950 = vld [vmem:[#allocation2 + $0x148] sm:$0xff]
        %v2951 = vld [vmem:[#allocation2 + $0x150] sm:$0xff]
        %v2952 = vld [vmem:[#allocation2 + $0x158] sm:$0xff]
        %v2953 = vld [vmem:[#allocation2 + $0x160] sm:$0xff]
        %v2954 = vld [vmem:[#allocation2 + $0x168] sm:$0xff]
        %v2955 = vld [vmem:[#allocation2 + $0x170] sm:$0xff]
        %v2956 = vld [vmem:[#allocation2 + $0x178] sm:$0xff]
        %v2957 = vld [vmem:[#allocation2 + $0x180] sm:$0xff]
        %v2958 = vld [vmem:[#allocation2 + $0x188] sm:$0xff]
        %v2959 = vld [vmem:[#allocation2 + $0x190] sm:$0xff]
        %v2960 = vld [vmem:[#allocation2 + $0x198] sm:$0xff]
        %v2961 = vld [vmem:[#allocation2 + $0x1a0] sm:$0xff]
        %v2962 = vld [vmem:[#allocation2 + $0x1a8] sm:$0xff]
        %v2963 = vld [vmem:[#allocation2 + $0x1b0] sm:$0xff]
        %v2964 = vld [vmem:[#allocation2 + $0x1b8] sm:$0xff]
        %v2965 = vld [vmem:[#allocation2 + $0x1c0] sm:$0xff]
        %v2966 = vld [vmem:[#allocation2 + $0x1c8] sm:$0xff]
        %v2967 = vld [vmem:[#allocation2 + $0x1d0] sm:$0xff]
        %v2968 = vld [vmem:[#allocation2 + $0x1d8] sm:$0xff]
        %v2969 = vld [vmem:[#allocation2 + $0x1e0] sm:$0xff]
        %v2970 = vld [vmem:[#allocation2 + $0x1e8] sm:$0xff]
        %v2971 = vld [vmem:[#allocation2 + $0x1f0] sm:$0xff]
        %v2972 = vld [vmem:[#allocation2 + $0x1f8] sm:$0xff]
        %v2973 = vld [vmem:[#allocation2 + $0x200] sm:$0xff]
        %v2974 = vld [vmem:[#allocation2 + $0x208] sm:$0xff]
        %v2975 = vld [vmem:[#allocation2 + $0x210] sm:$0xff]
        %v2976 = vld [vmem:[#allocation2 + $0x218] sm:$0xff]
        %v2977 = vld [vmem:[#allocation2 + $0x220] sm:$0xff]
        %v2978 = vld [vmem:[#allocation2 + $0x228] sm:$0xff]
        %v2979 = vld [vmem:[#allocation2 + $0x230] sm:$0xff]
        %v2980 = vld [vmem:[#allocation2 + $0x238] sm:$0xff]
        %v2981 = vld [vmem:[#allocation2 + $0x240] sm:$0xff]
        %v2982 = vld [vmem:[#allocation2 + $0x248] sm:$0xff]
        %v2983 = vld [vmem:[#allocation2 + $0x250] sm:$0xff]
        %v2984 = vld [vmem:[#allocation2 + $0x258] sm:$0xff]
        %v2985 = vld [vmem:[#allocation2 + $0x260] sm:$0xff]
        %v2986 = vld [vmem:[#allocation2 + $0x268] sm:$0xff]
        %v2987 = vld [vmem:[#allocation2 + $0x270] sm:$0xff]
        %v2988 = vld [vmem:[#allocation2 + $0x278] sm:$0xff]
        %v2989 = vld [vmem:[#allocation2 + $0x280] sm:$0xff]
        %v2990 = vld [vmem:[#allocation2 + $0x288] sm:$0xff]
        %v2991 = vld [vmem:[#allocation2 + $0x290] sm:$0xff]
        %v2992 = vld [vmem:[#allocation2 + $0x298] sm:$0xff]
        %v2993 = vld [vmem:[#allocation2 + $0x2a0] sm:$0xff]
        %v2994 = vld [vmem:[#allocation2 + $0x2a8] sm:$0xff]
        %v2995 = vld [vmem:[#allocation2 + $0x2b0] sm:$0xff]
        %v2996 = vld [vmem:[#allocation2 + $0x2b8] sm:$0xff]
        %v2997 = vld [vmem:[#allocation2 + $0x2c0] sm:$0xff]
        %v2998 = vld [vmem:[#allocation2 + $0x2c8] sm:$0xff]
        %v2999 = vld [vmem:[#allocation2 + $0x2d0] sm:$0xff]
        %v3000 = vld [vmem:[#allocation2 + $0x2d8] sm:$0xff]
        %v3001 = vld [vmem:[#allocation2 + $0x2e0] sm:$0xff]
        %v3002 = vld [vmem:[#allocation2 + $0x2e8] sm:$0xff]
        %v3003 = vld [vmem:[#allocation2 + $0x2f0] sm:$0xff]
        %v3004 = vld [vmem:[#allocation2 + $0x2f8] sm:$0xff]
        %v3005 = vld [vmem:[#allocation2 + $0x300] sm:$0xff]
        %v3006 = vld [vmem:[#allocation2 + $0x308] sm:$0xff]
        %v3007 = vld [vmem:[#allocation2 + $0x310] sm:$0xff]
        %v3008 = vld [vmem:[#allocation2 + $0x318] sm:$0xff]
        %v3009 = vld [vmem:[#allocation2 + $0x320] sm:$0xff]
        %v3010 = vld [vmem:[#allocation2 + $0x328] sm:$0xff]
        %v3011 = vld [vmem:[#allocation2 + $0x330] sm:$0xff]
        %v3012 = vld [vmem:[#allocation2 + $0x338] sm:$0xff]
        %v3013 = vld [vmem:[#allocation2 + $0x340] sm:$0xff]
        %v3014 = vld [vmem:[#allocation2 + $0x348] sm:$0xff]
        %v3015 = vld [vmem:[#allocation2 + $0x350] sm:$0xff]
        %v3016 = vld [vmem:[#allocation2 + $0x358] sm:$0xff]
        %v3017 = vld [vmem:[#allocation2 + $0x360] sm:$0xff]
        %v3018 = vld [vmem:[#allocation2 + $0x368] sm:$0xff]
        %v3019 = vld [vmem:[#allocation2 + $0x370] sm:$0xff]
        %v3020 = vld [vmem:[#allocation2 + $0x378] sm:$0xff]
        %v3021 = vld [vmem:[#allocation2 + $0x380] sm:$0xff]
        %v3022 = vld [vmem:[#allocation2 + $0x388] sm:$0xff]
        %v3023 = vld [vmem:[#allocation2 + $0x390] sm:$0xff]
        %v3024 = vld [vmem:[#allocation2 + $0x398] sm:$0xff]
        %v3025 = vld [vmem:[#allocation2 + $0x3a0] sm:$0xff]
        %v3026 = vld [vmem:[#allocation2 + $0x3a8] sm:$0xff]
        %v3027 = vld [vmem:[#allocation2 + $0x3b0] sm:$0xff]
        %v3028 = vld [vmem:[#allocation2 + $0x3b8] sm:$0xff]
        %v3029 = vld [vmem:[#allocation2 + $0x3c0] sm:$0xff]
        %v3030 = vld [vmem:[#allocation2 + $0x3c8] sm:$0xff]
        %v3031 = vld [vmem:[#allocation2 + $0x3d0] sm:$0xff]
        %v3032 = vld [vmem:[#allocation2 + $0x3d8] sm:$0xff]
        %v3033 = vld [vmem:[#allocation2 + $0x3e0] sm:$0xff]
        %v3034 = vld [vmem:[#allocation2 + $0x3e8] sm:$0xff]
        %v3035 = vld [vmem:[#allocation2 + $0x3f0] sm:$0xff]
        %v3036 = vld [vmem:[#allocation2 + $0x3f8] sm:$0xff]
        %3037 = vmax.xlane.f32.xlu0 %v2909
        %v3038 = vpop.xlane.xlu0 %3037
        %3039 = vmax.xlane.f32.xlu0 %v2910
        %v3040 = vpop.xlane.xlu0 %3039
        %3041 = vmax.xlane.f32.xlu0 %v2911
        %v3042 = vpop.xlane.xlu0 %3041
        %3043 = vmax.xlane.f32.xlu0 %v2912
        %v3044 = vpop.xlane.xlu0 %3043
        %3045 = vmax.xlane.f32.xlu0 %v2913
        %v3046 = vpop.xlane.xlu0 %3045
        %3047 = vmax.xlane.f32.xlu0 %v2914
        %v3048 = vpop.xlane.xlu0 %3047
        %3049 = vmax.xlane.f32.xlu0 %v2915
        %v3050 = vpop.xlane.xlu0 %3049
        %3051 = vmax.xlane.f32.xlu0 %v2916
        %v3052 = vpop.xlane.xlu0 %3051
        %3053 = vmax.xlane.f32.xlu0 %v2917
        %v3054 = vpop.xlane.xlu0 %3053
        %3055 = vmax.xlane.f32.xlu0 %v2918
        %v3056 = vpop.xlane.xlu0 %3055
        %3057 = vmax.xlane.f32.xlu0 %v2919
        %v3058 = vpop.xlane.xlu0 %3057
        %3059 = vmax.xlane.f32.xlu0 %v2920
        %v3060 = vpop.xlane.xlu0 %3059
        %3061 = vmax.xlane.f32.xlu0 %v2921
        %v3062 = vpop.xlane.xlu0 %3061
        %3063 = vmax.xlane.f32.xlu0 %v2922
        %v3064 = vpop.xlane.xlu0 %3063
        %3065 = vmax.xlane.f32.xlu0 %v2923
        %v3066 = vpop.xlane.xlu0 %3065
        %3067 = vmax.xlane.f32.xlu0 %v2924
        %v3068 = vpop.xlane.xlu0 %3067
        %3069 = vmax.xlane.f32.xlu0 %v2925
        %v3070 = vpop.xlane.xlu0 %3069
        %3071 = vmax.xlane.f32.xlu0 %v2926
        %v3072 = vpop.xlane.xlu0 %3071
        %3073 = vmax.xlane.f32.xlu0 %v2927
        %v3074 = vpop.xlane.xlu0 %3073
        %3075 = vmax.xlane.f32.xlu0 %v2928
        %v3076 = vpop.xlane.xlu0 %3075
        %3077 = vmax.xlane.f32.xlu0 %v2929
        %v3078 = vpop.xlane.xlu0 %3077
        %3079 = vmax.xlane.f32.xlu0 %v2930
        %v3080 = vpop.xlane.xlu0 %3079
        %3081 = vmax.xlane.f32.xlu0 %v2931
        %v3082 = vpop.xlane.xlu0 %3081
        %3083 = vmax.xlane.f32.xlu0 %v2932
        %v3084 = vpop.xlane.xlu0 %3083
        %3085 = vmax.xlane.f32.xlu0 %v2933
        %v3086 = vpop.xlane.xlu0 %3085
        %3087 = vmax.xlane.f32.xlu0 %v2934
        %v3088 = vpop.xlane.xlu0 %3087
        %3089 = vmax.xlane.f32.xlu0 %v2935
        %v3090 = vpop.xlane.xlu0 %3089
        %3091 = vmax.xlane.f32.xlu0 %v2936
        %v3092 = vpop.xlane.xlu0 %3091
        %3093 = vmax.xlane.f32.xlu0 %v2937
        %v3094 = vpop.xlane.xlu0 %3093
        %3095 = vmax.xlane.f32.xlu0 %v2938
        %v3096 = vpop.xlane.xlu0 %3095
        %3097 = vmax.xlane.f32.xlu0 %v2939
        %v3098 = vpop.xlane.xlu0 %3097
        %3099 = vmax.xlane.f32.xlu0 %v2940
        %v3100 = vpop.xlane.xlu0 %3099
        %3101 = vmax.xlane.f32.xlu0 %v2941
        %v3102 = vpop.xlane.xlu0 %3101
        %3103 = vmax.xlane.f32.xlu0 %v2942
        %v3104 = vpop.xlane.xlu0 %3103
        %3105 = vmax.xlane.f32.xlu0 %v2943
        %v3106 = vpop.xlane.xlu0 %3105
        %3107 = vmax.xlane.f32.xlu0 %v2944
        %v3108 = vpop.xlane.xlu0 %3107
        %3109 = vmax.xlane.f32.xlu0 %v2945
        %v3110 = vpop.xlane.xlu0 %3109
        %3111 = vmax.xlane.f32.xlu0 %v2946
        %v3112 = vpop.xlane.xlu0 %3111
        %3113 = vmax.xlane.f32.xlu0 %v2947
        %v3114 = vpop.xlane.xlu0 %3113
        %3115 = vmax.xlane.f32.xlu0 %v2948
        %v3116 = vpop.xlane.xlu0 %3115
        %3117 = vmax.xlane.f32.xlu0 %v2949
        %v3118 = vpop.xlane.xlu0 %3117
        %3119 = vmax.xlane.f32.xlu0 %v2950
        %v3120 = vpop.xlane.xlu0 %3119
        %3121 = vmax.xlane.f32.xlu0 %v2951
        %v3122 = vpop.xlane.xlu0 %3121
        %3123 = vmax.xlane.f32.xlu0 %v2952
        %v3124 = vpop.xlane.xlu0 %3123
        %3125 = vmax.xlane.f32.xlu0 %v2953
        %v3126 = vpop.xlane.xlu0 %3125
        %3127 = vmax.xlane.f32.xlu0 %v2954
        %v3128 = vpop.xlane.xlu0 %3127
        %3129 = vmax.xlane.f32.xlu0 %v2955
        %v3130 = vpop.xlane.xlu0 %3129
        %3131 = vmax.xlane.f32.xlu0 %v2956
        %v3132 = vpop.xlane.xlu0 %3131
        %3133 = vmax.xlane.f32.xlu0 %v2957
        %v3134 = vpop.xlane.xlu0 %3133
        %3135 = vmax.xlane.f32.xlu0 %v2958
        %v3136 = vpop.xlane.xlu0 %3135
        %3137 = vmax.xlane.f32.xlu0 %v2959
        %v3138 = vpop.xlane.xlu0 %3137
        %3139 = vmax.xlane.f32.xlu0 %v2960
        %v3140 = vpop.xlane.xlu0 %3139
        %3141 = vmax.xlane.f32.xlu0 %v2961
        %v3142 = vpop.xlane.xlu0 %3141
        %3143 = vmax.xlane.f32.xlu0 %v2962
        %v3144 = vpop.xlane.xlu0 %3143
        %3145 = vmax.xlane.f32.xlu0 %v2963
        %v3146 = vpop.xlane.xlu0 %3145
        %3147 = vmax.xlane.f32.xlu0 %v2964
        %v3148 = vpop.xlane.xlu0 %3147
        %3149 = vmax.xlane.f32.xlu0 %v2965
        %v3150 = vpop.xlane.xlu0 %3149
        %3151 = vmax.xlane.f32.xlu0 %v2966
        %v3152 = vpop.xlane.xlu0 %3151
        %3153 = vmax.xlane.f32.xlu0 %v2967
        %v3154 = vpop.xlane.xlu0 %3153
        %3155 = vmax.xlane.f32.xlu0 %v2968
        %v3156 = vpop.xlane.xlu0 %3155
        %3157 = vmax.xlane.f32.xlu0 %v2969
        %v3158 = vpop.xlane.xlu0 %3157
        %3159 = vmax.xlane.f32.xlu0 %v2970
        %v3160 = vpop.xlane.xlu0 %3159
        %3161 = vmax.xlane.f32.xlu0 %v2971
        %v3162 = vpop.xlane.xlu0 %3161
        %3163 = vmax.xlane.f32.xlu0 %v2972
        %v3164 = vpop.xlane.xlu0 %3163
        %3165 = vmax.xlane.f32.xlu0 %v2973
        %v3166 = vpop.xlane.xlu0 %3165
        %3167 = vmax.xlane.f32.xlu0 %v2974
        %v3168 = vpop.xlane.xlu0 %3167
        %3169 = vmax.xlane.f32.xlu0 %v2975
        %v3170 = vpop.xlane.xlu0 %3169
        %3171 = vmax.xlane.f32.xlu0 %v2976
        %v3172 = vpop.xlane.xlu0 %3171
        %3173 = vmax.xlane.f32.xlu0 %v2977
        %v3174 = vpop.xlane.xlu0 %3173
        %3175 = vmax.xlane.f32.xlu0 %v2978
        %v3176 = vpop.xlane.xlu0 %3175
        %3177 = vmax.xlane.f32.xlu0 %v2979
        %v3178 = vpop.xlane.xlu0 %3177
        %3179 = vmax.xlane.f32.xlu0 %v2980
        %v3180 = vpop.xlane.xlu0 %3179
        %3181 = vmax.xlane.f32.xlu0 %v2981
        %v3182 = vpop.xlane.xlu0 %3181
        %3183 = vmax.xlane.f32.xlu0 %v2982
        %v3184 = vpop.xlane.xlu0 %3183
        %3185 = vmax.xlane.f32.xlu0 %v2983
        %v3186 = vpop.xlane.xlu0 %3185
        %3187 = vmax.xlane.f32.xlu0 %v2984
        %v3188 = vpop.xlane.xlu0 %3187
        %3189 = vmax.xlane.f32.xlu0 %v2985
        %v3190 = vpop.xlane.xlu0 %3189
        %3191 = vmax.xlane.f32.xlu0 %v2986
        %v3192 = vpop.xlane.xlu0 %3191
        %3193 = vmax.xlane.f32.xlu0 %v2987
        %v3194 = vpop.xlane.xlu0 %3193
        %3195 = vmax.xlane.f32.xlu0 %v2988
        %v3196 = vpop.xlane.xlu0 %3195
        %3197 = vmax.xlane.f32.xlu0 %v2989
        %v3198 = vpop.xlane.xlu0 %3197
        %3199 = vmax.xlane.f32.xlu0 %v2990
        %v3200 = vpop.xlane.xlu0 %3199
        %3201 = vmax.xlane.f32.xlu0 %v2991
        %v3202 = vpop.xlane.xlu0 %3201
        %3203 = vmax.xlane.f32.xlu0 %v2992
        %v3204 = vpop.xlane.xlu0 %3203
        %3205 = vmax.xlane.f32.xlu0 %v2993
        %v3206 = vpop.xlane.xlu0 %3205
        %3207 = vmax.xlane.f32.xlu0 %v2994
        %v3208 = vpop.xlane.xlu0 %3207
        %3209 = vmax.xlane.f32.xlu0 %v2995
        %v3210 = vpop.xlane.xlu0 %3209
        %3211 = vmax.xlane.f32.xlu0 %v2996
        %v3212 = vpop.xlane.xlu0 %3211
        %3213 = vmax.xlane.f32.xlu0 %v2997
        %v3214 = vpop.xlane.xlu0 %3213
        %3215 = vmax.xlane.f32.xlu0 %v2998
        %v3216 = vpop.xlane.xlu0 %3215
        %3217 = vmax.xlane.f32.xlu0 %v2999
        %v3218 = vpop.xlane.xlu0 %3217
        %3219 = vmax.xlane.f32.xlu0 %v3000
        %v3220 = vpop.xlane.xlu0 %3219
        %3221 = vmax.xlane.f32.xlu0 %v3001
        %v3222 = vpop.xlane.xlu0 %3221
        %3223 = vmax.xlane.f32.xlu0 %v3002
        %v3224 = vpop.xlane.xlu0 %3223
        %3225 = vmax.xlane.f32.xlu0 %v3003
        %v3226 = vpop.xlane.xlu0 %3225
        %3227 = vmax.xlane.f32.xlu0 %v3004
        %v3228 = vpop.xlane.xlu0 %3227
        %3229 = vmax.xlane.f32.xlu0 %v3005
        %v3230 = vpop.xlane.xlu0 %3229
        %3231 = vmax.xlane.f32.xlu0 %v3006
        %v3232 = vpop.xlane.xlu0 %3231
        %3233 = vmax.xlane.f32.xlu0 %v3007
        %v3234 = vpop.xlane.xlu0 %3233
        %3235 = vmax.xlane.f32.xlu0 %v3008
        %v3236 = vpop.xlane.xlu0 %3235
        %3237 = vmax.xlane.f32.xlu0 %v3009
        %v3238 = vpop.xlane.xlu0 %3237
        %3239 = vmax.xlane.f32.xlu0 %v3010
        %v3240 = vpop.xlane.xlu0 %3239
        %3241 = vmax.xlane.f32.xlu0 %v3011
        %v3242 = vpop.xlane.xlu0 %3241
        %3243 = vmax.xlane.f32.xlu0 %v3012
        %v3244 = vpop.xlane.xlu0 %3243
        %3245 = vmax.xlane.f32.xlu0 %v3013
        %v3246 = vpop.xlane.xlu0 %3245
        %3247 = vmax.xlane.f32.xlu0 %v3014
        %v3248 = vpop.xlane.xlu0 %3247
        %3249 = vmax.xlane.f32.xlu0 %v3015
        %v3250 = vpop.xlane.xlu0 %3249
        %3251 = vmax.xlane.f32.xlu0 %v3016
        %v3252 = vpop.xlane.xlu0 %3251
        %3253 = vmax.xlane.f32.xlu0 %v3017
        %v3254 = vpop.xlane.xlu0 %3253
        %3255 = vmax.xlane.f32.xlu0 %v3018
        %v3256 = vpop.xlane.xlu0 %3255
        %3257 = vmax.xlane.f32.xlu0 %v3019
        %v3258 = vpop.xlane.xlu0 %3257
        %3259 = vmax.xlane.f32.xlu0 %v3020
        %v3260 = vpop.xlane.xlu0 %3259
        %3261 = vmax.xlane.f32.xlu0 %v3021
        %v3262 = vpop.xlane.xlu0 %3261
        %3263 = vmax.xlane.f32.xlu0 %v3022
        %v3264 = vpop.xlane.xlu0 %3263
        %3265 = vmax.xlane.f32.xlu0 %v3023
        %v3266 = vpop.xlane.xlu0 %3265
        %3267 = vmax.xlane.f32.xlu0 %v3024
        %v3268 = vpop.xlane.xlu0 %3267
        %3269 = vmax.xlane.f32.xlu0 %v3025
        %v3270 = vpop.xlane.xlu0 %3269
        %3271 = vmax.xlane.f32.xlu0 %v3026
        %v3272 = vpop.xlane.xlu0 %3271
        %3273 = vmax.xlane.f32.xlu0 %v3027
        %v3274 = vpop.xlane.xlu0 %3273
        %3275 = vmax.xlane.f32.xlu0 %v3028
        %v3276 = vpop.xlane.xlu0 %3275
        %3277 = vmax.xlane.f32.xlu0 %v3029
        %v3278 = vpop.xlane.xlu0 %3277
        %3279 = vmax.xlane.f32.xlu0 %v3030
        %v3280 = vpop.xlane.xlu0 %3279
        %3281 = vmax.xlane.f32.xlu0 %v3031
        %v3282 = vpop.xlane.xlu0 %3281
        %3283 = vmax.xlane.f32.xlu0 %v3032
        %v3284 = vpop.xlane.xlu0 %3283
        %3285 = vmax.xlane.f32.xlu0 %v3033
        %v3286 = vpop.xlane.xlu0 %3285
        %3287 = vmax.xlane.f32.xlu0 %v3034
        %v3288 = vpop.xlane.xlu0 %3287
        %3289 = vmax.xlane.f32.xlu0 %v3035
        %v3290 = vpop.xlane.xlu0 %3289
        %3291 = vmax.xlane.f32.xlu0 %v3036
        %v3292 = vpop.xlane.xlu0 %3291
        %v3293 = vld [vmem:[%s6] sm:$0xff]
        %v3294 = vld [vmem:[%s6 + $0x8] sm:$0xff]
        %v3295 = vld [vmem:[%s6 + $0x10] sm:$0xff]
        %v3296 = vld [vmem:[%s6 + $0x18] sm:$0xff]
        %v3297 = vld [vmem:[%s6 + $0x20] sm:$0xff]
        %v3298 = vld [vmem:[%s6 + $0x28] sm:$0xff]
        %v3299 = vld [vmem:[%s6 + $0x30] sm:$0xff]
        %v3300 = vld [vmem:[%s6 + $0x38] sm:$0xff]
        %v3301 = vld [vmem:[%s6 + $0x40] sm:$0xff]
        %v3302 = vld [vmem:[%s6 + $0x48] sm:$0xff]
        %v3303 = vld [vmem:[%s6 + $0x50] sm:$0xff]
        %v3304 = vld [vmem:[%s6 + $0x58] sm:$0xff]
        %v3305 = vld [vmem:[%s6 + $0x60] sm:$0xff]
        %v3306 = vld [vmem:[%s6 + $0x68] sm:$0xff]
        %v3307 = vld [vmem:[%s6 + $0x70] sm:$0xff]
        %v3308 = vld [vmem:[%s6 + $0x78] sm:$0xff]
        %v3309 = vld [vmem:[%s6 + $0x80] sm:$0xff]
        %v3310 = vld [vmem:[%s6 + $0x88] sm:$0xff]
        %v3311 = vld [vmem:[%s6 + $0x90] sm:$0xff]
        %v3312 = vld [vmem:[%s6 + $0x98] sm:$0xff]
        %v3313 = vld [vmem:[%s6 + $0xa0] sm:$0xff]
        %v3314 = vld [vmem:[%s6 + $0xa8] sm:$0xff]
        %v3315 = vld [vmem:[%s6 + $0xb0] sm:$0xff]
        %v3316 = vld [vmem:[%s6 + $0xb8] sm:$0xff]
        %v3317 = vld [vmem:[%s6 + $0xc0] sm:$0xff]
        %v3318 = vld [vmem:[%s6 + $0xc8] sm:$0xff]
        %v3319 = vld [vmem:[%s6 + $0xd0] sm:$0xff]
        %v3320 = vld [vmem:[%s6 + $0xd8] sm:$0xff]
        %v3321 = vld [vmem:[%s6 + $0xe0] sm:$0xff]
        %v3322 = vld [vmem:[%s6 + $0xe8] sm:$0xff]
        %v3323 = vld [vmem:[%s6 + $0xf0] sm:$0xff]
        %v3324 = vld [vmem:[%s6 + $0xf8] sm:$0xff]
        %v3325 = vld [vmem:[%s6 + $0x100] sm:$0xff]
        %v3326 = vld [vmem:[%s6 + $0x108] sm:$0xff]
        %v3327 = vld [vmem:[%s6 + $0x110] sm:$0xff]
        %v3328 = vld [vmem:[%s6 + $0x118] sm:$0xff]
        %v3329 = vld [vmem:[%s6 + $0x120] sm:$0xff]
        %v3330 = vld [vmem:[%s6 + $0x128] sm:$0xff]
        %v3331 = vld [vmem:[%s6 + $0x130] sm:$0xff]
        %v3332 = vld [vmem:[%s6 + $0x138] sm:$0xff]
        %v3333 = vld [vmem:[%s6 + $0x140] sm:$0xff]
        %v3334 = vld [vmem:[%s6 + $0x148] sm:$0xff]
        %v3335 = vld [vmem:[%s6 + $0x150] sm:$0xff]
        %v3336 = vld [vmem:[%s6 + $0x158] sm:$0xff]
        %v3337 = vld [vmem:[%s6 + $0x160] sm:$0xff]
        %v3338 = vld [vmem:[%s6 + $0x168] sm:$0xff]
        %v3339 = vld [vmem:[%s6 + $0x170] sm:$0xff]
        %v3340 = vld [vmem:[%s6 + $0x178] sm:$0xff]
        %v3341 = vld [vmem:[%s6 + $0x180] sm:$0xff]
        %v3342 = vld [vmem:[%s6 + $0x188] sm:$0xff]
        %v3343 = vld [vmem:[%s6 + $0x190] sm:$0xff]
        %v3344 = vld [vmem:[%s6 + $0x198] sm:$0xff]
        %v3345 = vld [vmem:[%s6 + $0x1a0] sm:$0xff]
        %v3346 = vld [vmem:[%s6 + $0x1a8] sm:$0xff]
        %v3347 = vld [vmem:[%s6 + $0x1b0] sm:$0xff]
        %v3348 = vld [vmem:[%s6 + $0x1b8] sm:$0xff]
        %v3349 = vld [vmem:[%s6 + $0x1c0] sm:$0xff]
        %v3350 = vld [vmem:[%s6 + $0x1c8] sm:$0xff]
        %v3351 = vld [vmem:[%s6 + $0x1d0] sm:$0xff]
        %v3352 = vld [vmem:[%s6 + $0x1d8] sm:$0xff]
        %v3353 = vld [vmem:[%s6 + $0x1e0] sm:$0xff]
        %v3354 = vld [vmem:[%s6 + $0x1e8] sm:$0xff]
        %v3355 = vld [vmem:[%s6 + $0x1f0] sm:$0xff]
        %v3356 = vld [vmem:[%s6 + $0x1f8] sm:$0xff]
        %v3357 = vld [vmem:[%s6 + $0x200] sm:$0xff]
        %v3358 = vld [vmem:[%s6 + $0x208] sm:$0xff]
        %v3359 = vld [vmem:[%s6 + $0x210] sm:$0xff]
        %v3360 = vld [vmem:[%s6 + $0x218] sm:$0xff]
        %v3361 = vld [vmem:[%s6 + $0x220] sm:$0xff]
        %v3362 = vld [vmem:[%s6 + $0x228] sm:$0xff]
        %v3363 = vld [vmem:[%s6 + $0x230] sm:$0xff]
        %v3364 = vld [vmem:[%s6 + $0x238] sm:$0xff]
        %v3365 = vld [vmem:[%s6 + $0x240] sm:$0xff]
        %v3366 = vld [vmem:[%s6 + $0x248] sm:$0xff]
        %v3367 = vld [vmem:[%s6 + $0x250] sm:$0xff]
        %v3368 = vld [vmem:[%s6 + $0x258] sm:$0xff]
        %v3369 = vld [vmem:[%s6 + $0x260] sm:$0xff]
        %v3370 = vld [vmem:[%s6 + $0x268] sm:$0xff]
        %v3371 = vld [vmem:[%s6 + $0x270] sm:$0xff]
        %v3372 = vld [vmem:[%s6 + $0x278] sm:$0xff]
        %v3373 = vld [vmem:[%s6 + $0x280] sm:$0xff]
        %v3374 = vld [vmem:[%s6 + $0x288] sm:$0xff]
        %v3375 = vld [vmem:[%s6 + $0x290] sm:$0xff]
        %v3376 = vld [vmem:[%s6 + $0x298] sm:$0xff]
        %v3377 = vld [vmem:[%s6 + $0x2a0] sm:$0xff]
        %v3378 = vld [vmem:[%s6 + $0x2a8] sm:$0xff]
        %v3379 = vld [vmem:[%s6 + $0x2b0] sm:$0xff]
        %v3380 = vld [vmem:[%s6 + $0x2b8] sm:$0xff]
        %v3381 = vld [vmem:[%s6 + $0x2c0] sm:$0xff]
        %v3382 = vld [vmem:[%s6 + $0x2c8] sm:$0xff]
        %v3383 = vld [vmem:[%s6 + $0x2d0] sm:$0xff]
        %v3384 = vld [vmem:[%s6 + $0x2d8] sm:$0xff]
        %v3385 = vld [vmem:[%s6 + $0x2e0] sm:$0xff]
        %v3386 = vld [vmem:[%s6 + $0x2e8] sm:$0xff]
        %v3387 = vld [vmem:[%s6 + $0x2f0] sm:$0xff]
        %v3388 = vld [vmem:[%s6 + $0x2f8] sm:$0xff]
        %v3389 = vld [vmem:[%s6 + $0x300] sm:$0xff]
        %v3390 = vld [vmem:[%s6 + $0x308] sm:$0xff]
        %v3391 = vld [vmem:[%s6 + $0x310] sm:$0xff]
        %v3392 = vld [vmem:[%s6 + $0x318] sm:$0xff]
        %v3393 = vld [vmem:[%s6 + $0x320] sm:$0xff]
        %v3394 = vld [vmem:[%s6 + $0x328] sm:$0xff]
        %v3395 = vld [vmem:[%s6 + $0x330] sm:$0xff]
        %v3396 = vld [vmem:[%s6 + $0x338] sm:$0xff]
        %v3397 = vld [vmem:[%s6 + $0x340] sm:$0xff]
        %v3398 = vld [vmem:[%s6 + $0x348] sm:$0xff]
        %v3399 = vld [vmem:[%s6 + $0x350] sm:$0xff]
        %v3400 = vld [vmem:[%s6 + $0x358] sm:$0xff]
        %v3401 = vld [vmem:[%s6 + $0x360] sm:$0xff]
        %v3402 = vld [vmem:[%s6 + $0x368] sm:$0xff]
        %v3403 = vld [vmem:[%s6 + $0x370] sm:$0xff]
        %v3404 = vld [vmem:[%s6 + $0x378] sm:$0xff]
        %v3405 = vld [vmem:[%s6 + $0x380] sm:$0xff]
        %v3406 = vld [vmem:[%s6 + $0x388] sm:$0xff]
        %v3407 = vld [vmem:[%s6 + $0x390] sm:$0xff]
        %v3408 = vld [vmem:[%s6 + $0x398] sm:$0xff]
        %v3409 = vld [vmem:[%s6 + $0x3a0] sm:$0xff]
        %v3410 = vld [vmem:[%s6 + $0x3a8] sm:$0xff]
        %v3411 = vld [vmem:[%s6 + $0x3b0] sm:$0xff]
        %v3412 = vld [vmem:[%s6 + $0x3b8] sm:$0xff]
        %v3413 = vld [vmem:[%s6 + $0x3c0] sm:$0xff]
        %v3414 = vld [vmem:[%s6 + $0x3c8] sm:$0xff]
        %v3415 = vld [vmem:[%s6 + $0x3d0] sm:$0xff]
        %v3416 = vld [vmem:[%s6 + $0x3d8] sm:$0xff]
        %v3417 = vld [vmem:[%s6 + $0x3e0] sm:$0xff]
        %v3418 = vld [vmem:[%s6 + $0x3e8] sm:$0xff]
        %v3419 = vld [vmem:[%s6 + $0x3f0] sm:$0xff]
        %v3420 = vld [vmem:[%s6 + $0x3f8] sm:$0xff]
        %v3421 = vadd.f32 %v3038, %v3293
        %v3422 = vadd.f32 %v3040, %v3294
        %v3423 = vadd.f32 %v3042, %v3295
        %v3424 = vadd.f32 %v3044, %v3296
        %v3425 = vadd.f32 %v3046, %v3297
        %v3426 = vadd.f32 %v3048, %v3298
        %v3427 = vadd.f32 %v3050, %v3299
        %v3428 = vadd.f32 %v3052, %v3300
        %v3429 = vadd.f32 %v3054, %v3301
        %v3430 = vadd.f32 %v3056, %v3302
        %v3431 = vadd.f32 %v3058, %v3303
        %v3432 = vadd.f32 %v3060, %v3304
        %v3433 = vadd.f32 %v3062, %v3305
        %v3434 = vadd.f32 %v3064, %v3306
        %v3435 = vadd.f32 %v3066, %v3307
        %v3436 = vadd.f32 %v3068, %v3308
        %v3437 = vadd.f32 %v3070, %v3309
        %v3438 = vadd.f32 %v3072, %v3310
        %v3439 = vadd.f32 %v3074, %v3311
        %v3440 = vadd.f32 %v3076, %v3312
        %v3441 = vadd.f32 %v3078, %v3313
        %v3442 = vadd.f32 %v3080, %v3314
        %v3443 = vadd.f32 %v3082, %v3315
        %v3444 = vadd.f32 %v3084, %v3316
        %v3445 = vadd.f32 %v3086, %v3317
        %v3446 = vadd.f32 %v3088, %v3318
        %v3447 = vadd.f32 %v3090, %v3319
        %v3448 = vadd.f32 %v3092, %v3320
        %v3449 = vadd.f32 %v3094, %v3321
        %v3450 = vadd.f32 %v3096, %v3322
        %v3451 = vadd.f32 %v3098, %v3323
        %v3452 = vadd.f32 %v3100, %v3324
        %v3453 = vadd.f32 %v3102, %v3325
        %v3454 = vadd.f32 %v3104, %v3326
        %v3455 = vadd.f32 %v3106, %v3327
        %v3456 = vadd.f32 %v3108, %v3328
        %v3457 = vadd.f32 %v3110, %v3329
        %v3458 = vadd.f32 %v3112, %v3330
        %v3459 = vadd.f32 %v3114, %v3331
        %v3460 = vadd.f32 %v3116, %v3332
        %v3461 = vadd.f32 %v3118, %v3333
        %v3462 = vadd.f32 %v3120, %v3334
        %v3463 = vadd.f32 %v3122, %v3335
        %v3464 = vadd.f32 %v3124, %v3336
        %v3465 = vadd.f32 %v3126, %v3337
        %v3466 = vadd.f32 %v3128, %v3338
        %v3467 = vadd.f32 %v3130, %v3339
        %v3468 = vadd.f32 %v3132, %v3340
        %v3469 = vadd.f32 %v3134, %v3341
        %v3470 = vadd.f32 %v3136, %v3342
        %v3471 = vadd.f32 %v3138, %v3343
        %v3472 = vadd.f32 %v3140, %v3344
        %v3473 = vadd.f32 %v3142, %v3345
        %v3474 = vadd.f32 %v3144, %v3346
        %v3475 = vadd.f32 %v3146, %v3347
        %v3476 = vadd.f32 %v3148, %v3348
        %v3477 = vadd.f32 %v3150, %v3349
        %v3478 = vadd.f32 %v3152, %v3350
        %v3479 = vadd.f32 %v3154, %v3351
        %v3480 = vadd.f32 %v3156, %v3352
        %v3481 = vadd.f32 %v3158, %v3353
        %v3482 = vadd.f32 %v3160, %v3354
        %v3483 = vadd.f32 %v3162, %v3355
        %v3484 = vadd.f32 %v3164, %v3356
        %v3485 = vadd.f32 %v3166, %v3357
        %v3486 = vadd.f32 %v3168, %v3358
        %v3487 = vadd.f32 %v3170, %v3359
        %v3488 = vadd.f32 %v3172, %v3360
        %v3489 = vadd.f32 %v3174, %v3361
        %v3490 = vadd.f32 %v3176, %v3362
        %v3491 = vadd.f32 %v3178, %v3363
        %v3492 = vadd.f32 %v3180, %v3364
        %v3493 = vadd.f32 %v3182, %v3365
        %v3494 = vadd.f32 %v3184, %v3366
        %v3495 = vadd.f32 %v3186, %v3367
        %v3496 = vadd.f32 %v3188, %v3368
        %v3497 = vadd.f32 %v3190, %v3369
        %v3498 = vadd.f32 %v3192, %v3370
        %v3499 = vadd.f32 %v3194, %v3371
        %v3500 = vadd.f32 %v3196, %v3372
        %v3501 = vadd.f32 %v3198, %v3373
        %v3502 = vadd.f32 %v3200, %v3374
        %v3503 = vadd.f32 %v3202, %v3375
        %v3504 = vadd.f32 %v3204, %v3376
        %v3505 = vadd.f32 %v3206, %v3377
        %v3506 = vadd.f32 %v3208, %v3378
        %v3507 = vadd.f32 %v3210, %v3379
        %v3508 = vadd.f32 %v3212, %v3380
        %v3509 = vadd.f32 %v3214, %v3381
        %v3510 = vadd.f32 %v3216, %v3382
        %v3511 = vadd.f32 %v3218, %v3383
        %v3512 = vadd.f32 %v3220, %v3384
        %v3513 = vadd.f32 %v3222, %v3385
        %v3514 = vadd.f32 %v3224, %v3386
        %v3515 = vadd.f32 %v3226, %v3387
        %v3516 = vadd.f32 %v3228, %v3388
        %v3517 = vadd.f32 %v3230, %v3389
        %v3518 = vadd.f32 %v3232, %v3390
        %v3519 = vadd.f32 %v3234, %v3391
        %v3520 = vadd.f32 %v3236, %v3392
        %v3521 = vadd.f32 %v3238, %v3393
        %v3522 = vadd.f32 %v3240, %v3394
        %v3523 = vadd.f32 %v3242, %v3395
        %v3524 = vadd.f32 %v3244, %v3396
        %v3525 = vadd.f32 %v3246, %v3397
        %v3526 = vadd.f32 %v3248, %v3398
        %v3527 = vadd.f32 %v3250, %v3399
        %v3528 = vadd.f32 %v3252, %v3400
        %v3529 = vadd.f32 %v3254, %v3401
        %v3530 = vadd.f32 %v3256, %v3402
        %v3531 = vadd.f32 %v3258, %v3403
        %v3532 = vadd.f32 %v3260, %v3404
        %v3533 = vadd.f32 %v3262, %v3405
        %v3534 = vadd.f32 %v3264, %v3406
        %v3535 = vadd.f32 %v3266, %v3407
        %v3536 = vadd.f32 %v3268, %v3408
        %v3537 = vadd.f32 %v3270, %v3409
        %v3538 = vadd.f32 %v3272, %v3410
        %v3539 = vadd.f32 %v3274, %v3411
        %v3540 = vadd.f32 %v3276, %v3412
        %v3541 = vadd.f32 %v3278, %v3413
        %v3542 = vadd.f32 %v3280, %v3414
        %v3543 = vadd.f32 %v3282, %v3415
        %v3544 = vadd.f32 %v3284, %v3416
        %v3545 = vadd.f32 %v3286, %v3417
        %v3546 = vadd.f32 %v3288, %v3418
        %v3547 = vadd.f32 %v3290, %v3419
        %v3548 = vadd.f32 %v3292, %v3420
        %v3549 = vmax.f32 %v3421, 0.0
        %v3550 = vmax.f32 %v3422, 0.0
        %v3551 = vmax.f32 %v3423, 0.0
        %v3552 = vmax.f32 %v3424, 0.0
        %v3553 = vmax.f32 %v3425, 0.0
        %v3554 = vmax.f32 %v3426, 0.0
        %v3555 = vmax.f32 %v3427, 0.0
        %v3556 = vmax.f32 %v3428, 0.0
        %v3557 = vmax.f32 %v3429, 0.0
        %v3558 = vmax.f32 %v3430, 0.0
        %v3559 = vmax.f32 %v3431, 0.0
        %v3560 = vmax.f32 %v3432, 0.0
        %v3561 = vmax.f32 %v3433, 0.0
        %v3562 = vmax.f32 %v3434, 0.0
        %v3563 = vmax.f32 %v3435, 0.0
        %v3564 = vmax.f32 %v3436, 0.0
        %v3565 = vmax.f32 %v3437, 0.0
        %v3566 = vmax.f32 %v3438, 0.0
        %v3567 = vmax.f32 %v3439, 0.0
        %v3568 = vmax.f32 %v3440, 0.0
        %v3569 = vmax.f32 %v3441, 0.0
        %v3570 = vmax.f32 %v3442, 0.0
        %v3571 = vmax.f32 %v3443, 0.0
        %v3572 = vmax.f32 %v3444, 0.0
        %v3573 = vmax.f32 %v3445, 0.0
        %v3574 = vmax.f32 %v3446, 0.0
        %v3575 = vmax.f32 %v3447, 0.0
        %v3576 = vmax.f32 %v3448, 0.0
        %v3577 = vmax.f32 %v3449, 0.0
        %v3578 = vmax.f32 %v3450, 0.0
        %v3579 = vmax.f32 %v3451, 0.0
        %v3580 = vmax.f32 %v3452, 0.0
        %v3581 = vmax.f32 %v3453, 0.0
        %v3582 = vmax.f32 %v3454, 0.0
        %v3583 = vmax.f32 %v3455, 0.0
        %v3584 = vmax.f32 %v3456, 0.0
        %v3585 = vmax.f32 %v3457, 0.0
        %v3586 = vmax.f32 %v3458, 0.0
        %v3587 = vmax.f32 %v3459, 0.0
        %v3588 = vmax.f32 %v3460, 0.0
        %v3589 = vmax.f32 %v3461, 0.0
        %v3590 = vmax.f32 %v3462, 0.0
        %v3591 = vmax.f32 %v3463, 0.0
        %v3592 = vmax.f32 %v3464, 0.0
        %v3593 = vmax.f32 %v3465, 0.0
        %v3594 = vmax.f32 %v3466, 0.0
        %v3595 = vmax.f32 %v3467, 0.0
        %v3596 = vmax.f32 %v3468, 0.0
        %v3597 = vmax.f32 %v3469, 0.0
        %v3598 = vmax.f32 %v3470, 0.0
        %v3599 = vmax.f32 %v3471, 0.0
        %v3600 = vmax.f32 %v3472, 0.0
        %v3601 = vmax.f32 %v3473, 0.0
        %v3602 = vmax.f32 %v3474, 0.0
        %v3603 = vmax.f32 %v3475, 0.0
        %v3604 = vmax.f32 %v3476, 0.0
        %v3605 = vmax.f32 %v3477, 0.0
        %v3606 = vmax.f32 %v3478, 0.0
        %v3607 = vmax.f32 %v3479, 0.0
        %v3608 = vmax.f32 %v3480, 0.0
        %v3609 = vmax.f32 %v3481, 0.0
        %v3610 = vmax.f32 %v3482, 0.0
        %v3611 = vmax.f32 %v3483, 0.0
        %v3612 = vmax.f32 %v3484, 0.0
        %v3613 = vmax.f32 %v3485, 0.0
        %v3614 = vmax.f32 %v3486, 0.0
        %v3615 = vmax.f32 %v3487, 0.0
        %v3616 = vmax.f32 %v3488, 0.0
        %v3617 = vmax.f32 %v3489, 0.0
        %v3618 = vmax.f32 %v3490, 0.0
        %v3619 = vmax.f32 %v3491, 0.0
        %v3620 = vmax.f32 %v3492, 0.0
        %v3621 = vmax.f32 %v3493, 0.0
        %v3622 = vmax.f32 %v3494, 0.0
        %v3623 = vmax.f32 %v3495, 0.0
        %v3624 = vmax.f32 %v3496, 0.0
        %v3625 = vmax.f32 %v3497, 0.0
        %v3626 = vmax.f32 %v3498, 0.0
        %v3627 = vmax.f32 %v3499, 0.0
        %v3628 = vmax.f32 %v3500, 0.0
        %v3629 = vmax.f32 %v3501, 0.0
        %v3630 = vmax.f32 %v3502, 0.0
        %v3631 = vmax.f32 %v3503, 0.0
        %v3632 = vmax.f32 %v3504, 0.0
        %v3633 = vmax.f32 %v3505, 0.0
        %v3634 = vmax.f32 %v3506, 0.0
        %v3635 = vmax.f32 %v3507, 0.0
        %v3636 = vmax.f32 %v3508, 0.0
        %v3637 = vmax.f32 %v3509, 0.0
        %v3638 = vmax.f32 %v3510, 0.0
        %v3639 = vmax.f32 %v3511, 0.0
        %v3640 = vmax.f32 %v3512, 0.0
        %v3641 = vmax.f32 %v3513, 0.0
        %v3642 = vmax.f32 %v3514, 0.0
        %v3643 = vmax.f32 %v3515, 0.0
        %v3644 = vmax.f32 %v3516, 0.0
        %v3645 = vmax.f32 %v3517, 0.0
        %v3646 = vmax.f32 %v3518, 0.0
        %v3647 = vmax.f32 %v3519, 0.0
        %v3648 = vmax.f32 %v3520, 0.0
        %v3649 = vmax.f32 %v3521, 0.0
        %v3650 = vmax.f32 %v3522, 0.0
        %v3651 = vmax.f32 %v3523, 0.0
        %v3652 = vmax.f32 %v3524, 0.0
        %v3653 = vmax.f32 %v3525, 0.0
        %v3654 = vmax.f32 %v3526, 0.0
        %v3655 = vmax.f32 %v3527, 0.0
        %v3656 = vmax.f32 %v3528, 0.0
        %v3657 = vmax.f32 %v3529, 0.0
        %v3658 = vmax.f32 %v3530, 0.0
        %v3659 = vmax.f32 %v3531, 0.0
        %v3660 = vmax.f32 %v3532, 0.0
        %v3661 = vmax.f32 %v3533, 0.0
        %v3662 = vmax.f32 %v3534, 0.0
        %v3663 = vmax.f32 %v3535, 0.0
        %v3664 = vmax.f32 %v3536, 0.0
        %v3665 = vmax.f32 %v3537, 0.0
        %v3666 = vmax.f32 %v3538, 0.0
        %v3667 = vmax.f32 %v3539, 0.0
        %v3668 = vmax.f32 %v3540, 0.0
        %v3669 = vmax.f32 %v3541, 0.0
        %v3670 = vmax.f32 %v3542, 0.0
        %v3671 = vmax.f32 %v3543, 0.0
        %v3672 = vmax.f32 %v3544, 0.0
        %v3673 = vmax.f32 %v3545, 0.0
        %v3674 = vmax.f32 %v3546, 0.0
        %v3675 = vmax.f32 %v3547, 0.0
        %v3676 = vmax.f32 %v3548, 0.0
        %vm3677 = vcmask 7168
        %3678 = vst.msk [vmem:[%s306] sm:$0xff] %vm3677, %v3549
        %3679 = vst.msk [vmem:[%s306 + $0x8] sm:$0xff] %vm3677, %v3550
        %3680 = vst.msk [vmem:[%s306 + $0x10] sm:$0xff] %vm3677, %v3551
        %3681 = vst.msk [vmem:[%s306 + $0x18] sm:$0xff] %vm3677, %v3552
        %3682 = vst.msk [vmem:[%s306 + $0x20] sm:$0xff] %vm3677, %v3553
        %3683 = vst.msk [vmem:[%s306 + $0x28] sm:$0xff] %vm3677, %v3554
        %3684 = vst.msk [vmem:[%s306 + $0x30] sm:$0xff] %vm3677, %v3555
        %3685 = vst.msk [vmem:[%s306 + $0x38] sm:$0xff] %vm3677, %v3556
        %3686 = vst.msk [vmem:[%s306 + $0x40] sm:$0xff] %vm3677, %v3557
        %3687 = vst.msk [vmem:[%s306 + $0x48] sm:$0xff] %vm3677, %v3558
        %3688 = vst.msk [vmem:[%s306 + $0x50] sm:$0xff] %vm3677, %v3559
        %3689 = vst.msk [vmem:[%s306 + $0x58] sm:$0xff] %vm3677, %v3560
        %3690 = vst.msk [vmem:[%s306 + $0x60] sm:$0xff] %vm3677, %v3561
        %3691 = vst.msk [vmem:[%s306 + $0x68] sm:$0xff] %vm3677, %v3562
        %3692 = vst.msk [vmem:[%s306 + $0x70] sm:$0xff] %vm3677, %v3563
        %3693 = vst.msk [vmem:[%s306 + $0x78] sm:$0xff] %vm3677, %v3564
        %3694 = vst.msk [vmem:[%s306 + $0x80] sm:$0xff] %vm3677, %v3565
        %3695 = vst.msk [vmem:[%s306 + $0x88] sm:$0xff] %vm3677, %v3566
        %3696 = vst.msk [vmem:[%s306 + $0x90] sm:$0xff] %vm3677, %v3567
        %3697 = vst.msk [vmem:[%s306 + $0x98] sm:$0xff] %vm3677, %v3568
        %3698 = vst.msk [vmem:[%s306 + $0xa0] sm:$0xff] %vm3677, %v3569
        %3699 = vst.msk [vmem:[%s306 + $0xa8] sm:$0xff] %vm3677, %v3570
        %3700 = vst.msk [vmem:[%s306 + $0xb0] sm:$0xff] %vm3677, %v3571
        %3701 = vst.msk [vmem:[%s306 + $0xb8] sm:$0xff] %vm3677, %v3572
        %3702 = vst.msk [vmem:[%s306 + $0xc0] sm:$0xff] %vm3677, %v3573
        %3703 = vst.msk [vmem:[%s306 + $0xc8] sm:$0xff] %vm3677, %v3574
        %3704 = vst.msk [vmem:[%s306 + $0xd0] sm:$0xff] %vm3677, %v3575
        %3705 = vst.msk [vmem:[%s306 + $0xd8] sm:$0xff] %vm3677, %v3576
        %3706 = vst.msk [vmem:[%s306 + $0xe0] sm:$0xff] %vm3677, %v3577
        %3707 = vst.msk [vmem:[%s306 + $0xe8] sm:$0xff] %vm3677, %v3578
        %3708 = vst.msk [vmem:[%s306 + $0xf0] sm:$0xff] %vm3677, %v3579
        %3709 = vst.msk [vmem:[%s306 + $0xf8] sm:$0xff] %vm3677, %v3580
        %3710 = vst.msk [vmem:[%s306 + $0x100] sm:$0xff] %vm3677, %v3581
        %3711 = vst.msk [vmem:[%s306 + $0x108] sm:$0xff] %vm3677, %v3582
        %3712 = vst.msk [vmem:[%s306 + $0x110] sm:$0xff] %vm3677, %v3583
        %3713 = vst.msk [vmem:[%s306 + $0x118] sm:$0xff] %vm3677, %v3584
        %3714 = vst.msk [vmem:[%s306 + $0x120] sm:$0xff] %vm3677, %v3585
        %3715 = vst.msk [vmem:[%s306 + $0x128] sm:$0xff] %vm3677, %v3586
        %3716 = vst.msk [vmem:[%s306 + $0x130] sm:$0xff] %vm3677, %v3587
        %3717 = vst.msk [vmem:[%s306 + $0x138] sm:$0xff] %vm3677, %v3588
        %3718 = vst.msk [vmem:[%s306 + $0x140] sm:$0xff] %vm3677, %v3589
        %3719 = vst.msk [vmem:[%s306 + $0x148] sm:$0xff] %vm3677, %v3590
        %3720 = vst.msk [vmem:[%s306 + $0x150] sm:$0xff] %vm3677, %v3591
        %3721 = vst.msk [vmem:[%s306 + $0x158] sm:$0xff] %vm3677, %v3592
        %3722 = vst.msk [vmem:[%s306 + $0x160] sm:$0xff] %vm3677, %v3593
        %3723 = vst.msk [vmem:[%s306 + $0x168] sm:$0xff] %vm3677, %v3594
        %3724 = vst.msk [vmem:[%s306 + $0x170] sm:$0xff] %vm3677, %v3595
        %3725 = vst.msk [vmem:[%s306 + $0x178] sm:$0xff] %vm3677, %v3596
        %3726 = vst.msk [vmem:[%s306 + $0x180] sm:$0xff] %vm3677, %v3597
        %3727 = vst.msk [vmem:[%s306 + $0x188] sm:$0xff] %vm3677, %v3598
        %3728 = vst.msk [vmem:[%s306 + $0x190] sm:$0xff] %vm3677, %v3599
        %3729 = vst.msk [vmem:[%s306 + $0x198] sm:$0xff] %vm3677, %v3600
        %3730 = vst.msk [vmem:[%s306 + $0x1a0] sm:$0xff] %vm3677, %v3601
        %3731 = vst.msk [vmem:[%s306 + $0x1a8] sm:$0xff] %vm3677, %v3602
        %3732 = vst.msk [vmem:[%s306 + $0x1b0] sm:$0xff] %vm3677, %v3603
        %3733 = vst.msk [vmem:[%s306 + $0x1b8] sm:$0xff] %vm3677, %v3604
        %3734 = vst.msk [vmem:[%s306 + $0x1c0] sm:$0xff] %vm3677, %v3605
        %3735 = vst.msk [vmem:[%s306 + $0x1c8] sm:$0xff] %vm3677, %v3606
        %3736 = vst.msk [vmem:[%s306 + $0x1d0] sm:$0xff] %vm3677, %v3607
        %3737 = vst.msk [vmem:[%s306 + $0x1d8] sm:$0xff] %vm3677, %v3608
        %3738 = vst.msk [vmem:[%s306 + $0x1e0] sm:$0xff] %vm3677, %v3609
        %3739 = vst.msk [vmem:[%s306 + $0x1e8] sm:$0xff] %vm3677, %v3610
        %3740 = vst.msk [vmem:[%s306 + $0x1f0] sm:$0xff] %vm3677, %v3611
        %3741 = vst.msk [vmem:[%s306 + $0x1f8] sm:$0xff] %vm3677, %v3612
        %3742 = vst.msk [vmem:[%s306 + $0x200] sm:$0xff] %vm3677, %v3613
        %3743 = vst.msk [vmem:[%s306 + $0x208] sm:$0xff] %vm3677, %v3614
        %3744 = vst.msk [vmem:[%s306 + $0x210] sm:$0xff] %vm3677, %v3615
        %3745 = vst.msk [vmem:[%s306 + $0x218] sm:$0xff] %vm3677, %v3616
        %3746 = vst.msk [vmem:[%s306 + $0x220] sm:$0xff] %vm3677, %v3617
        %3747 = vst.msk [vmem:[%s306 + $0x228] sm:$0xff] %vm3677, %v3618
        %3748 = vst.msk [vmem:[%s306 + $0x230] sm:$0xff] %vm3677, %v3619
        %3749 = vst.msk [vmem:[%s306 + $0x238] sm:$0xff] %vm3677, %v3620
        %3750 = vst.msk [vmem:[%s306 + $0x240] sm:$0xff] %vm3677, %v3621
        %3751 = vst.msk [vmem:[%s306 + $0x248] sm:$0xff] %vm3677, %v3622
        %3752 = vst.msk [vmem:[%s306 + $0x250] sm:$0xff] %vm3677, %v3623
        %3753 = vst.msk [vmem:[%s306 + $0x258] sm:$0xff] %vm3677, %v3624
        %3754 = vst.msk [vmem:[%s306 + $0x260] sm:$0xff] %vm3677, %v3625
        %3755 = vst.msk [vmem:[%s306 + $0x268] sm:$0xff] %vm3677, %v3626
        %3756 = vst.msk [vmem:[%s306 + $0x270] sm:$0xff] %vm3677, %v3627
        %3757 = vst.msk [vmem:[%s306 + $0x278] sm:$0xff] %vm3677, %v3628
        %3758 = vst.msk [vmem:[%s306 + $0x280] sm:$0xff] %vm3677, %v3629
        %3759 = vst.msk [vmem:[%s306 + $0x288] sm:$0xff] %vm3677, %v3630
        %3760 = vst.msk [vmem:[%s306 + $0x290] sm:$0xff] %vm3677, %v3631
        %3761 = vst.msk [vmem:[%s306 + $0x298] sm:$0xff] %vm3677, %v3632
        %3762 = vst.msk [vmem:[%s306 + $0x2a0] sm:$0xff] %vm3677, %v3633
        %3763 = vst.msk [vmem:[%s306 + $0x2a8] sm:$0xff] %vm3677, %v3634
        %3764 = vst.msk [vmem:[%s306 + $0x2b0] sm:$0xff] %vm3677, %v3635
        %3765 = vst.msk [vmem:[%s306 + $0x2b8] sm:$0xff] %vm3677, %v3636
        %3766 = vst.msk [vmem:[%s306 + $0x2c0] sm:$0xff] %vm3677, %v3637
        %3767 = vst.msk [vmem:[%s306 + $0x2c8] sm:$0xff] %vm3677, %v3638
        %3768 = vst.msk [vmem:[%s306 + $0x2d0] sm:$0xff] %vm3677, %v3639
        %3769 = vst.msk [vmem:[%s306 + $0x2d8] sm:$0xff] %vm3677, %v3640
        %3770 = vst.msk [vmem:[%s306 + $0x2e0] sm:$0xff] %vm3677, %v3641
        %3771 = vst.msk [vmem:[%s306 + $0x2e8] sm:$0xff] %vm3677, %v3642
        %3772 = vst.msk [vmem:[%s306 + $0x2f0] sm:$0xff] %vm3677, %v3643
        %3773 = vst.msk [vmem:[%s306 + $0x2f8] sm:$0xff] %vm3677, %v3644
        %3774 = vst.msk [vmem:[%s306 + $0x300] sm:$0xff] %vm3677, %v3645
        %3775 = vst.msk [vmem:[%s306 + $0x308] sm:$0xff] %vm3677, %v3646
        %3776 = vst.msk [vmem:[%s306 + $0x310] sm:$0xff] %vm3677, %v3647
        %3777 = vst.msk [vmem:[%s306 + $0x318] sm:$0xff] %vm3677, %v3648
        %3778 = vst.msk [vmem:[%s306 + $0x320] sm:$0xff] %vm3677, %v3649
        %3779 = vst.msk [vmem:[%s306 + $0x328] sm:$0xff] %vm3677, %v3650
        %3780 = vst.msk [vmem:[%s306 + $0x330] sm:$0xff] %vm3677, %v3651
        %3781 = vst.msk [vmem:[%s306 + $0x338] sm:$0xff] %vm3677, %v3652
        %3782 = vst.msk [vmem:[%s306 + $0x340] sm:$0xff] %vm3677, %v3653
        %3783 = vst.msk [vmem:[%s306 + $0x348] sm:$0xff] %vm3677, %v3654
        %3784 = vst.msk [vmem:[%s306 + $0x350] sm:$0xff] %vm3677, %v3655
        %3785 = vst.msk [vmem:[%s306 + $0x358] sm:$0xff] %vm3677, %v3656
        %3786 = vst.msk [vmem:[%s306 + $0x360] sm:$0xff] %vm3677, %v3657
        %3787 = vst.msk [vmem:[%s306 + $0x368] sm:$0xff] %vm3677, %v3658
        %3788 = vst.msk [vmem:[%s306 + $0x370] sm:$0xff] %vm3677, %v3659
        %3789 = vst.msk [vmem:[%s306 + $0x378] sm:$0xff] %vm3677, %v3660
        %3790 = vst.msk [vmem:[%s306 + $0x380] sm:$0xff] %vm3677, %v3661
        %3791 = vst.msk [vmem:[%s306 + $0x388] sm:$0xff] %vm3677, %v3662
        %3792 = vst.msk [vmem:[%s306 + $0x390] sm:$0xff] %vm3677, %v3663
        %3793 = vst.msk [vmem:[%s306 + $0x398] sm:$0xff] %vm3677, %v3664
        %3794 = vst.msk [vmem:[%s306 + $0x3a0] sm:$0xff] %vm3677, %v3665
        %3795 = vst.msk [vmem:[%s306 + $0x3a8] sm:$0xff] %vm3677, %v3666
        %3796 = vst.msk [vmem:[%s306 + $0x3b0] sm:$0xff] %vm3677, %v3667
        %3797 = vst.msk [vmem:[%s306 + $0x3b8] sm:$0xff] %vm3677, %v3668
        %3798 = vst.msk [vmem:[%s306 + $0x3c0] sm:$0xff] %vm3677, %v3669
        %3799 = vst.msk [vmem:[%s306 + $0x3c8] sm:$0xff] %vm3677, %v3670
        %3800 = vst.msk [vmem:[%s306 + $0x3d0] sm:$0xff] %vm3677, %v3671
        %3801 = vst.msk [vmem:[%s306 + $0x3d8] sm:$0xff] %vm3677, %v3672
        %3802 = vst.msk [vmem:[%s306 + $0x3e0] sm:$0xff] %vm3677, %v3673
        %3803 = vst.msk [vmem:[%s306 + $0x3e8] sm:$0xff] %vm3677, %v3674
        %3804 = vst.msk [vmem:[%s306 + $0x3f0] sm:$0xff] %vm3677, %v3675
        %3805 = vst.msk [vmem:[%s306 + $0x3f8] sm:$0xff] %vm3677, %v3676
      $region60: #{tpu_custom_call.1} parent=47 // pred_fallthru
        _
      %p3806 = scmp.lt.s32.totalorder %s22, 1
      %s3807 = scalar_select %p3806, %s22, 1
      %s3808 = smul.addr %s3807, 128
      %s3809 = smul.addr %s3808, 8
      %s3810 = scalar_lea.vmem %s7, %s3809
      // Predicated region
      $region61: #{tpu_custom_call.1} parent=47 // pred_check
        %p3811 = pneg %p202
      $region62: #{tpu_custom_call.1} parent=47 // pred_check_branch
        %3813 = sbr.rel (%p3811) target = $region64
      $region63: #{tpu_custom_call.1} parent=47 // pred_region
        _
      $region64: #{tpu_custom_call.1} parent=47 // pred_fallthru
        _
    $region48: #{tpu_custom_call.1} parent=5 // pred_fallthru
      _
    %p3814 = scmp.le.s32.totalorder 2, %s13
    // Predicated region
    $region65: #{tpu_custom_call.1} parent=5 // pred_check
      %p3815 = pneg %p3814
    $region66: #{tpu_custom_call.1} parent=5 // pred_check_branch
      %3817 = sbr.rel (%p3815) target = $region68
    $region67: #{tpu_custom_call.1} parent=5 // pred_region
      %s3818 = ssub.s32 %s13, 2
      // Predicated region
      $region69: #{tpu_custom_call.1} parent=67 // pred_check
        %p3819 = pneg %p208
      $region70: #{tpu_custom_call.1} parent=67 // pred_check_branch
        %3821 = sbr.rel (%p3819) target = $region72
      $region71: #{tpu_custom_call.1} parent=67 // pred_region
        %p3822 = scmp.lt.s32.totalorder %s24, 1
        %s3823 = scalar_select %p3822, %s24, 1
        %s3824 = smul.addr %s3823, 128
        %s3825 = smul.addr %s3824, 8
        %s3826 = scalar_lea.vmem %s7, %s3825
      $region72: #{tpu_custom_call.1} parent=67 // pred_fallthru
        _
    $region68: #{tpu_custom_call.1} parent=5 // pred_fallthru
      _
  $region6: #{tpu_custom_call.1} parent=0 // loop_footer
    %s17 = sadd.s32 1, %s13
  $region7: #{tpu_custom_call.1} parent=0 // loop_footer_branch
    %12 = sbr.rel target = $region3
  $region8: #{tpu_custom_call.1} parent=0 // loop_exit
    _

</llo_original>
